<compile_context>
chip_gen: v7x
topology: tpu7x:2x2x1
jax: 0.10.0
libtpu: 0.0.40
codegen_flags: <defaults>
</compile_context>

<pallas_src>
import math

import numpy as np
import jax
import jax.numpy as jnp
from jax import lax
from jax.experimental import pallas as pl
from jax.experimental.pallas import tpu as pltpu

LANE = 128


def _round_up(x, m):
    return ((x + m - 1) // m) * m


# ----------------------------------------------------------------------------
# Fused kernel: conv1+BN+pool+ReLU -> conv2+BN+pool+ReLU -> FC stack (per block
# of B_blk images).  All layers are single MXU matmuls; pooling is a max over
# four tile-aligned 128-lane column blocks.
# ----------------------------------------------------------------------------
def make_kernel(dims):
    (B_blk, HP1P, HP2P, A1R, DH, DHWC, Hp2) = dims

    def kernel(p1_ref, w1_ref, b1_ref, w2_ref, b2_ref,
               wf1_ref, bf1_ref, wf2_ref, bf2_ref, wf3_ref, bf3_ref,
               out_ref, a1_ref):
        f32 = jnp.float32

        # ---- conv1 (BN scale folded into weights) + 2x2 max-pool + ReLU ----
        # rows = (b, pooled_row), cols = 4 quadrant blocks of (jp1, c1) lanes.
        xp = p1_ref[...].reshape(B_blk * HP1P, DHWC)            # free reshape
        y = jnp.dot(xp, w1_ref[...], preferred_element_type=f32)  # (M, 4*128)
        y = jnp.maximum(jnp.maximum(y[:, 0 * LANE:1 * LANE], y[:, 1 * LANE:2 * LANE]),
                        jnp.maximum(y[:, 2 * LANE:3 * LANE], y[:, 3 * LANE:4 * LANE]))
        a1 = jnp.maximum(y + b1_ref[...], 0.0)                  # (M, 128) lane-dense
        a1_ref[:, pl.ds(0, HP1P), :] = a1.reshape(B_blk, HP1P, LANE)
        if A1R > HP1P:
            # rows only ever read for padded (discarded) conv2 output rows
            a1_ref[:, pl.ds(HP1P, A1R - HP1P), :] = jnp.zeros(
                (B_blk, A1R - HP1P, LANE), f32)

        # ---- conv2 (BN scale folded) + 2x2 max-pool + ReLU -----------------
        # contraction = concat of DH row-slices of a1 (lane-aligned concat).
        parts = [a1_ref[:, pl.ds(dh, HP2P, 2), :].reshape(B_blk * HP2P, LANE)
                 for dh in range(DH)]
        acat = jnp.concatenate(parts, axis=-1)                  # (M2, DH*128)
        z = jnp.dot(acat, w2_ref[...], preferred_element_type=f32)  # (M2, 4*128)
        z = jnp.maximum(jnp.maximum(z[:, 0 * LANE:1 * LANE], z[:, 1 * LANE:2 * LANE]),
                        jnp.maximum(z[:, 2 * LANE:3 * LANE], z[:, 3 * LANE:4 * LANE]))
        a2 = jnp.maximum(z + b2_ref[...], 0.0)                  # (M2, 128)
        a2 = a2.reshape(B_blk, HP2P, LANE)                      # free reshape

        # ---- FC head: Linear+ReLU, Linear+ReLU, Linear+Tanh ----------------
        # Dropout = identity (eval).  wf1 was expanded wrapper-side to the
        # (pooled_row, 128-lane) layout with zero rows at pad lanes, so FC1 is
        # one GEMM over the concatenated pooled rows.
        a2cat = jnp.concatenate([a2[:, i, :] for i in range(Hp2)], axis=-1)
        h = jnp.maximum(jnp.dot(a2cat, wf1_ref[...], preferred_element_type=f32)
                        + bf1_ref[...], 0.0)
        h = jnp.maximum(jnp.dot(h, wf2_ref[...], preferred_element_type=f32)
                        + bf2_ref[...], 0.0)
        o = jnp.dot(h, wf3_ref[...], preferred_element_type=f32) + bf3_ref[...]
        out_ref[...] = jnp.tanh(o).astype(out_ref.dtype)

    return kernel


# ----------------------------------------------------------------------------
# Wrapper: builds the pooled-quadrant weights (one-time plain JAX), the layer-1
# row patches, and launches one pallas_call with a grid over batch blocks.
# ----------------------------------------------------------------------------
def conv_parameterizer_forward(x_nchw, p, num_concepts, num_classes, block_b=8):
    """x_nchw: (B, C, H, W) like the PyTorch module; returns (B, nC, nCls)."""
    x = jnp.transpose(x_nchw, (0, 2, 3, 1)).astype(jnp.float32)     # NCHW -> NHWC
    B, H, W, C0 = x.shape
    K = p["wc1"].shape[0]
    C1, C2 = p["wc1"].shape[-1], p["wc2"].shape[-1]
    H1, W1 = H - K + 1, W - K + 1
    Hp1, Wp1 = H1 // 2, W1 // 2
    H2, W2 = Hp1 - K + 1, Wp1 - K + 1
    Hp2, Wp2 = H2 // 2, W2 // 2
    d1, d2, d3 = p["wf1"].shape[1], p["wf2"].shape[1], p["wf3"].shape[1]
    assert Wp1 * C1 <= LANE and Wp2 * C2 <= LANE, \
        "pooled (W, C) row must fit one 128-lane tile for this kernel layout"
    assert p["wf1"].shape[0] == C2 * Hp2 * Wp2, "FC1 input size mismatch"

    DH = K + 1                         # input rows feeding one pooled output row
    HP1P = _round_up(Hp1, 8)           # pooled rows, padded for tile-aligned reshapes
    HP2P = _round_up(Hp2, 8)
    A1R = _round_up(max(HP1P, 2 * (HP2P - 1) + DH), 8)

    # ---- batch padding / blocking ------------------------------------------
    Bpad = _round_up(max(B, block_b), block_b)
    if Bpad != B:
        x = jnp.pad(x, ((0, Bpad - B), (0, 0), (0, 0), (0, 0)))

    # ---- layer-1 row patches: P1[b, ip, (dh, j0, c0)] = x[b, 2*ip+dh, j0, c0]
    Hneed = 2 * (HP1P - 1) + DH
    xp = jnp.pad(x, ((0, 0), (0, max(0, Hneed - H)), (0, 0), (0, 0)))
    P1 = jnp.stack([xp[:, dh:dh + 2 * HP1P:2] for dh in range(DH)], axis=2)
    P1 = P1.reshape(Bpad, HP1P, DH * W * C0)

    # ---- pooled-quadrant conv weights (taps + pool quadrants folded in) -----
    f32 = jnp.float32
    qi = np.arange(2)
    sel_h = (np.arange(DH)[:, None, None]
             == qi[None, :, None] + np.arange(K)[None, None, :]).astype(np.float32)

    # layer 1: rows (dh, j0, c0) -> cols (qi, qj, jp1, c1) in 4 x 128 lane blocks
    sel_w1 = (np.arange(W)[:, None, None, None]
              == 2 * np.arange(Wp1)[None, None, :, None]
              + qi[None, :, None, None]
              + np.arange(K)[None, None, None, :]).astype(np.float32)
    w1q = jnp.einsum("hxa,wyjb,abcd->hwcxyjd",
                     sel_h, sel_w1, p["wc1"].astype(f32) * p["scale1"])
    w1q = w1q.reshape(DH * W * C0, 4, Wp1 * C1)
    w1q = jnp.pad(w1q, ((0, 0), (0, 0), (0, LANE - Wp1 * C1)))
    w1q = w1q.reshape(DH * W * C0, 4 * LANE)
    b1p = jnp.pad(jnp.tile(p["bias1"], Wp1), (0, LANE - Wp1 * C1)).reshape(1, LANE)

    # layer 2: rows (dh, jp1, c1) on DH x 128 lane blocks -> cols (qi, qj, jp2, c2)
    sel_w2 = (np.arange(Wp1)[:, None, None, None]
              == 2 * np.arange(Wp2)[None, None, :, None]
              + qi[None, :, None, None]
              + np.arange(K)[None, None, None, :]).astype(np.float32)
    w2q = jnp.einsum("hxa,wyjb,abcd->hwcxyjd",
                     sel_h, sel_w2, p["wc2"].astype(f32) * p["scale2"])
    w2q = w2q.reshape(DH, Wp1 * C1, 4, Wp2 * C2)
    w2q = jnp.pad(w2q, ((0, 0), (0, LANE - Wp1 * C1), (0, 0), (0, LANE - Wp2 * C2)))
    w2q = w2q.reshape(DH * LANE, 4 * LANE)
    b2p = jnp.pad(jnp.tile(p["bias2"], Wp2), (0, LANE - Wp2 * C2)).reshape(1, LANE)

    # FC1 weight: PyTorch flatten order (c2, i, j) -> kernel (i, jp2*C2+c2) + pad
    wf1e = p["wf1"].reshape(C2, Hp2, Wp2, d1).transpose(1, 2, 0, 3)
    wf1e = jnp.pad(wf1e.reshape(Hp2, Wp2 * C2, d1),
                   ((0, 0), (0, LANE - Wp2 * C2), (0, 0))).reshape(Hp2 * LANE, d1)

    bf1 = p["bf1"].reshape(1, d1)
    bf2 = p["bf2"].reshape(1, d2)
    bf3 = p["bf3"].reshape(1, d3)

    kernel = make_kernel((block_b, HP1P, HP2P, A1R, DH, DH * W * C0, Hp2))

    def _full(a):
        nd = a.ndim
        return pl.BlockSpec(a.shape, lambda b, _nd=nd: (0,) * _nd)

    out = pl.pallas_call(
        kernel,
        out_shape=jax.ShapeDtypeStruct((Bpad, d3), jnp.float32),
        grid=(Bpad // block_b,),
        in_specs=[
            pl.BlockSpec((block_b, HP1P, DH * W * C0), lambda b: (b, 0, 0)),
            _full(w1q), _full(b1p), _full(w2q), _full(b2p),
            _full(wf1e), _full(bf1), _full(p["wf2"]), _full(bf2),
            _full(p["wf3"]), _full(bf3),
        ],
        out_specs=pl.BlockSpec((block_b, d3), lambda b: (b, 0)),
        scratch_shapes=[pltpu.VMEM((block_b, A1R, LANE), jnp.float32)],
        compiler_params=pltpu.CompilerParams(
            dimension_semantics=("parallel",)),
    )(P1, w1q, b1p, w2q, b2p, wf1e, bf1, p["wf2"], bf2, p["wf3"], bf3)

    return out[:B].reshape(B, num_concepts, num_classes)


# ----------------------------------------------------------------------------
# Deterministic parameter init (kaiming_uniform weights, zero biases, fresh BN)
# ----------------------------------------------------------------------------
def init_params(key, cl_sizes, kernel_size, hidden_sizes,
                num_concepts, num_classes, input_image_size):
    keys = jax.random.split(key, 8)

    def kaiming(k, shape, fan_in):  # gain=sqrt(2) -> bound = sqrt(6/fan_in)
        bound = math.sqrt(6.0 / fan_in)
        return jax.random.uniform(k, shape, jnp.float32, -bound, bound)

    c0, c1, c2 = cl_sizes
    K = kernel_size
    wc1 = kaiming(keys[0], (K, K, c0, c1), c0 * K * K)   # HWIO
    wc2 = kaiming(keys[1], (K, K, c1, c2), c1 * K * K)

    eps = 1e-5  # PyTorch BatchNorm2d default
    def bn_fold(cout):
        gamma = jnp.ones((cout,), jnp.float32)
        beta = jnp.zeros((cout,), jnp.float32)
        mean = jnp.zeros((cout,), jnp.float32)
        var = jnp.ones((cout,), jnp.float32)
        conv_bias = jnp.zeros((cout,), jnp.float32)      # zero-init conv bias
        scale = gamma / jnp.sqrt(var + eps)
        bias = beta + (conv_bias - mean) * scale
        return scale, bias

    scale1, bias1 = bn_fold(c1)
    scale2, bias2 = bn_fold(c2)

    # flattened size (same computation as the torch dummy forward)
    h, w = input_image_size
    for _ in range(2):
        h, w = (h - K + 1) // 2, (w - K + 1) // 2
    flat = c2 * h * w

    sizes = [flat] + list(hidden_sizes[1:]) + [num_concepts * num_classes]
    wf1 = kaiming(keys[2], (sizes[0], sizes[1]), sizes[0])
    wf2 = kaiming(keys[3], (sizes[1], sizes[2]), sizes[1])
    wf3 = kaiming(keys[4], (sizes[2], sizes[3]), sizes[2])
    bf1 = jnp.zeros((sizes[1],), jnp.float32)
    bf2 = jnp.zeros((sizes[2],), jnp.float32)
    bf3 = jnp.zeros((sizes[3],), jnp.float32)

    return dict(wc1=wc1, scale1=scale1, bias1=bias1,
                wc2=wc2, scale2=scale2, bias2=bias2,
                wf1=wf1, bf1=bf1, wf2=wf2, bf2=bf2, wf3=wf3, bf3=bf3)


# ----------------------------------------------------------------------------
# Pure-JAX reference (same eval-mode semantics) for a correctness check
# ----------------------------------------------------------------------------
def reference_forward(x_nhwc, p, num_concepts, num_classes):
    dn = ("NHWC", "HWIO", "NHWC")
    y = lax.conv_general_dilated(x_nhwc, p["wc1"], (1, 1), "VALID",
                                 dimension_numbers=dn)
    y = y * p["scale1"] + p["bias1"]
    y = lax.reduce_window(y, -jnp.inf, lax.max, (1, 2, 2, 1), (1, 2, 2, 1), "VALID")
    y = jnp.maximum(y, 0.0)
    y = lax.conv_general_dilated(y, p["wc2"], (1, 1), "VALID",
                                 dimension_numbers=dn)
    y = y * p["scale2"] + p["bias2"]
    y = lax.reduce_window(y, -jnp.inf, lax.max, (1, 2, 2, 1), (1, 2, 2, 1), "VALID")
    y = jnp.maximum(y, 0.0)
    flat = jnp.transpose(y, (0, 3, 1, 2)).reshape(y.shape[0], -1)
    h = jnp.maximum(flat @ p["wf1"] + p["bf1"], 0.0)
    h = jnp.maximum(h @ p["wf2"] + p["bf2"], 0.0)
    o = jnp.tanh(h @ p["wf3"] + p["bf3"])
    return o.reshape(-1, num_concepts, num_classes)


if __name__ == "__main__":
    num_concepts, num_classes = 5, 10
    cl_sizes = (3, 8, 16)
    kernel_size = 5
    hidden_sizes = (256, 64, 32)        # hidden_sizes[0] == flattened conv size
    input_image_size = (28, 28)
    batch = 2

    root = jax.random.PRNGKey(0)
    kx, kp = jax.random.split(root)
    params = init_params(kp, cl_sizes, kernel_size, hidden_sizes,
                         num_concepts, num_classes, input_image_size)
    x = jax.random.normal(kx, (batch, cl_sizes[0], *input_image_size),
                          jnp.float32)                       # NCHW, like torch

    theta = conv_parameterizer_forward(x, params, num_concepts, num_classes)
    theta = jax.block_until_ready(theta)
    assert theta.shape == (batch, num_concepts, num_classes), theta.shape

    ref = reference_forward(jnp.transpose(x, (0, 2, 3, 1)), params,
                            num_concepts, num_classes)
    err = float(jnp.max(jnp.abs(theta - ref)))
    assert err < 5e-3, f"max abs diff vs reference: {err}"
    print("KERNEL_OK")
</pallas_src>

<mosaic_0001>
module attributes {stable_mosaic.version = 11 : i64} {
  func.func @kernel(%arg0: i32, %arg1: memref<8x16x504xf32, #tpu.memory_space<vmem>>, %arg2: memref<504x512xf32, #tpu.memory_space<vmem>>, %arg3: memref<1x128xf32, #tpu.memory_space<vmem>>, %arg4: memref<768x512xf32, #tpu.memory_space<vmem>>, %arg5: memref<1x128xf32, #tpu.memory_space<vmem>>, %arg6: memref<512x64xf32, #tpu.memory_space<vmem>>, %arg7: memref<1x64xf32, #tpu.memory_space<vmem>>, %arg8: memref<64x32xf32, #tpu.memory_space<vmem>>, %arg9: memref<1x32xf32, #tpu.memory_space<vmem>>, %arg10: memref<32x50xf32, #tpu.memory_space<vmem>>, %arg11: memref<1x50xf32, #tpu.memory_space<vmem>>, %arg12: memref<8x50xf32, #tpu.memory_space<vmem>>, %arg13: memref<8x24x128xf32, #tpu.memory_space<vmem>>) attributes {dimension_semantics = [#tpu.dimension_semantics<parallel>], iteration_bounds = array<i64: 1>, scalar_prefetch = 0 : i64, scratch_operands = 1 : i64, tpu.core_type = #tpu.core_type<tc>, window_params = [{transform_indices = @transform_0, window_bounds = array<i64: 8, 16, 504>}, {pipeline_mode = #tpu.pipeline_mode<synchronous>, transform_indices = @transform_1, window_bounds = array<i64: 504, 512>}, {pipeline_mode = #tpu.pipeline_mode<synchronous>, transform_indices = @transform_2, window_bounds = array<i64: 1, 128>}, {pipeline_mode = #tpu.pipeline_mode<synchronous>, transform_indices = @transform_3, window_bounds = array<i64: 768, 512>}, {pipeline_mode = #tpu.pipeline_mode<synchronous>, transform_indices = @transform_4, window_bounds = array<i64: 1, 128>}, {pipeline_mode = #tpu.pipeline_mode<synchronous>, transform_indices = @transform_5, window_bounds = array<i64: 512, 64>}, {pipeline_mode = #tpu.pipeline_mode<synchronous>, transform_indices = @transform_6, window_bounds = array<i64: 1, 64>}, {pipeline_mode = #tpu.pipeline_mode<synchronous>, transform_indices = @transform_7, window_bounds = array<i64: 64, 32>}, {pipeline_mode = #tpu.pipeline_mode<synchronous>, transform_indices = @transform_8, window_bounds = array<i64: 1, 32>}, {pipeline_mode = #tpu.pipeline_mode<synchronous>, transform_indices = @transform_9, window_bounds = array<i64: 32, 50>}, {pipeline_mode = #tpu.pipeline_mode<synchronous>, transform_indices = @transform_10, window_bounds = array<i64: 1, 50>}, {transform_indices = @transform_11, window_bounds = array<i64: 8, 50>}]} {
    %c0 = arith.constant 0 : index
    %c0_0 = arith.constant 0 : index
    %c0_1 = arith.constant 0 : index
    %0 = vector.load %arg1[%c0, %c0_0, %c0_1] : memref<8x16x504xf32, #tpu.memory_space<vmem>>, vector<8x16x504xf32>
    %1 = vector.shape_cast %0 : vector<8x16x504xf32> to vector<128x504xf32>
    %c0_2 = arith.constant 0 : index
    %c0_3 = arith.constant 0 : index
    %2 = vector.load %arg2[%c0_2, %c0_3] : memref<504x512xf32, #tpu.memory_space<vmem>>, vector<504x512xf32>
    %cst = arith.constant dense<0.000000e+00> : vector<128x512xf32>
    %3 = tpu.matmul %1, %2, %cst {dimension_numbers = #tpu.dot_dimension_numbers<[1], [0], [0], [1], [0, 0, 1, 1], [], []>} : vector<128x504xf32>, vector<504x512xf32>, vector<128x512xf32> -> vector<128x512xf32>
    %4 = vector.extract_strided_slice %3 {offsets = [0, 0], sizes = [128, 128], strides = [1, 1]} : vector<128x512xf32> to vector<128x128xf32>
    %5 = vector.extract_strided_slice %3 {offsets = [0, 128], sizes = [128, 128], strides = [1, 1]} : vector<128x512xf32> to vector<128x128xf32>
    %6 = arith.maximumf %4, %5 : vector<128x128xf32>
    %7 = vector.extract_strided_slice %3 {offsets = [0, 256], sizes = [128, 128], strides = [1, 1]} : vector<128x512xf32> to vector<128x128xf32>
    %8 = vector.extract_strided_slice %3 {offsets = [0, 384], sizes = [128, 128], strides = [1, 1]} : vector<128x512xf32> to vector<128x128xf32>
    %9 = arith.maximumf %7, %8 : vector<128x128xf32>
    %10 = arith.maximumf %6, %9 : vector<128x128xf32>
    %c0_4 = arith.constant 0 : index
    %c0_5 = arith.constant 0 : index
    %11 = vector.load %arg3[%c0_4, %c0_5] : memref<1x128xf32, #tpu.memory_space<vmem>>, vector<1x128xf32>
    %12 = vector.broadcast %11 : vector<1x128xf32> to vector<128x128xf32>
    %13 = arith.addf %10, %12 : vector<128x128xf32>
    %cst_6 = arith.constant 0.000000e+00 : f32
    %14 = vector.broadcast %cst_6 : f32 to vector<128x128xf32>
    %15 = arith.maximumf %13, %14 : vector<128x128xf32>
    %16 = vector.shape_cast %15 : vector<128x128xf32> to vector<8x16x128xf32>
    %c0_7 = arith.constant 0 : index
    %c0_8 = arith.constant 0 : index
    %c0_9 = arith.constant 0 : index
    %17 = vector.load %arg13[%c0_7, %c0_8, %c0_9] : memref<8x24x128xf32, #tpu.memory_space<vmem>>, vector<8x16x128xf32>
    tpu.vector_store %arg13[%c0_7, %c0_8, %c0_9], %16 {strides = array<i32>} : memref<8x24x128xf32, #tpu.memory_space<vmem>>, vector<8x16x128xf32>,
    %cst_10 = arith.constant 0.000000e+00 : f32
    %18 = vector.broadcast %cst_10 : f32 to vector<8x8x128xf32>
    %c0_11 = arith.constant 0 : index
    %c16 = arith.constant 16 : index
    %c0_12 = arith.constant 0 : index
    %19 = vector.load %arg13[%c0_11, %c16, %c0_12] : memref<8x24x128xf32, #tpu.memory_space<vmem>>, vector<8x8x128xf32>
    tpu.vector_store %arg13[%c0_11, %c16, %c0_12], %18 {strides = array<i32>} : memref<8x24x128xf32, #tpu.memory_space<vmem>>, vector<8x8x128xf32>,
    %c0_13 = arith.constant 0 : index
    %c0_14 = arith.constant 0 : index
    %c0_15 = arith.constant 0 : index
    %20 = tpu.strided_load %arg13[%c0_13, %c0_14, %c0_15] {strides = array<i32: 1, 2, 1>} : memref<8x24x128xf32, #tpu.memory_space<vmem>>, vector<8x8x128xf32>
    %21 = vector.shape_cast %20 : vector<8x8x128xf32> to vector<64x128xf32>
    %c0_16 = arith.constant 0 : index
    %c1 = arith.constant 1 : index
    %c0_17 = arith.constant 0 : index
    %22 = tpu.strided_load %arg13[%c0_16, %c1, %c0_17] {strides = array<i32: 1, 2, 1>} : memref<8x24x128xf32, #tpu.memory_space<vmem>>, vector<8x8x128xf32>
    %23 = vector.shape_cast %22 : vector<8x8x128xf32> to vector<64x128xf32>
    %c0_18 = arith.constant 0 : index
    %c2 = arith.constant 2 : index
    %c0_19 = arith.constant 0 : index
    %24 = tpu.strided_load %arg13[%c0_18, %c2, %c0_19] {strides = array<i32: 1, 2, 1>} : memref<8x24x128xf32, #tpu.memory_space<vmem>>, vector<8x8x128xf32>
    %25 = vector.shape_cast %24 : vector<8x8x128xf32> to vector<64x128xf32>
    %c0_20 = arith.constant 0 : index
    %c3 = arith.constant 3 : index
    %c0_21 = arith.constant 0 : index
    %26 = tpu.strided_load %arg13[%c0_20, %c3, %c0_21] {strides = array<i32: 1, 2, 1>} : memref<8x24x128xf32, #tpu.memory_space<vmem>>, vector<8x8x128xf32>
    %27 = vector.shape_cast %26 : vector<8x8x128xf32> to vector<64x128xf32>
    %c0_22 = arith.constant 0 : index
    %c4 = arith.constant 4 : index
    %c0_23 = arith.constant 0 : index
    %28 = tpu.strided_load %arg13[%c0_22, %c4, %c0_23] {strides = array<i32: 1, 2, 1>} : memref<8x24x128xf32, #tpu.memory_space<vmem>>, vector<8x8x128xf32>
    %29 = vector.shape_cast %28 : vector<8x8x128xf32> to vector<64x128xf32>
    %c0_24 = arith.constant 0 : index
    %c5 = arith.constant 5 : index
    %c0_25 = arith.constant 0 : index
    %30 = tpu.strided_load %arg13[%c0_24, %c5, %c0_25] {strides = array<i32: 1, 2, 1>} : memref<8x24x128xf32, #tpu.memory_space<vmem>>, vector<8x8x128xf32>
    %31 = vector.shape_cast %30 : vector<8x8x128xf32> to vector<64x128xf32>
    %32 = tpu.concatenate %21, %23, %25, %27, %29, %31 in 1 : vector<64x128xf32>, vector<64x128xf32>, vector<64x128xf32>, vector<64x128xf32>, vector<64x128xf32>, vector<64x128xf32> -> vector<64x768xf32>
    %c0_26 = arith.constant 0 : index
    %c0_27 = arith.constant 0 : index
    %33 = vector.load %arg4[%c0_26, %c0_27] : memref<768x512xf32, #tpu.memory_space<vmem>>, vector<768x512xf32>
    %cst_28 = arith.constant dense<0.000000e+00> : vector<64x512xf32>
    %34 = tpu.matmul %32, %33, %cst_28 {dimension_numbers = #tpu.dot_dimension_numbers<[1], [0], [0], [1], [0, 0, 1, 1], [], []>} : vector<64x768xf32>, vector<768x512xf32>, vector<64x512xf32> -> vector<64x512xf32>
    %35 = vector.extract_strided_slice %34 {offsets = [0, 0], sizes = [64, 128], strides = [1, 1]} : vector<64x512xf32> to vector<64x128xf32>
    %36 = vector.extract_strided_slice %34 {offsets = [0, 128], sizes = [64, 128], strides = [1, 1]} : vector<64x512xf32> to vector<64x128xf32>
    %37 = arith.maximumf %35, %36 : vector<64x128xf32>
    %38 = vector.extract_strided_slice %34 {offsets = [0, 256], sizes = [64, 128], strides = [1, 1]} : vector<64x512xf32> to vector<64x128xf32>
    %39 = vector.extract_strided_slice %34 {offsets = [0, 384], sizes = [64, 128], strides = [1, 1]} : vector<64x512xf32> to vector<64x128xf32>
    %40 = arith.maximumf %38, %39 : vector<64x128xf32>
    %41 = arith.maximumf %37, %40 : vector<64x128xf32>
    %c0_29 = arith.constant 0 : index
    %c0_30 = arith.constant 0 : index
    %42 = vector.load %arg5[%c0_29, %c0_30] : memref<1x128xf32, #tpu.memory_space<vmem>>, vector<1x128xf32>
    %43 = vector.broadcast %42 : vector<1x128xf32> to vector<64x128xf32>
    %44 = arith.addf %41, %43 : vector<64x128xf32>
    %cst_31 = arith.constant 0.000000e+00 : f32
    %45 = vector.broadcast %cst_31 : f32 to vector<64x128xf32>
    %46 = arith.maximumf %44, %45 : vector<64x128xf32>
    %47 = vector.shape_cast %46 : vector<64x128xf32> to vector<8x8x128xf32>
    %48 = vector.extract_strided_slice %47 {offsets = [0, 0, 0], sizes = [8, 1, 128], strides = [1, 1, 1]} : vector<8x8x128xf32> to vector<8x1x128xf32>
    %49 = vector.shape_cast %48 : vector<8x1x128xf32> to vector<8x128xf32>
    %50 = vector.extract_strided_slice %47 {offsets = [0, 1, 0], sizes = [8, 1, 128], strides = [1, 1, 1]} : vector<8x8x128xf32> to vector<8x1x128xf32>
    %51 = vector.shape_cast %50 : vector<8x1x128xf32> to vector<8x128xf32>
    %52 = vector.extract_strided_slice %47 {offsets = [0, 2, 0], sizes = [8, 1, 128], strides = [1, 1, 1]} : vector<8x8x128xf32> to vector<8x1x128xf32>
    %53 = vector.shape_cast %52 : vector<8x1x128xf32> to vector<8x128xf32>
    %54 = vector.extract_strided_slice %47 {offsets = [0, 3, 0], sizes = [8, 1, 128], strides = [1, 1, 1]} : vector<8x8x128xf32> to vector<8x1x128xf32>
    %55 = vector.shape_cast %54 : vector<8x1x128xf32> to vector<8x128xf32>
    %56 = tpu.concatenate %49, %51, %53, %55 in 1 : vector<8x128xf32>, vector<8x128xf32>, vector<8x128xf32>, vector<8x128xf32> -> vector<8x512xf32>
    %c0_32 = arith.constant 0 : index
    %c0_33 = arith.constant 0 : index
    %57 = vector.load %arg6[%c0_32, %c0_33] : memref<512x64xf32, #tpu.memory_space<vmem>>, vector<512x64xf32>
    %cst_34 = arith.constant dense<0.000000e+00> : vector<8x64xf32>
    %58 = tpu.matmul %56, %57, %cst_34 {dimension_numbers = #tpu.dot_dimension_numbers<[1], [0], [0], [1], [0, 0, 1, 1], [], []>} : vector<8x512xf32>, vector<512x64xf32>, vector<8x64xf32> -> vector<8x64xf32>
    %c0_35 = arith.constant 0 : index
    %c0_36 = arith.constant 0 : index
    %59 = vector.load %arg7[%c0_35, %c0_36] : memref<1x64xf32, #tpu.memory_space<vmem>>, vector<1x64xf32>
    %60 = vector.broadcast %59 : vector<1x64xf32> to vector<8x64xf32>
    %61 = arith.addf %58, %60 : vector<8x64xf32>
    %cst_37 = arith.constant 0.000000e+00 : f32
    %62 = vector.broadcast %cst_37 : f32 to vector<8x64xf32>
    %63 = arith.maximumf %61, %62 : vector<8x64xf32>
    %c0_38 = arith.constant 0 : index
    %c0_39 = arith.constant 0 : index
    %64 = vector.load %arg8[%c0_38, %c0_39] : memref<64x32xf32, #tpu.memory_space<vmem>>, vector<64x32xf32>
    %cst_40 = arith.constant dense<0.000000e+00> : vector<8x32xf32>
    %65 = tpu.matmul %63, %64, %cst_40 {dimension_numbers = #tpu.dot_dimension_numbers<[1], [0], [0], [1], [0, 0, 1, 1], [], []>} : vector<8x64xf32>, vector<64x32xf32>, vector<8x32xf32> -> vector<8x32xf32>
    %c0_41 = arith.constant 0 : index
    %c0_42 = arith.constant 0 : index
    %66 = vector.load %arg9[%c0_41, %c0_42] : memref<1x32xf32, #tpu.memory_space<vmem>>, vector<1x32xf32>
    %67 = vector.broadcast %66 : vector<1x32xf32> to vector<8x32xf32>
    %68 = arith.addf %65, %67 : vector<8x32xf32>
    %cst_43 = arith.constant 0.000000e+00 : f32
    %69 = vector.broadcast %cst_43 : f32 to vector<8x32xf32>
    %70 = arith.maximumf %68, %69 : vector<8x32xf32>
    %c0_44 = arith.constant 0 : index
    %c0_45 = arith.constant 0 : index
    %71 = vector.load %arg10[%c0_44, %c0_45] : memref<32x50xf32, #tpu.memory_space<vmem>>, vector<32x50xf32>
    %cst_46 = arith.constant dense<0.000000e+00> : vector<8x50xf32>
    %72 = tpu.matmul %70, %71, %cst_46 {dimension_numbers = #tpu.dot_dimension_numbers<[1], [0], [0], [1], [0, 0, 1, 1], [], []>} : vector<8x32xf32>, vector<32x50xf32>, vector<8x50xf32> -> vector<8x50xf32>
    %c0_47 = arith.constant 0 : index
    %c0_48 = arith.constant 0 : index
    %73 = vector.load %arg11[%c0_47, %c0_48] : memref<1x50xf32, #tpu.memory_space<vmem>>, vector<1x50xf32>
    %74 = vector.broadcast %73 : vector<1x50xf32> to vector<8x50xf32>
    %75 = arith.addf %72, %74 : vector<8x50xf32>
    %76 = math.tanh %75 : vector<8x50xf32>
    %c0_49 = arith.constant 0 : index
    %c0_50 = arith.constant 0 : index
    %77 = vector.load %arg12[%c0_49, %c0_50] : memref<8x50xf32, #tpu.memory_space<vmem>>, vector<8x50xf32>
    tpu.vector_store %arg12[%c0_49, %c0_50], %76 {strides = array<i32>} : memref<8x50xf32, #tpu.memory_space<vmem>>, vector<8x50xf32>,
    return
  }
  func.func @transform_0(%arg0: i32) -> (i32, i32, i32) {
    %c0_i32 = arith.constant 0 : i32
    %c0_i32_0 = arith.constant 0 : i32
    %c0_i32_1 = arith.constant 0 : i32
    return %arg0, %c0_i32, %c0_i32_0 : i32, i32, i32
  }
  func.func @transform_1(%arg0: i32) -> (i32, i32) {
    %c0_i32 = arith.constant 0 : i32
    %c0_i32_0 = arith.constant 0 : i32
    %c0_i32_1 = arith.constant 0 : i32
    return %c0_i32, %c0_i32_0 : i32, i32
  }
  func.func @transform_2(%arg0: i32) -> (i32, i32) {
    %c0_i32 = arith.constant 0 : i32
    %c0_i32_0 = arith.constant 0 : i32
    %c0_i32_1 = arith.constant 0 : i32
    return %c0_i32, %c0_i32_0 : i32, i32
  }
  func.func @transform_3(%arg0: i32) -> (i32, i32) {
    %c0_i32 = arith.constant 0 : i32
    %c0_i32_0 = arith.constant 0 : i32
    %c0_i32_1 = arith.constant 0 : i32
    return %c0_i32, %c0_i32_0 : i32, i32
  }
  func.func @transform_4(%arg0: i32) -> (i32, i32) {
    %c0_i32 = arith.constant 0 : i32
    %c0_i32_0 = arith.constant 0 : i32
    %c0_i32_1 = arith.constant 0 : i32
    return %c0_i32, %c0_i32_0 : i32, i32
  }
  func.func @transform_5(%arg0: i32) -> (i32, i32) {
    %c0_i32 = arith.constant 0 : i32
    %c0_i32_0 = arith.constant 0 : i32
    %c0_i32_1 = arith.constant 0 : i32
    return %c0_i32, %c0_i32_0 : i32, i32
  }
  func.func @transform_6(%arg0: i32) -> (i32, i32) {
    %c0_i32 = arith.constant 0 : i32
    %c0_i32_0 = arith.constant 0 : i32
    %c0_i32_1 = arith.constant 0 : i32
    return %c0_i32, %c0_i32_0 : i32, i32
  }
  func.func @transform_7(%arg0: i32) -> (i32, i32) {
    %c0_i32 = arith.constant 0 : i32
    %c0_i32_0 = arith.constant 0 : i32
    %c0_i32_1 = arith.constant 0 : i32
    return %c0_i32, %c0_i32_0 : i32, i32
  }
  func.func @transform_8(%arg0: i32) -> (i32, i32) {
    %c0_i32 = arith.constant 0 : i32
    %c0_i32_0 = arith.constant 0 : i32
    %c0_i32_1 = arith.constant 0 : i32
    return %c0_i32, %c0_i32_0 : i32, i32
  }
  func.func @transform_9(%arg0: i32) -> (i32, i32) {
    %c0_i32 = arith.constant 0 : i32
    %c0_i32_0 = arith.constant 0 : i32
    %c0_i32_1 = arith.constant 0 : i32
    return %c0_i32, %c0_i32_0 : i32, i32
  }
  func.func @transform_10(%arg0: i32) -> (i32, i32) {
    %c0_i32 = arith.constant 0 : i32
    %c0_i32_0 = arith.constant 0 : i32
    %c0_i32_1 = arith.constant 0 : i32
    return %c0_i32, %c0_i32_0 : i32, i32
  }
  func.func @transform_11(%arg0: i32) -> (i32, i32) {
    %c0_i32 = arith.constant 0 : i32
    %c0_i32_0 = arith.constant 0 : i32
    return %arg0, %c0_i32 : i32, i32
  }
}

</mosaic_0001>

<llo_original>
// kernel: tpu_custom_call.1
$region0: #{tpu_custom_call.1}
  #allocation0 [shape = 'u32[]', space=smem, size = 0x4, offset = 0x4, fixed_abs, tag = 'smem constant byte address 0x4 - core index']
  #allocation1 [shape = 'u32[144,128]{1,0:T(1,128)}', space=vmem, size = 0x12000, scoped, tag = 'internal scratch']
  #allocation2 [shape = 'f32[8,24,128]{2,1,0:T(8,128)}', space=vmem, size = 0x18000, scoped, tag = 'scratch operand']
  %s0 = inlined_call_operand.hbm [shape: f32[8,16,504], index: 0, kind: input, shape index: {}]
  %s1 = inlined_call_operand.hbm [shape: f32[504,512], index: 1, kind: input, shape index: {}]
  %s2 = inlined_call_operand.hbm [shape: f32[1,128], index: 2, kind: input, shape index: {}]
  %s3 = inlined_call_operand.hbm [shape: f32[768,512], index: 3, kind: input, shape index: {}]
  %s4 = inlined_call_operand.hbm [shape: f32[1,128], index: 4, kind: input, shape index: {}]
  %s5 = inlined_call_operand.vmem [shape: f32[512,64], index: 5, kind: input, shape index: {}]
  %s6 = inlined_call_operand.hbm [shape: f32[1,64], index: 6, kind: input, shape index: {}]
  %s7 = inlined_call_operand.vmem [shape: f32[64,32], index: 7, kind: input, shape index: {}]
  %s8 = inlined_call_operand.hbm [shape: f32[1,32], index: 8, kind: input, shape index: {}]
  %s9 = inlined_call_operand.hbm [shape: f32[32,50], index: 9, kind: input, shape index: {}]
  %s10 = inlined_call_operand.hbm [shape: f32[1,50], index: 10, kind: input, shape index: {}]
  %s11 = inlined_call_operand.hbm [shape: f32[8,50], index: 11, kind: output, shape index: {}]
  %s12 = sld [smem:[#allocation0]]
  $region90: #{tpu_custom_call.1} parent=0
    _
  %s14 = ssub.s32 1, %s12
  %s15 = scalar_select 0, %s14, %s12
  $region1: #{tpu_custom_call.1} parent=0
    #allocation3 [shape = 'u8[262144]{0}', space=vmem, size = 0x40000, scoped, tag = 'input window, operand 0, single buffered']
    #allocation4 [shape = 's32[1]{0}', space=sflag, size = 0x4, scoped, tag = 'scoped memory for tpu_custom_call.1']
    #allocation5 [shape = 's32[1]{0}', space=sflag, size = 0x4, scoped, tag = 'scoped memory for tpu_custom_call.1']
    #allocation6 [shape = 'u8[1032192]{0}', space=vmem, size = 0xfc000, scoped, tag = 'input window, operand 1, single buffered']
    #allocation7 [shape = 's32[1]{0}', space=sflag, size = 0x4, scoped, tag = 'scoped memory for tpu_custom_call.1']
    #allocation8 [shape = 'u8[512]{0}', space=vmem, size = 0x400, scoped, tag = 'input window, operand 2, single buffered']
    #allocation9 [shape = 'u8[1572864]{0}', space=vmem, size = 0x180000, scoped, tag = 'input window, operand 3, single buffered']
    #allocation10 [shape = 's32[1]{0}', space=sflag, size = 0x4, scoped, tag = 'scoped memory for tpu_custom_call.1']
    #allocation11 [shape = 'u8[512]{0}', space=vmem, size = 0x400, scoped, tag = 'input window, operand 4, single buffered']
    #allocation12 [shape = 'u8[512]{0}', space=vmem, size = 0x400, scoped, tag = 'input window, operand 6, single buffered']
    #allocation13 [shape = 's32[1]{0}', space=sflag, size = 0x4, scoped, tag = 'scoped memory for tpu_custom_call.1']
    #allocation14 [shape = 'u8[512]{0}', space=vmem, size = 0x400, scoped, tag = 'input window, operand 8, single buffered']
    #allocation15 [shape = 'u8[16384]{0}', space=vmem, size = 0x4000, scoped, tag = 'input window, operand 9, single buffered']
    #allocation16 [shape = 's32[1]{0}', space=sflag, size = 0x4, scoped, tag = 'scoped memory for tpu_custom_call.1']
    #allocation17 [shape = 'u8[512]{0}', space=vmem, size = 0x400, scoped, tag = 'input window, operand 10, single buffered']
    #allocation18 [shape = 'u8[4096]{0}', space=vmem, size = 0x1000, scoped, tag = 'output window, operand 0, single buffered']
    %16 = vsyncpa [#allocation4], 0
    %17 = vsyncpa [#allocation7], 0
    %18 = vsyncpa [#allocation10], 0
    %19 = vsyncpa [#allocation13], 0
    %20 = vsyncpa [#allocation16], 0
    %21 = vsyncpa [#allocation5], 0
    // Predicated region
    $region2: #{tpu_custom_call.1} parent=1 // pred_check
      _
    $region3: #{tpu_custom_call.1} parent=1 // pred_check_branch
      %23 = sbr.rel (0) target = $region5
    $region4: #{tpu_custom_call.1} parent=1 // pred_region
      %s25 = ssub.s32 8192, 8192
      %26 = vsyncadd [#allocation4], %s25
      %s27 = sshll.u32 [#allocation3], 4
      %s28 = int_to_ptr.vmem [resolvable:$true] %s27
      %33 = dma.hbm_to_vmem [thread:$0]  %s0, 8192, %s28, [#allocation4], 512, 512, 32
    $region5: #{tpu_custom_call.1} parent=1 // pred_fallthru
      _
    // Predicated region
    $region6: #{tpu_custom_call.1} parent=1 // pred_check
      _
    $region7: #{tpu_custom_call.1} parent=1 // pred_check_branch
      %35 = sbr.rel (0) target = $region9
    $region8: #{tpu_custom_call.1} parent=1 // pred_region
      %s37 = ssub.s32 32256, 32256
      %38 = vsyncadd [#allocation7], %s37
      %s39 = sshll.u32 [#allocation6], 4
      %s40 = int_to_ptr.vmem [resolvable:$true] %s39
      %45 = dma.hbm_to_vmem [thread:$0]  %s1, 32256, %s40, [#allocation7], 512, 512, 32
    $region9: #{tpu_custom_call.1} parent=1 // pred_fallthru
      _
    // Predicated region
    $region10: #{tpu_custom_call.1} parent=1 // pred_check
      _
    $region11: #{tpu_custom_call.1} parent=1 // pred_check_branch
      %47 = sbr.rel (0) target = $region13
    $region12: #{tpu_custom_call.1} parent=1 // pred_region
      %s49 = ssub.s32 16, 16
      %50 = vsyncadd [#allocation7], %s49
      %s52 = sshll.u32 [#allocation8], 4
      %s53 = int_to_ptr.vmem [resolvable:$true] %s52
      %55 = dma.hbm_to_vmem [thread:$0]  %s2, 16, %s53, [#allocation7]
    $region13: #{tpu_custom_call.1} parent=1 // pred_fallthru
      _
    // Predicated region
    $region14: #{tpu_custom_call.1} parent=1 // pred_check
      _
    $region15: #{tpu_custom_call.1} parent=1 // pred_check_branch
      %57 = sbr.rel (0) target = $region17
    $region16: #{tpu_custom_call.1} parent=1 // pred_region
      %s59 = ssub.s32 49152, 49152
      %60 = vsyncadd [#allocation10], %s59
      %s61 = sshll.u32 [#allocation9], 4
      %s62 = int_to_ptr.vmem [resolvable:$true] %s61
      %67 = dma.hbm_to_vmem [thread:$0]  %s3, 49152, %s62, [#allocation10], 512, 512, 32
    $region17: #{tpu_custom_call.1} parent=1 // pred_fallthru
      _
    // Predicated region
    $region18: #{tpu_custom_call.1} parent=1 // pred_check
      _
    $region19: #{tpu_custom_call.1} parent=1 // pred_check_branch
      %69 = sbr.rel (0) target = $region21
    $region20: #{tpu_custom_call.1} parent=1 // pred_region
      %s71 = ssub.s32 16, 16
      %72 = vsyncadd [#allocation10], %s71
      %s74 = sshll.u32 [#allocation11], 4
      %s75 = int_to_ptr.vmem [resolvable:$true] %s74
      %77 = dma.hbm_to_vmem [thread:$0]  %s4, 16, %s75, [#allocation10]
    $region21: #{tpu_custom_call.1} parent=1 // pred_fallthru
      _
    // Predicated region
    $region22: #{tpu_custom_call.1} parent=1 // pred_check
      _
    $region23: #{tpu_custom_call.1} parent=1 // pred_check_branch
      %79 = sbr.rel (0) target = $region25
    $region24: #{tpu_custom_call.1} parent=1 // pred_region
      _
    $region25: #{tpu_custom_call.1} parent=1 // pred_fallthru
      _
    // Predicated region
    $region26: #{tpu_custom_call.1} parent=1 // pred_check
      _
    $region27: #{tpu_custom_call.1} parent=1 // pred_check_branch
      %81 = sbr.rel (0) target = $region29
    $region28: #{tpu_custom_call.1} parent=1 // pred_region
      %s83 = ssub.s32 16, 16
      %84 = vsyncadd [#allocation13], %s83
      %s86 = sshll.u32 [#allocation12], 4
      %s87 = int_to_ptr.vmem [resolvable:$true] %s86
      %89 = dma.hbm_to_vmem [thread:$0]  %s6, 16, %s87, [#allocation13]
    $region29: #{tpu_custom_call.1} parent=1 // pred_fallthru
      _
    // Predicated region
    $region30: #{tpu_custom_call.1} parent=1 // pred_check
      _
    $region31: #{tpu_custom_call.1} parent=1 // pred_check_branch
      %91 = sbr.rel (0) target = $region33
    $region32: #{tpu_custom_call.1} parent=1 // pred_region
      _
    $region33: #{tpu_custom_call.1} parent=1 // pred_fallthru
      _
    // Predicated region
    $region34: #{tpu_custom_call.1} parent=1 // pred_check
      _
    $region35: #{tpu_custom_call.1} parent=1 // pred_check_branch
      %93 = sbr.rel (0) target = $region37
    $region36: #{tpu_custom_call.1} parent=1 // pred_region
      %s95 = ssub.s32 16, 16
      %96 = vsyncadd [#allocation13], %s95
      %s98 = sshll.u32 [#allocation14], 4
      %s99 = int_to_ptr.vmem [resolvable:$true] %s98
      %101 = dma.hbm_to_vmem [thread:$0]  %s8, 16, %s99, [#allocation13]
    $region37: #{tpu_custom_call.1} parent=1 // pred_fallthru
      _
    // Predicated region
    $region38: #{tpu_custom_call.1} parent=1 // pred_check
      _
    $region39: #{tpu_custom_call.1} parent=1 // pred_check_branch
      %103 = sbr.rel (0) target = $region41
    $region40: #{tpu_custom_call.1} parent=1 // pred_region
      %s105 = ssub.s32 512, 512
      %106 = vsyncadd [#allocation16], %s105
      %s107 = sshll.u32 [#allocation15], 4
      %s108 = int_to_ptr.vmem [resolvable:$true] %s107
      %113 = dma.hbm_to_vmem [thread:$0]  %s9, 512, %s108, [#allocation16], 128, 128, 8
    $region41: #{tpu_custom_call.1} parent=1 // pred_fallthru
      _
    // Predicated region
    $region42: #{tpu_custom_call.1} parent=1 // pred_check
      _
    $region43: #{tpu_custom_call.1} parent=1 // pred_check_branch
      %115 = sbr.rel (0) target = $region45
    $region44: #{tpu_custom_call.1} parent=1 // pred_region
      %s117 = ssub.s32 16, 16
      %118 = vsyncadd [#allocation16], %s117
      %s120 = sshll.u32 [#allocation17], 4
      %s121 = int_to_ptr.vmem [resolvable:$true] %s120
      %123 = dma.hbm_to_vmem [thread:$0]  %s10, 16, %s121, [#allocation16]
    $region45: #{tpu_custom_call.1} parent=1 // pred_fallthru
      _
    // Predicated region
    $region46: #{tpu_custom_call.1} parent=1 // pred_check
      _
    $region47: #{tpu_custom_call.1} parent=1 // pred_check_branch
      %125 = sbr.rel (0) target = $region49
    $region48: #{tpu_custom_call.1} parent=1 // pred_region
      %126 = dma.done [#allocation4], 8192
    $region49: #{tpu_custom_call.1} parent=1 // pred_fallthru
      _
    // Predicated region
    $region50: #{tpu_custom_call.1} parent=1 // pred_check
      _
    $region51: #{tpu_custom_call.1} parent=1 // pred_check_branch
      %128 = sbr.rel (0) target = $region53
    $region52: #{tpu_custom_call.1} parent=1 // pred_region
      %129 = dma.done [#allocation7], 32256
    $region53: #{tpu_custom_call.1} parent=1 // pred_fallthru
      _
    // Predicated region
    $region54: #{tpu_custom_call.1} parent=1 // pred_check
      _
    $region55: #{tpu_custom_call.1} parent=1 // pred_check_branch
      %131 = sbr.rel (0) target = $region57
    $region56: #{tpu_custom_call.1} parent=1 // pred_region
      %132 = dma.done [#allocation7], 16
    $region57: #{tpu_custom_call.1} parent=1 // pred_fallthru
      _
    // Predicated region
    $region58: #{tpu_custom_call.1} parent=1 // pred_check
      _
    $region59: #{tpu_custom_call.1} parent=1 // pred_check_branch
      %134 = sbr.rel (0) target = $region61
    $region60: #{tpu_custom_call.1} parent=1 // pred_region
      %135 = dma.done [#allocation10], 49152
    $region61: #{tpu_custom_call.1} parent=1 // pred_fallthru
      _
    // Predicated region
    $region62: #{tpu_custom_call.1} parent=1 // pred_check
      _
    $region63: #{tpu_custom_call.1} parent=1 // pred_check_branch
      %137 = sbr.rel (0) target = $region65
    $region64: #{tpu_custom_call.1} parent=1 // pred_region
      %138 = dma.done [#allocation10], 16
    $region65: #{tpu_custom_call.1} parent=1 // pred_fallthru
      _
    // Predicated region
    $region66: #{tpu_custom_call.1} parent=1 // pred_check
      _
    $region67: #{tpu_custom_call.1} parent=1 // pred_check_branch
      %140 = sbr.rel (0) target = $region69
    $region68: #{tpu_custom_call.1} parent=1 // pred_region
      %141 = dma.done [#allocation13], 16
    $region69: #{tpu_custom_call.1} parent=1 // pred_fallthru
      _
    // Predicated region
    $region70: #{tpu_custom_call.1} parent=1 // pred_check
      _
    $region71: #{tpu_custom_call.1} parent=1 // pred_check_branch
      %143 = sbr.rel (0) target = $region73
    $region72: #{tpu_custom_call.1} parent=1 // pred_region
      %144 = dma.done [#allocation13], 16
    $region73: #{tpu_custom_call.1} parent=1 // pred_fallthru
      _
    // Predicated region
    $region74: #{tpu_custom_call.1} parent=1 // pred_check
      _
    $region75: #{tpu_custom_call.1} parent=1 // pred_check_branch
      %146 = sbr.rel (0) target = $region77
    $region76: #{tpu_custom_call.1} parent=1 // pred_region
      %147 = dma.done [#allocation16], 512
    $region77: #{tpu_custom_call.1} parent=1 // pred_fallthru
      _
    // Predicated region
    $region78: #{tpu_custom_call.1} parent=1 // pred_check
      _
    $region79: #{tpu_custom_call.1} parent=1 // pred_check_branch
      %149 = sbr.rel (0) target = $region81
    $region80: #{tpu_custom_call.1} parent=1 // pred_region
      %150 = dma.done [#allocation16], 16
    $region81: #{tpu_custom_call.1} parent=1 // pred_fallthru
      _
    %v151 = vld [vmem:[#allocation3] sm:$0xff]
    %v152 = vld [vmem:[#allocation3 + $0x8] sm:$0xff]
    %v153 = vld [vmem:[#allocation3 + $0x10] sm:$0xff]
    %v154 = vld [vmem:[#allocation3 + $0x18] sm:$0xff]
    %v155 = vld [vmem:[#allocation3 + $0x20] sm:$0xff]
    %v156 = vld [vmem:[#allocation3 + $0x28] sm:$0xff]
    %v157 = vld [vmem:[#allocation3 + $0x30] sm:$0xff]
    %v158 = vld [vmem:[#allocation3 + $0x38] sm:$0xff]
    %v159 = vld [vmem:[#allocation3 + $0x40] sm:$0xff]
    %v160 = vld [vmem:[#allocation3 + $0x48] sm:$0xff]
    %v161 = vld [vmem:[#allocation3 + $0x50] sm:$0xff]
    %v162 = vld [vmem:[#allocation3 + $0x58] sm:$0xff]
    %v163 = vld [vmem:[#allocation3 + $0x60] sm:$0xff]
    %v164 = vld [vmem:[#allocation3 + $0x68] sm:$0xff]
    %v165 = vld [vmem:[#allocation3 + $0x70] sm:$0xff]
    %v166 = vld [vmem:[#allocation3 + $0x78] sm:$0xff]
    %v167 = vld [vmem:[#allocation3 + $0x80] sm:$0xff]
    %v168 = vld [vmem:[#allocation3 + $0x88] sm:$0xff]
    %v169 = vld [vmem:[#allocation3 + $0x90] sm:$0xff]
    %v170 = vld [vmem:[#allocation3 + $0x98] sm:$0xff]
    %v171 = vld [vmem:[#allocation3 + $0xa0] sm:$0xff]
    %v172 = vld [vmem:[#allocation3 + $0xa8] sm:$0xff]
    %v173 = vld [vmem:[#allocation3 + $0xb0] sm:$0xff]
    %v174 = vld [vmem:[#allocation3 + $0xb8] sm:$0xff]
    %v175 = vld [vmem:[#allocation3 + $0xc0] sm:$0xff]
    %v176 = vld [vmem:[#allocation3 + $0xc8] sm:$0xff]
    %v177 = vld [vmem:[#allocation3 + $0xd0] sm:$0xff]
    %v178 = vld [vmem:[#allocation3 + $0xd8] sm:$0xff]
    %v179 = vld [vmem:[#allocation3 + $0xe0] sm:$0xff]
    %v180 = vld [vmem:[#allocation3 + $0xe8] sm:$0xff]
    %v181 = vld [vmem:[#allocation3 + $0xf0] sm:$0xff]
    %v182 = vld [vmem:[#allocation3 + $0xf8] sm:$0xff]
    %v183 = vld [vmem:[#allocation3 + $0x100] sm:$0xff]
    %v184 = vld [vmem:[#allocation3 + $0x108] sm:$0xff]
    %v185 = vld [vmem:[#allocation3 + $0x110] sm:$0xff]
    %v186 = vld [vmem:[#allocation3 + $0x118] sm:$0xff]
    %v187 = vld [vmem:[#allocation3 + $0x120] sm:$0xff]
    %v188 = vld [vmem:[#allocation3 + $0x128] sm:$0xff]
    %v189 = vld [vmem:[#allocation3 + $0x130] sm:$0xff]
    %v190 = vld [vmem:[#allocation3 + $0x138] sm:$0xff]
    %v191 = vld [vmem:[#allocation3 + $0x140] sm:$0xff]
    %v192 = vld [vmem:[#allocation3 + $0x148] sm:$0xff]
    %v193 = vld [vmem:[#allocation3 + $0x150] sm:$0xff]
    %v194 = vld [vmem:[#allocation3 + $0x158] sm:$0xff]
    %v195 = vld [vmem:[#allocation3 + $0x160] sm:$0xff]
    %v196 = vld [vmem:[#allocation3 + $0x168] sm:$0xff]
    %v197 = vld [vmem:[#allocation3 + $0x170] sm:$0xff]
    %v198 = vld [vmem:[#allocation3 + $0x178] sm:$0xff]
    %v199 = vld [vmem:[#allocation3 + $0x180] sm:$0xff]
    %v200 = vld [vmem:[#allocation3 + $0x188] sm:$0xff]
    %v201 = vld [vmem:[#allocation3 + $0x190] sm:$0xff]
    %v202 = vld [vmem:[#allocation3 + $0x198] sm:$0xff]
    %v203 = vld [vmem:[#allocation3 + $0x1a0] sm:$0xff]
    %v204 = vld [vmem:[#allocation3 + $0x1a8] sm:$0xff]
    %v205 = vld [vmem:[#allocation3 + $0x1b0] sm:$0xff]
    %v206 = vld [vmem:[#allocation3 + $0x1b8] sm:$0xff]
    %v207 = vld [vmem:[#allocation3 + $0x1c0] sm:$0xff]
    %v208 = vld [vmem:[#allocation3 + $0x1c8] sm:$0xff]
    %v209 = vld [vmem:[#allocation3 + $0x1d0] sm:$0xff]
    %v210 = vld [vmem:[#allocation3 + $0x1d8] sm:$0xff]
    %v211 = vld [vmem:[#allocation3 + $0x1e0] sm:$0xff]
    %v212 = vld [vmem:[#allocation3 + $0x1e8] sm:$0xff]
    %v213 = vld [vmem:[#allocation3 + $0x1f0] sm:$0xff]
    %v214 = vld [vmem:[#allocation3 + $0x1f8] sm:$0xff]
    %v215 = vld [vmem:[#allocation6] sm:$0xff]
    %v216 = vld [vmem:[#allocation6 + $0x8] sm:$0xff]
    %v217 = vld [vmem:[#allocation6 + $0x10] sm:$0xff]
    %v218 = vld [vmem:[#allocation6 + $0x18] sm:$0xff]
    %v219 = vld [vmem:[#allocation6 + $0x20] sm:$0xff]
    %v220 = vld [vmem:[#allocation6 + $0x28] sm:$0xff]
    %v221 = vld [vmem:[#allocation6 + $0x30] sm:$0xff]
    %v222 = vld [vmem:[#allocation6 + $0x38] sm:$0xff]
    %v223 = vld [vmem:[#allocation6 + $0x40] sm:$0xff]
    %v224 = vld [vmem:[#allocation6 + $0x48] sm:$0xff]
    %v225 = vld [vmem:[#allocation6 + $0x50] sm:$0xff]
    %v226 = vld [vmem:[#allocation6 + $0x58] sm:$0xff]
    %v227 = vld [vmem:[#allocation6 + $0x60] sm:$0xff]
    %v228 = vld [vmem:[#allocation6 + $0x68] sm:$0xff]
    %v229 = vld [vmem:[#allocation6 + $0x70] sm:$0xff]
    %v230 = vld [vmem:[#allocation6 + $0x78] sm:$0xff]
    %v231 = vld [vmem:[#allocation6 + $0x80] sm:$0xff]
    %v232 = vld [vmem:[#allocation6 + $0x88] sm:$0xff]
    %v233 = vld [vmem:[#allocation6 + $0x90] sm:$0xff]
    %v234 = vld [vmem:[#allocation6 + $0x98] sm:$0xff]
    %v235 = vld [vmem:[#allocation6 + $0xa0] sm:$0xff]
    %v236 = vld [vmem:[#allocation6 + $0xa8] sm:$0xff]
    %v237 = vld [vmem:[#allocation6 + $0xb0] sm:$0xff]
    %v238 = vld [vmem:[#allocation6 + $0xb8] sm:$0xff]
    %v239 = vld [vmem:[#allocation6 + $0xc0] sm:$0xff]
    %v240 = vld [vmem:[#allocation6 + $0xc8] sm:$0xff]
    %v241 = vld [vmem:[#allocation6 + $0xd0] sm:$0xff]
    %v242 = vld [vmem:[#allocation6 + $0xd8] sm:$0xff]
    %v243 = vld [vmem:[#allocation6 + $0xe0] sm:$0xff]
    %v244 = vld [vmem:[#allocation6 + $0xe8] sm:$0xff]
    %v245 = vld [vmem:[#allocation6 + $0xf0] sm:$0xff]
    %v246 = vld [vmem:[#allocation6 + $0xf8] sm:$0xff]
    %v247 = vld [vmem:[#allocation6 + $0x100] sm:$0xff]
    %v248 = vld [vmem:[#allocation6 + $0x108] sm:$0xff]
    %v249 = vld [vmem:[#allocation6 + $0x110] sm:$0xff]
    %v250 = vld [vmem:[#allocation6 + $0x118] sm:$0xff]
    %v251 = vld [vmem:[#allocation6 + $0x120] sm:$0xff]
    %v252 = vld [vmem:[#allocation6 + $0x128] sm:$0xff]
    %v253 = vld [vmem:[#allocation6 + $0x130] sm:$0xff]
    %v254 = vld [vmem:[#allocation6 + $0x138] sm:$0xff]
    %v255 = vld [vmem:[#allocation6 + $0x140] sm:$0xff]
    %v256 = vld [vmem:[#allocation6 + $0x148] sm:$0xff]
    %v257 = vld [vmem:[#allocation6 + $0x150] sm:$0xff]
    %v258 = vld [vmem:[#allocation6 + $0x158] sm:$0xff]
    %v259 = vld [vmem:[#allocation6 + $0x160] sm:$0xff]
    %v260 = vld [vmem:[#allocation6 + $0x168] sm:$0xff]
    %v261 = vld [vmem:[#allocation6 + $0x170] sm:$0xff]
    %v262 = vld [vmem:[#allocation6 + $0x178] sm:$0xff]
    %v263 = vld [vmem:[#allocation6 + $0x180] sm:$0xff]
    %v264 = vld [vmem:[#allocation6 + $0x188] sm:$0xff]
    %v265 = vld [vmem:[#allocation6 + $0x190] sm:$0xff]
    %v266 = vld [vmem:[#allocation6 + $0x198] sm:$0xff]
    %v267 = vld [vmem:[#allocation6 + $0x1a0] sm:$0xff]
    %v268 = vld [vmem:[#allocation6 + $0x1a8] sm:$0xff]
    %v269 = vld [vmem:[#allocation6 + $0x1b0] sm:$0xff]
    %v270 = vld [vmem:[#allocation6 + $0x1b8] sm:$0xff]
    %v271 = vld [vmem:[#allocation6 + $0x1c0] sm:$0xff]
    %v272 = vld [vmem:[#allocation6 + $0x1c8] sm:$0xff]
    %v273 = vld [vmem:[#allocation6 + $0x1d0] sm:$0xff]
    %v274 = vld [vmem:[#allocation6 + $0x1d8] sm:$0xff]
    %v275 = vld [vmem:[#allocation6 + $0x1e0] sm:$0xff]
    %v276 = vld [vmem:[#allocation6 + $0x1e8] sm:$0xff]
    %v277 = vld [vmem:[#allocation6 + $0x1f0] sm:$0xff]
    %v278 = vld [vmem:[#allocation6 + $0x1f8] sm:$0xff]
    %v279 = vld [vmem:[#allocation6 + $0x200] sm:$0xff]
    %v280 = vld [vmem:[#allocation6 + $0x208] sm:$0xff]
    %v281 = vld [vmem:[#allocation6 + $0x210] sm:$0xff]
    %v282 = vld [vmem:[#allocation6 + $0x218] sm:$0xff]
    %v283 = vld [vmem:[#allocation6 + $0x220] sm:$0xff]
    %v284 = vld [vmem:[#allocation6 + $0x228] sm:$0xff]
    %v285 = vld [vmem:[#allocation6 + $0x230] sm:$0xff]
    %v286 = vld [vmem:[#allocation6 + $0x238] sm:$0xff]
    %v287 = vld [vmem:[#allocation6 + $0x240] sm:$0xff]
    %v288 = vld [vmem:[#allocation6 + $0x248] sm:$0xff]
    %v289 = vld [vmem:[#allocation6 + $0x250] sm:$0xff]
    %v290 = vld [vmem:[#allocation6 + $0x258] sm:$0xff]
    %v291 = vld [vmem:[#allocation6 + $0x260] sm:$0xff]
    %v292 = vld [vmem:[#allocation6 + $0x268] sm:$0xff]
    %v293 = vld [vmem:[#allocation6 + $0x270] sm:$0xff]
    %v294 = vld [vmem:[#allocation6 + $0x278] sm:$0xff]
    %v295 = vld [vmem:[#allocation6 + $0x280] sm:$0xff]
    %v296 = vld [vmem:[#allocation6 + $0x288] sm:$0xff]
    %v297 = vld [vmem:[#allocation6 + $0x290] sm:$0xff]
    %v298 = vld [vmem:[#allocation6 + $0x298] sm:$0xff]
    %v299 = vld [vmem:[#allocation6 + $0x2a0] sm:$0xff]
    %v300 = vld [vmem:[#allocation6 + $0x2a8] sm:$0xff]
    %v301 = vld [vmem:[#allocation6 + $0x2b0] sm:$0xff]
    %v302 = vld [vmem:[#allocation6 + $0x2b8] sm:$0xff]
    %v303 = vld [vmem:[#allocation6 + $0x2c0] sm:$0xff]
    %v304 = vld [vmem:[#allocation6 + $0x2c8] sm:$0xff]
    %v305 = vld [vmem:[#allocation6 + $0x2d0] sm:$0xff]
    %v306 = vld [vmem:[#allocation6 + $0x2d8] sm:$0xff]
    %v307 = vld [vmem:[#allocation6 + $0x2e0] sm:$0xff]
    %v308 = vld [vmem:[#allocation6 + $0x2e8] sm:$0xff]
    %v309 = vld [vmem:[#allocation6 + $0x2f0] sm:$0xff]
    %v310 = vld [vmem:[#allocation6 + $0x2f8] sm:$0xff]
    %v311 = vld [vmem:[#allocation6 + $0x300] sm:$0xff]
    %v312 = vld [vmem:[#allocation6 + $0x308] sm:$0xff]
    %v313 = vld [vmem:[#allocation6 + $0x310] sm:$0xff]
    %v314 = vld [vmem:[#allocation6 + $0x318] sm:$0xff]
    %v315 = vld [vmem:[#allocation6 + $0x320] sm:$0xff]
    %v316 = vld [vmem:[#allocation6 + $0x328] sm:$0xff]
    %v317 = vld [vmem:[#allocation6 + $0x330] sm:$0xff]
    %v318 = vld [vmem:[#allocation6 + $0x338] sm:$0xff]
    %v319 = vld [vmem:[#allocation6 + $0x340] sm:$0xff]
    %v320 = vld [vmem:[#allocation6 + $0x348] sm:$0xff]
    %v321 = vld [vmem:[#allocation6 + $0x350] sm:$0xff]
    %v322 = vld [vmem:[#allocation6 + $0x358] sm:$0xff]
    %v323 = vld [vmem:[#allocation6 + $0x360] sm:$0xff]
    %v324 = vld [vmem:[#allocation6 + $0x368] sm:$0xff]
    %v325 = vld [vmem:[#allocation6 + $0x370] sm:$0xff]
    %v326 = vld [vmem:[#allocation6 + $0x378] sm:$0xff]
    %v327 = vld [vmem:[#allocation6 + $0x380] sm:$0xff]
    %v328 = vld [vmem:[#allocation6 + $0x388] sm:$0xff]
    %v329 = vld [vmem:[#allocation6 + $0x390] sm:$0xff]
    %v330 = vld [vmem:[#allocation6 + $0x398] sm:$0xff]
    %v331 = vld [vmem:[#allocation6 + $0x3a0] sm:$0xff]
    %v332 = vld [vmem:[#allocation6 + $0x3a8] sm:$0xff]
    %v333 = vld [vmem:[#allocation6 + $0x3b0] sm:$0xff]
    %v334 = vld [vmem:[#allocation6 + $0x3b8] sm:$0xff]
    %v335 = vld [vmem:[#allocation6 + $0x3c0] sm:$0xff]
    %v336 = vld [vmem:[#allocation6 + $0x3c8] sm:$0xff]
    %v337 = vld [vmem:[#allocation6 + $0x3d0] sm:$0xff]
    %v338 = vld [vmem:[#allocation6 + $0x3d8] sm:$0xff]
    %v339 = vld [vmem:[#allocation6 + $0x3e0] sm:$0xff]
    %v340 = vld [vmem:[#allocation6 + $0x3e8] sm:$0xff]
    %v341 = vld [vmem:[#allocation6 + $0x3f0] sm:$0xff]
    %v342 = vld [vmem:[#allocation6 + $0x3f8] sm:$0xff]
    %v343 = vld [vmem:[#allocation6 + $0x400] sm:$0xff]
    %v344 = vld [vmem:[#allocation6 + $0x408] sm:$0xff]
    %v345 = vld [vmem:[#allocation6 + $0x410] sm:$0xff]
    %v346 = vld [vmem:[#allocation6 + $0x418] sm:$0xff]
    %v347 = vld [vmem:[#allocation6 + $0x420] sm:$0xff]
    %v348 = vld [vmem:[#allocation6 + $0x428] sm:$0xff]
    %v349 = vld [vmem:[#allocation6 + $0x430] sm:$0xff]
    %v350 = vld [vmem:[#allocation6 + $0x438] sm:$0xff]
    %v351 = vld [vmem:[#allocation6 + $0x440] sm:$0xff]
    %v352 = vld [vmem:[#allocation6 + $0x448] sm:$0xff]
    %v353 = vld [vmem:[#allocation6 + $0x450] sm:$0xff]
    %v354 = vld [vmem:[#allocation6 + $0x458] sm:$0xff]
    %v355 = vld [vmem:[#allocation6 + $0x460] sm:$0xff]
    %v356 = vld [vmem:[#allocation6 + $0x468] sm:$0xff]
    %v357 = vld [vmem:[#allocation6 + $0x470] sm:$0xff]
    %v358 = vld [vmem:[#allocation6 + $0x478] sm:$0xff]
    %v359 = vld [vmem:[#allocation6 + $0x480] sm:$0xff]
    %v360 = vld [vmem:[#allocation6 + $0x488] sm:$0xff]
    %v361 = vld [vmem:[#allocation6 + $0x490] sm:$0xff]
    %v362 = vld [vmem:[#allocation6 + $0x498] sm:$0xff]
    %v363 = vld [vmem:[#allocation6 + $0x4a0] sm:$0xff]
    %v364 = vld [vmem:[#allocation6 + $0x4a8] sm:$0xff]
    %v365 = vld [vmem:[#allocation6 + $0x4b0] sm:$0xff]
    %v366 = vld [vmem:[#allocation6 + $0x4b8] sm:$0xff]
    %v367 = vld [vmem:[#allocation6 + $0x4c0] sm:$0xff]
    %v368 = vld [vmem:[#allocation6 + $0x4c8] sm:$0xff]
    %v369 = vld [vmem:[#allocation6 + $0x4d0] sm:$0xff]
    %v370 = vld [vmem:[#allocation6 + $0x4d8] sm:$0xff]
    %v371 = vld [vmem:[#allocation6 + $0x4e0] sm:$0xff]
    %v372 = vld [vmem:[#allocation6 + $0x4e8] sm:$0xff]
    %v373 = vld [vmem:[#allocation6 + $0x4f0] sm:$0xff]
    %v374 = vld [vmem:[#allocation6 + $0x4f8] sm:$0xff]
    %v375 = vld [vmem:[#allocation6 + $0x500] sm:$0xff]
    %v376 = vld [vmem:[#allocation6 + $0x508] sm:$0xff]
    %v377 = vld [vmem:[#allocation6 + $0x510] sm:$0xff]
    %v378 = vld [vmem:[#allocation6 + $0x518] sm:$0xff]
    %v379 = vld [vmem:[#allocation6 + $0x520] sm:$0xff]
    %v380 = vld [vmem:[#allocation6 + $0x528] sm:$0xff]
    %v381 = vld [vmem:[#allocation6 + $0x530] sm:$0xff]
    %v382 = vld [vmem:[#allocation6 + $0x538] sm:$0xff]
    %v383 = vld [vmem:[#allocation6 + $0x540] sm:$0xff]
    %v384 = vld [vmem:[#allocation6 + $0x548] sm:$0xff]
    %v385 = vld [vmem:[#allocation6 + $0x550] sm:$0xff]
    %v386 = vld [vmem:[#allocation6 + $0x558] sm:$0xff]
    %v387 = vld [vmem:[#allocation6 + $0x560] sm:$0xff]
    %v388 = vld [vmem:[#allocation6 + $0x568] sm:$0xff]
    %v389 = vld [vmem:[#allocation6 + $0x570] sm:$0xff]
    %v390 = vld [vmem:[#allocation6 + $0x578] sm:$0xff]
    %v391 = vld [vmem:[#allocation6 + $0x580] sm:$0xff]
    %v392 = vld [vmem:[#allocation6 + $0x588] sm:$0xff]
    %v393 = vld [vmem:[#allocation6 + $0x590] sm:$0xff]
    %v394 = vld [vmem:[#allocation6 + $0x598] sm:$0xff]
    %v395 = vld [vmem:[#allocation6 + $0x5a0] sm:$0xff]
    %v396 = vld [vmem:[#allocation6 + $0x5a8] sm:$0xff]
    %v397 = vld [vmem:[#allocation6 + $0x5b0] sm:$0xff]
    %v398 = vld [vmem:[#allocation6 + $0x5b8] sm:$0xff]
    %v399 = vld [vmem:[#allocation6 + $0x5c0] sm:$0xff]
    %v400 = vld [vmem:[#allocation6 + $0x5c8] sm:$0xff]
    %v401 = vld [vmem:[#allocation6 + $0x5d0] sm:$0xff]
    %v402 = vld [vmem:[#allocation6 + $0x5d8] sm:$0xff]
    %v403 = vld [vmem:[#allocation6 + $0x5e0] sm:$0xff]
    %v404 = vld [vmem:[#allocation6 + $0x5e8] sm:$0xff]
    %v405 = vld [vmem:[#allocation6 + $0x5f0] sm:$0xff]
    %v406 = vld [vmem:[#allocation6 + $0x5f8] sm:$0xff]
    %v407 = vld [vmem:[#allocation6 + $0x600] sm:$0xff]
    %v408 = vld [vmem:[#allocation6 + $0x608] sm:$0xff]
    %v409 = vld [vmem:[#allocation6 + $0x610] sm:$0xff]
    %v410 = vld [vmem:[#allocation6 + $0x618] sm:$0xff]
    %v411 = vld [vmem:[#allocation6 + $0x620] sm:$0xff]
    %v412 = vld [vmem:[#allocation6 + $0x628] sm:$0xff]
    %v413 = vld [vmem:[#allocation6 + $0x630] sm:$0xff]
    %v414 = vld [vmem:[#allocation6 + $0x638] sm:$0xff]
    %v415 = vld [vmem:[#allocation6 + $0x640] sm:$0xff]
    %v416 = vld [vmem:[#allocation6 + $0x648] sm:$0xff]
    %v417 = vld [vmem:[#allocation6 + $0x650] sm:$0xff]
    %v418 = vld [vmem:[#allocation6 + $0x658] sm:$0xff]
    %v419 = vld [vmem:[#allocation6 + $0x660] sm:$0xff]
    %v420 = vld [vmem:[#allocation6 + $0x668] sm:$0xff]
    %v421 = vld [vmem:[#allocation6 + $0x670] sm:$0xff]
    %v422 = vld [vmem:[#allocation6 + $0x678] sm:$0xff]
    %v423 = vld [vmem:[#allocation6 + $0x680] sm:$0xff]
    %v424 = vld [vmem:[#allocation6 + $0x688] sm:$0xff]
    %v425 = vld [vmem:[#allocation6 + $0x690] sm:$0xff]
    %v426 = vld [vmem:[#allocation6 + $0x698] sm:$0xff]
    %v427 = vld [vmem:[#allocation6 + $0x6a0] sm:$0xff]
    %v428 = vld [vmem:[#allocation6 + $0x6a8] sm:$0xff]
    %v429 = vld [vmem:[#allocation6 + $0x6b0] sm:$0xff]
    %v430 = vld [vmem:[#allocation6 + $0x6b8] sm:$0xff]
    %v431 = vld [vmem:[#allocation6 + $0x6c0] sm:$0xff]
    %v432 = vld [vmem:[#allocation6 + $0x6c8] sm:$0xff]
    %v433 = vld [vmem:[#allocation6 + $0x6d0] sm:$0xff]
    %v434 = vld [vmem:[#allocation6 + $0x6d8] sm:$0xff]
    %v435 = vld [vmem:[#allocation6 + $0x6e0] sm:$0xff]
    %v436 = vld [vmem:[#allocation6 + $0x6e8] sm:$0xff]
    %v437 = vld [vmem:[#allocation6 + $0x6f0] sm:$0xff]
    %v438 = vld [vmem:[#allocation6 + $0x6f8] sm:$0xff]
    %v439 = vld [vmem:[#allocation6 + $0x700] sm:$0xff]
    %v440 = vld [vmem:[#allocation6 + $0x708] sm:$0xff]
    %v441 = vld [vmem:[#allocation6 + $0x710] sm:$0xff]
    %v442 = vld [vmem:[#allocation6 + $0x718] sm:$0xff]
    %v443 = vld [vmem:[#allocation6 + $0x720] sm:$0xff]
    %v444 = vld [vmem:[#allocation6 + $0x728] sm:$0xff]
    %v445 = vld [vmem:[#allocation6 + $0x730] sm:$0xff]
    %v446 = vld [vmem:[#allocation6 + $0x738] sm:$0xff]
    %v447 = vld [vmem:[#allocation6 + $0x740] sm:$0xff]
    %v448 = vld [vmem:[#allocation6 + $0x748] sm:$0xff]
    %v449 = vld [vmem:[#allocation6 + $0x750] sm:$0xff]
    %v450 = vld [vmem:[#allocation6 + $0x758] sm:$0xff]
    %v451 = vld [vmem:[#allocation6 + $0x760] sm:$0xff]
    %v452 = vld [vmem:[#allocation6 + $0x768] sm:$0xff]
    %v453 = vld [vmem:[#allocation6 + $0x770] sm:$0xff]
    %v454 = vld [vmem:[#allocation6 + $0x778] sm:$0xff]
    %v455 = vld [vmem:[#allocation6 + $0x780] sm:$0xff]
    %v456 = vld [vmem:[#allocation6 + $0x788] sm:$0xff]
    %v457 = vld [vmem:[#allocation6 + $0x790] sm:$0xff]
    %v458 = vld [vmem:[#allocation6 + $0x798] sm:$0xff]
    %v459 = vld [vmem:[#allocation6 + $0x7a0] sm:$0xff]
    %v460 = vld [vmem:[#allocation6 + $0x7a8] sm:$0xff]
    %v461 = vld [vmem:[#allocation6 + $0x7b0] sm:$0xff]
    %v462 = vld [vmem:[#allocation6 + $0x7b8] sm:$0xff]
    %v463 = vld [vmem:[#allocation6 + $0x7c0] sm:$0xff]
    %v464 = vld [vmem:[#allocation6 + $0x7c8] sm:$0xff]
    %v465 = vld [vmem:[#allocation6 + $0x7d0] sm:$0xff]
    %v466 = vld [vmem:[#allocation6 + $0x7d8] sm:$0xff]
    %vm467 = vcmask 982016
    %v469 = vsel %vm467, %v154, 0
    %v472 = vsel %vm467, %v158, 0
    %v475 = vsel %vm467, %v162, 0
    %v478 = vsel %vm467, %v166, 0
    %v481 = vsel %vm467, %v170, 0
    %v484 = vsel %vm467, %v174, 0
    %v487 = vsel %vm467, %v178, 0
    %v490 = vsel %vm467, %v182, 0
    %v493 = vsel %vm467, %v186, 0
    %v496 = vsel %vm467, %v190, 0
    %v499 = vsel %vm467, %v194, 0
    %v502 = vsel %vm467, %v198, 0
    %v505 = vsel %vm467, %v202, 0
    %v508 = vsel %vm467, %v206, 0
    %v511 = vsel %vm467, %v210, 0
    %v514 = vsel %vm467, %v214, 0
    %516 = vmatprep.subr.mxu0 %v216
    %517 = vmatpush1.msra.mxu0 %v215
    %518 = vmatprep.subr.mxu0 %v220
    %519 = vmatpush1.msra.mxu0 %v219
    %520 = vmatprep.subr.mxu0 %v224
    %521 = vmatpush1.msra.mxu0 %v223
    %522 = vmatprep.subr.mxu0 %v228
    %523 = vmatpush1.msra.mxu0 %v227
    %524 = vmatprep.subr.mxu0 %v232
    %525 = vmatpush1.msra.mxu0 %v231
    %526 = vmatprep.subr.mxu0 %v236
    %527 = vmatpush1.msra.mxu0 %v235
    %528 = vmatprep.subr.mxu0 %v240
    %529 = vmatpush1.msra.mxu0 %v239
    %530 = vmatprep.subr.mxu0 %v244
    %531 = vmatpush1.msra.mxu0 %v243
    %532 = vmatprep.subr.mxu0 %v248
    %533 = vmatpush1.msra.mxu0 %v247
    %534 = vmatprep.subr.mxu0 %v252
    %535 = vmatpush1.msra.mxu0 %v251
    %536 = vmatprep.subr.mxu0 %v256
    %537 = vmatpush1.msra.mxu0 %v255
    %538 = vmatprep.subr.mxu0 %v260
    %539 = vmatpush1.msra.mxu0 %v259
    %540 = vmatprep.subr.mxu0 %v264
    %541 = vmatpush1.msra.mxu0 %v263
    %542 = vmatprep.subr.mxu0 %v268
    %543 = vmatpush1.msra.mxu0 %v267
    %544 = vmatprep.subr.mxu0 %v272
    %545 = vmatpush1.msra.mxu0 %v271
    %546 = vmatprep.subr.mxu0 %v276
    %547 = vmatpush1.msra.mxu0 %v275
    %548 = vmatprep.subr.mxu0 %v280
    %549 = vmatpush1.msra.mxu0 %v279
    %550 = vmatprep.subr.mxu0 %v284
    %551 = vmatpush1.msra.mxu0 %v283
    %552 = vmatprep.subr.mxu0 %v288
    %553 = vmatpush1.msra.mxu0 %v287
    %554 = vmatprep.subr.mxu0 %v292
    %555 = vmatpush1.msra.mxu0 %v291
    %556 = vmatprep.subr.mxu0 %v296
    %557 = vmatpush1.msra.mxu0 %v295
    %558 = vmatprep.subr.mxu0 %v300
    %559 = vmatpush1.msra.mxu0 %v299
    %560 = vmatprep.subr.mxu0 %v304
    %561 = vmatpush1.msra.mxu0 %v303
    %562 = vmatprep.subr.mxu0 %v308
    %563 = vmatpush1.msra.mxu0 %v307
    %564 = vmatprep.subr.mxu0 %v312
    %565 = vmatpush1.msra.mxu0 %v311
    %566 = vmatprep.subr.mxu0 %v316
    %567 = vmatpush1.msra.mxu0 %v315
    %568 = vmatprep.subr.mxu0 %v320
    %569 = vmatpush1.msra.mxu0 %v319
    %570 = vmatprep.subr.mxu0 %v324
    %571 = vmatpush1.msra.mxu0 %v323
    %572 = vmatprep.subr.mxu0 %v328
    %573 = vmatpush1.msra.mxu0 %v327
    %574 = vmatprep.subr.mxu0 %v332
    %575 = vmatpush1.msra.mxu0 %v331
    %576 = vmatprep.subr.mxu0 %v336
    %577 = vmatpush1.msra.mxu0 %v335
    %578 = vmatprep.subr.mxu0 %v340
    %579 = vmatpush1.msra.mxu0 %v339
    %580 = vmatprep.mubr.f32.mxu0 %v152
    %581 = vmatmul.mubr.f32.gmra.mrb[0].mxu0 %v151
    %v582 = vpop.f32.mrb[0].mxu0
    %v583 = vadd.f32 0.0, %v582
    %v584 = vpop.f32.mrb[0].mxu0
    %v585 = vadd.f32 0.0, %v584
    %586 = vmatprep.mubr.f32.mxu0 %v156
    %587 = vmatmul.mubr.f32.gmra.mrb[0].mxu0 %v155
    %v588 = vpop.f32.mrb[0].mxu0
    %v589 = vadd.f32 0.0, %v588
    %v590 = vpop.f32.mrb[0].mxu0
    %v591 = vadd.f32 0.0, %v590
    %592 = vmatprep.mubr.f32.mxu0 %v160
    %593 = vmatmul.mubr.f32.gmra.mrb[0].mxu0 %v159
    %v594 = vpop.f32.mrb[0].mxu0
    %v595 = vadd.f32 0.0, %v594
    %v596 = vpop.f32.mrb[0].mxu0
    %v597 = vadd.f32 0.0, %v596
    %598 = vmatprep.mubr.f32.mxu0 %v164
    %599 = vmatmul.mubr.f32.gmra.mrb[0].mxu0 %v163
    %v600 = vpop.f32.mrb[0].mxu0
    %v601 = vadd.f32 0.0, %v600
    %v602 = vpop.f32.mrb[0].mxu0
    %v603 = vadd.f32 0.0, %v602
    %604 = vmatprep.mubr.f32.mxu0 %v168
    %605 = vmatmul.mubr.f32.gmra.mrb[0].mxu0 %v167
    %v606 = vpop.f32.mrb[0].mxu0
    %v607 = vadd.f32 0.0, %v606
    %v608 = vpop.f32.mrb[0].mxu0
    %v609 = vadd.f32 0.0, %v608
    %610 = vmatprep.mubr.f32.mxu0 %v172
    %611 = vmatmul.mubr.f32.gmra.mrb[0].mxu0 %v171
    %v612 = vpop.f32.mrb[0].mxu0
    %v613 = vadd.f32 0.0, %v612
    %v614 = vpop.f32.mrb[0].mxu0
    %v615 = vadd.f32 0.0, %v614
    %616 = vmatprep.mubr.f32.mxu0 %v176
    %617 = vmatmul.mubr.f32.gmra.mrb[0].mxu0 %v175
    %v618 = vpop.f32.mrb[0].mxu0
    %v619 = vadd.f32 0.0, %v618
    %v620 = vpop.f32.mrb[0].mxu0
    %v621 = vadd.f32 0.0, %v620
    %622 = vmatprep.mubr.f32.mxu0 %v180
    %623 = vmatmul.mubr.f32.gmra.mrb[0].mxu0 %v179
    %v624 = vpop.f32.mrb[0].mxu0
    %v625 = vadd.f32 0.0, %v624
    %v626 = vpop.f32.mrb[0].mxu0
    %v627 = vadd.f32 0.0, %v626
    %628 = vmatprep.mubr.f32.mxu0 %v184
    %629 = vmatmul.mubr.f32.gmra.mrb[0].mxu0 %v183
    %v630 = vpop.f32.mrb[0].mxu0
    %v631 = vadd.f32 0.0, %v630
    %v632 = vpop.f32.mrb[0].mxu0
    %v633 = vadd.f32 0.0, %v632
    %634 = vmatprep.mubr.f32.mxu0 %v188
    %635 = vmatmul.mubr.f32.gmra.mrb[0].mxu0 %v187
    %v636 = vpop.f32.mrb[0].mxu0
    %v637 = vadd.f32 0.0, %v636
    %v638 = vpop.f32.mrb[0].mxu0
    %v639 = vadd.f32 0.0, %v638
    %640 = vmatprep.mubr.f32.mxu0 %v192
    %641 = vmatmul.mubr.f32.gmra.mrb[0].mxu0 %v191
    %v642 = vpop.f32.mrb[0].mxu0
    %v643 = vadd.f32 0.0, %v642
    %v644 = vpop.f32.mrb[0].mxu0
    %v645 = vadd.f32 0.0, %v644
    %646 = vmatprep.mubr.f32.mxu0 %v196
    %647 = vmatmul.mubr.f32.gmra.mrb[0].mxu0 %v195
    %v648 = vpop.f32.mrb[0].mxu0
    %v649 = vadd.f32 0.0, %v648
    %v650 = vpop.f32.mrb[0].mxu0
    %v651 = vadd.f32 0.0, %v650
    %652 = vmatprep.mubr.f32.mxu0 %v200
    %653 = vmatmul.mubr.f32.gmra.mrb[0].mxu0 %v199
    %v654 = vpop.f32.mrb[0].mxu0
    %v655 = vadd.f32 0.0, %v654
    %v656 = vpop.f32.mrb[0].mxu0
    %v657 = vadd.f32 0.0, %v656
    %658 = vmatprep.mubr.f32.mxu0 %v204
    %659 = vmatmul.mubr.f32.gmra.mrb[0].mxu0 %v203
    %v660 = vpop.f32.mrb[0].mxu0
    %v661 = vadd.f32 0.0, %v660
    %v662 = vpop.f32.mrb[0].mxu0
    %v663 = vadd.f32 0.0, %v662
    %664 = vmatprep.mubr.f32.mxu0 %v208
    %665 = vmatmul.mubr.f32.gmra.mrb[0].mxu0 %v207
    %v666 = vpop.f32.mrb[0].mxu0
    %v667 = vadd.f32 0.0, %v666
    %v668 = vpop.f32.mrb[0].mxu0
    %v669 = vadd.f32 0.0, %v668
    %670 = vmatprep.mubr.f32.mxu0 %v212
    %671 = vmatmul.mubr.f32.gmra.mrb[0].mxu0 %v211
    %v672 = vpop.f32.mrb[0].mxu0
    %v673 = vadd.f32 0.0, %v672
    %v674 = vpop.f32.mrb[0].mxu0
    %v675 = vadd.f32 0.0, %v674
    %676 = vdwg.mxu0
    %677 = vmatprep.subr.mxu0 %v344
    %678 = vmatpush1.msra.mxu0 %v343
    %679 = vmatprep.subr.mxu0 %v348
    %680 = vmatpush1.msra.mxu0 %v347
    %681 = vmatprep.subr.mxu0 %v352
    %682 = vmatpush1.msra.mxu0 %v351
    %683 = vmatprep.subr.mxu0 %v356
    %684 = vmatpush1.msra.mxu0 %v355
    %685 = vmatprep.subr.mxu0 %v360
    %686 = vmatpush1.msra.mxu0 %v359
    %687 = vmatprep.subr.mxu0 %v364
    %688 = vmatpush1.msra.mxu0 %v363
    %689 = vmatprep.subr.mxu0 %v368
    %690 = vmatpush1.msra.mxu0 %v367
    %691 = vmatprep.subr.mxu0 %v372
    %692 = vmatpush1.msra.mxu0 %v371
    %693 = vmatprep.subr.mxu0 %v376
    %694 = vmatpush1.msra.mxu0 %v375
    %695 = vmatprep.subr.mxu0 %v380
    %696 = vmatpush1.msra.mxu0 %v379
    %697 = vmatprep.subr.mxu0 %v384
    %698 = vmatpush1.msra.mxu0 %v383
    %699 = vmatprep.subr.mxu0 %v388
    %700 = vmatpush1.msra.mxu0 %v387
    %701 = vmatprep.subr.mxu0 %v392
    %702 = vmatpush1.msra.mxu0 %v391
    %703 = vmatprep.subr.mxu0 %v396
    %704 = vmatpush1.msra.mxu0 %v395
    %705 = vmatprep.subr.mxu0 %v400
    %706 = vmatpush1.msra.mxu0 %v399
    %707 = vmatprep.subr.mxu0 %v404
    %708 = vmatpush1.msra.mxu0 %v403
    %709 = vmatprep.subr.mxu0 %v408
    %710 = vmatpush1.msra.mxu0 %v407
    %711 = vmatprep.subr.mxu0 %v412
    %712 = vmatpush1.msra.mxu0 %v411
    %713 = vmatprep.subr.mxu0 %v416
    %714 = vmatpush1.msra.mxu0 %v415
    %715 = vmatprep.subr.mxu0 %v420
    %716 = vmatpush1.msra.mxu0 %v419
    %717 = vmatprep.subr.mxu0 %v424
    %718 = vmatpush1.msra.mxu0 %v423
    %719 = vmatprep.subr.mxu0 %v428
    %720 = vmatpush1.msra.mxu0 %v427
    %721 = vmatprep.subr.mxu0 %v432
    %722 = vmatpush1.msra.mxu0 %v431
    %723 = vmatprep.subr.mxu0 %v436
    %724 = vmatpush1.msra.mxu0 %v435
    %725 = vmatprep.subr.mxu0 %v440
    %726 = vmatpush1.msra.mxu0 %v439
    %727 = vmatprep.subr.mxu0 %v444
    %728 = vmatpush1.msra.mxu0 %v443
    %729 = vmatprep.subr.mxu0 %v448
    %730 = vmatpush1.msra.mxu0 %v447
    %731 = vmatprep.subr.mxu0 %v452
    %732 = vmatpush1.msra.mxu0 %v451
    %733 = vmatprep.subr.mxu0 %v456
    %734 = vmatpush1.msra.mxu0 %v455
    %735 = vmatprep.subr.mxu0 %v460
    %736 = vmatpush1.msra.mxu0 %v459
    %737 = vmatprep.subr.mxu0 %v464
    %738 = vmatpush1.msra.mxu0 %v463
    %739 = vmatprep.subr.mxu0 0.0
    %740 = vmatpush1.msra.mxu0 0.0
    %741 = vmatprep.mubr.f32.mxu0 %v469
    %742 = vmatmul.mubr.f32.gmra.mrb[0].mxu0 %v153
    %v743 = vpop.f32.mrb[0].mxu0
    %v744 = vadd.f32 %v583, %v743
    %v745 = vpop.f32.mrb[0].mxu0
    %v746 = vadd.f32 %v585, %v745
    %747 = vmatprep.mubr.f32.mxu0 %v472
    %748 = vmatmul.mubr.f32.gmra.mrb[0].mxu0 %v157
    %v749 = vpop.f32.mrb[0].mxu0
    %v750 = vadd.f32 %v589, %v749
    %v751 = vpop.f32.mrb[0].mxu0
    %v752 = vadd.f32 %v591, %v751
    %753 = vmatprep.mubr.f32.mxu0 %v475
    %754 = vmatmul.mubr.f32.gmra.mrb[0].mxu0 %v161
    %v755 = vpop.f32.mrb[0].mxu0
    %v756 = vadd.f32 %v595, %v755
    %v757 = vpop.f32.mrb[0].mxu0
    %v758 = vadd.f32 %v597, %v757
    %759 = vmatprep.mubr.f32.mxu0 %v478
    %760 = vmatmul.mubr.f32.gmra.mrb[0].mxu0 %v165
    %v761 = vpop.f32.mrb[0].mxu0
    %v762 = vadd.f32 %v601, %v761
    %v763 = vpop.f32.mrb[0].mxu0
    %v764 = vadd.f32 %v603, %v763
    %765 = vmatprep.mubr.f32.mxu0 %v481
    %766 = vmatmul.mubr.f32.gmra.mrb[0].mxu0 %v169
    %v767 = vpop.f32.mrb[0].mxu0
    %v768 = vadd.f32 %v607, %v767
    %v769 = vpop.f32.mrb[0].mxu0
    %v770 = vadd.f32 %v609, %v769
    %771 = vmatprep.mubr.f32.mxu0 %v484
    %772 = vmatmul.mubr.f32.gmra.mrb[0].mxu0 %v173
    %v773 = vpop.f32.mrb[0].mxu0
    %v774 = vadd.f32 %v613, %v773
    %v775 = vpop.f32.mrb[0].mxu0
    %v776 = vadd.f32 %v615, %v775
    %777 = vmatprep.mubr.f32.mxu0 %v487
    %778 = vmatmul.mubr.f32.gmra.mrb[0].mxu0 %v177
    %v779 = vpop.f32.mrb[0].mxu0
    %v780 = vadd.f32 %v619, %v779
    %v781 = vpop.f32.mrb[0].mxu0
    %v782 = vadd.f32 %v621, %v781
    %783 = vmatprep.mubr.f32.mxu0 %v490
    %784 = vmatmul.mubr.f32.gmra.mrb[0].mxu0 %v181
    %v785 = vpop.f32.mrb[0].mxu0
    %v786 = vadd.f32 %v625, %v785
    %v787 = vpop.f32.mrb[0].mxu0
    %v788 = vadd.f32 %v627, %v787
    %789 = vmatprep.mubr.f32.mxu0 %v493
    %790 = vmatmul.mubr.f32.gmra.mrb[0].mxu0 %v185
    %v791 = vpop.f32.mrb[0].mxu0
    %v792 = vadd.f32 %v631, %v791
    %v793 = vpop.f32.mrb[0].mxu0
    %v794 = vadd.f32 %v633, %v793
    %795 = vmatprep.mubr.f32.mxu0 %v496
    %796 = vmatmul.mubr.f32.gmra.mrb[0].mxu0 %v189
    %v797 = vpop.f32.mrb[0].mxu0
    %v798 = vadd.f32 %v637, %v797
    %v799 = vpop.f32.mrb[0].mxu0
    %v800 = vadd.f32 %v639, %v799
    %801 = vmatprep.mubr.f32.mxu0 %v499
    %802 = vmatmul.mubr.f32.gmra.mrb[0].mxu0 %v193
    %v803 = vpop.f32.mrb[0].mxu0
    %v804 = vadd.f32 %v643, %v803
    %v805 = vpop.f32.mrb[0].mxu0
    %v806 = vadd.f32 %v645, %v805
    %807 = vmatprep.mubr.f32.mxu0 %v502
    %808 = vmatmul.mubr.f32.gmra.mrb[0].mxu0 %v197
    %v809 = vpop.f32.mrb[0].mxu0
    %v810 = vadd.f32 %v649, %v809
    %v811 = vpop.f32.mrb[0].mxu0
    %v812 = vadd.f32 %v651, %v811
    %813 = vmatprep.mubr.f32.mxu0 %v505
    %814 = vmatmul.mubr.f32.gmra.mrb[0].mxu0 %v201
    %v815 = vpop.f32.mrb[0].mxu0
    %v816 = vadd.f32 %v655, %v815
    %v817 = vpop.f32.mrb[0].mxu0
    %v818 = vadd.f32 %v657, %v817
    %819 = vmatprep.mubr.f32.mxu0 %v508
    %820 = vmatmul.mubr.f32.gmra.mrb[0].mxu0 %v205
    %v821 = vpop.f32.mrb[0].mxu0
    %v822 = vadd.f32 %v661, %v821
    %v823 = vpop.f32.mrb[0].mxu0
    %v824 = vadd.f32 %v663, %v823
    %825 = vmatprep.mubr.f32.mxu0 %v511
    %826 = vmatmul.mubr.f32.gmra.mrb[0].mxu0 %v209
    %v827 = vpop.f32.mrb[0].mxu0
    %v828 = vadd.f32 %v667, %v827
    %v829 = vpop.f32.mrb[0].mxu0
    %v830 = vadd.f32 %v669, %v829
    %831 = vmatprep.mubr.f32.mxu0 %v514
    %832 = vmatmul.mubr.f32.gmra.mrb[0].mxu0 %v213
    %v833 = vpop.f32.mrb[0].mxu0
    %v834 = vadd.f32 %v673, %v833
    %v835 = vpop.f32.mrb[0].mxu0
    %v836 = vadd.f32 %v675, %v835
    %837 = vdwg.mxu0
    %838 = vmatprep.subr.mxu0 %v218
    %839 = vmatpush1.msra.mxu0 %v217
    %840 = vmatprep.subr.mxu0 %v222
    %841 = vmatpush1.msra.mxu0 %v221
    %842 = vmatprep.subr.mxu0 %v226
    %843 = vmatpush1.msra.mxu0 %v225
    %844 = vmatprep.subr.mxu0 %v230
    %845 = vmatpush1.msra.mxu0 %v229
    %846 = vmatprep.subr.mxu0 %v234
    %847 = vmatpush1.msra.mxu0 %v233
    %848 = vmatprep.subr.mxu0 %v238
    %849 = vmatpush1.msra.mxu0 %v237
    %850 = vmatprep.subr.mxu0 %v242
    %851 = vmatpush1.msra.mxu0 %v241
    %852 = vmatprep.subr.mxu0 %v246
    %853 = vmatpush1.msra.mxu0 %v245
    %854 = vmatprep.subr.mxu0 %v250
    %855 = vmatpush1.msra.mxu0 %v249
    %856 = vmatprep.subr.mxu0 %v254
    %857 = vmatpush1.msra.mxu0 %v253
    %858 = vmatprep.subr.mxu0 %v258
    %859 = vmatpush1.msra.mxu0 %v257
    %860 = vmatprep.subr.mxu0 %v262
    %861 = vmatpush1.msra.mxu0 %v261
    %862 = vmatprep.subr.mxu0 %v266
    %863 = vmatpush1.msra.mxu0 %v265
    %864 = vmatprep.subr.mxu0 %v270
    %865 = vmatpush1.msra.mxu0 %v269
    %866 = vmatprep.subr.mxu0 %v274
    %867 = vmatpush1.msra.mxu0 %v273
    %868 = vmatprep.subr.mxu0 %v278
    %869 = vmatpush1.msra.mxu0 %v277
    %870 = vmatprep.subr.mxu0 %v282
    %871 = vmatpush1.msra.mxu0 %v281
    %872 = vmatprep.subr.mxu0 %v286
    %873 = vmatpush1.msra.mxu0 %v285
    %874 = vmatprep.subr.mxu0 %v290
    %875 = vmatpush1.msra.mxu0 %v289
    %876 = vmatprep.subr.mxu0 %v294
    %877 = vmatpush1.msra.mxu0 %v293
    %878 = vmatprep.subr.mxu0 %v298
    %879 = vmatpush1.msra.mxu0 %v297
    %880 = vmatprep.subr.mxu0 %v302
    %881 = vmatpush1.msra.mxu0 %v301
    %882 = vmatprep.subr.mxu0 %v306
    %883 = vmatpush1.msra.mxu0 %v305
    %884 = vmatprep.subr.mxu0 %v310
    %885 = vmatpush1.msra.mxu0 %v309
    %886 = vmatprep.subr.mxu0 %v314
    %887 = vmatpush1.msra.mxu0 %v313
    %888 = vmatprep.subr.mxu0 %v318
    %889 = vmatpush1.msra.mxu0 %v317
    %890 = vmatprep.subr.mxu0 %v322
    %891 = vmatpush1.msra.mxu0 %v321
    %892 = vmatprep.subr.mxu0 %v326
    %893 = vmatpush1.msra.mxu0 %v325
    %894 = vmatprep.subr.mxu0 %v330
    %895 = vmatpush1.msra.mxu0 %v329
    %896 = vmatprep.subr.mxu0 %v334
    %897 = vmatpush1.msra.mxu0 %v333
    %898 = vmatprep.subr.mxu0 %v338
    %899 = vmatpush1.msra.mxu0 %v337
    %900 = vmatprep.subr.mxu0 %v342
    %901 = vmatpush1.msra.mxu0 %v341
    %902 = vmatprep.mubr.f32.mxu0 %v152
    %903 = vmatmul.mubr.f32.gmra.mrb[0].mxu0 %v151
    %v904 = vpop.f32.mrb[0].mxu0
    %v905 = vadd.f32 0.0, %v904
    %v906 = vpop.f32.mrb[0].mxu0
    %v907 = vadd.f32 0.0, %v906
    %908 = vmatprep.mubr.f32.mxu0 %v156
    %909 = vmatmul.mubr.f32.gmra.mrb[0].mxu0 %v155
    %v910 = vpop.f32.mrb[0].mxu0
    %v911 = vadd.f32 0.0, %v910
    %v912 = vpop.f32.mrb[0].mxu0
    %v913 = vadd.f32 0.0, %v912
    %914 = vmatprep.mubr.f32.mxu0 %v160
    %915 = vmatmul.mubr.f32.gmra.mrb[0].mxu0 %v159
    %v916 = vpop.f32.mrb[0].mxu0
    %v917 = vadd.f32 0.0, %v916
    %v918 = vpop.f32.mrb[0].mxu0
    %v919 = vadd.f32 0.0, %v918
    %920 = vmatprep.mubr.f32.mxu0 %v164
    %921 = vmatmul.mubr.f32.gmra.mrb[0].mxu0 %v163
    %v922 = vpop.f32.mrb[0].mxu0
    %v923 = vadd.f32 0.0, %v922
    %v924 = vpop.f32.mrb[0].mxu0
    %v925 = vadd.f32 0.0, %v924
    %926 = vmatprep.mubr.f32.mxu0 %v168
    %927 = vmatmul.mubr.f32.gmra.mrb[0].mxu0 %v167
    %v928 = vpop.f32.mrb[0].mxu0
    %v929 = vadd.f32 0.0, %v928
    %v930 = vpop.f32.mrb[0].mxu0
    %v931 = vadd.f32 0.0, %v930
    %932 = vmatprep.mubr.f32.mxu0 %v172
    %933 = vmatmul.mubr.f32.gmra.mrb[0].mxu0 %v171
    %v934 = vpop.f32.mrb[0].mxu0
    %v935 = vadd.f32 0.0, %v934
    %v936 = vpop.f32.mrb[0].mxu0
    %v937 = vadd.f32 0.0, %v936
    %938 = vmatprep.mubr.f32.mxu0 %v176
    %939 = vmatmul.mubr.f32.gmra.mrb[0].mxu0 %v175
    %v940 = vpop.f32.mrb[0].mxu0
    %v941 = vadd.f32 0.0, %v940
    %v942 = vpop.f32.mrb[0].mxu0
    %v943 = vadd.f32 0.0, %v942
    %944 = vmatprep.mubr.f32.mxu0 %v180
    %945 = vmatmul.mubr.f32.gmra.mrb[0].mxu0 %v179
    %v946 = vpop.f32.mrb[0].mxu0
    %v947 = vadd.f32 0.0, %v946
    %v948 = vpop.f32.mrb[0].mxu0
    %v949 = vadd.f32 0.0, %v948
    %950 = vmatprep.mubr.f32.mxu0 %v184
    %951 = vmatmul.mubr.f32.gmra.mrb[0].mxu0 %v183
    %v952 = vpop.f32.mrb[0].mxu0
    %v953 = vadd.f32 0.0, %v952
    %v954 = vpop.f32.mrb[0].mxu0
    %v955 = vadd.f32 0.0, %v954
    %956 = vmatprep.mubr.f32.mxu0 %v188
    %957 = vmatmul.mubr.f32.gmra.mrb[0].mxu0 %v187
    %v958 = vpop.f32.mrb[0].mxu0
    %v959 = vadd.f32 0.0, %v958
    %v960 = vpop.f32.mrb[0].mxu0
    %v961 = vadd.f32 0.0, %v960
    %962 = vmatprep.mubr.f32.mxu0 %v192
    %963 = vmatmul.mubr.f32.gmra.mrb[0].mxu0 %v191
    %v964 = vpop.f32.mrb[0].mxu0
    %v965 = vadd.f32 0.0, %v964
    %v966 = vpop.f32.mrb[0].mxu0
    %v967 = vadd.f32 0.0, %v966
    %968 = vmatprep.mubr.f32.mxu0 %v196
    %969 = vmatmul.mubr.f32.gmra.mrb[0].mxu0 %v195
    %v970 = vpop.f32.mrb[0].mxu0
    %v971 = vadd.f32 0.0, %v970
    %v972 = vpop.f32.mrb[0].mxu0
    %v973 = vadd.f32 0.0, %v972
    %974 = vmatprep.mubr.f32.mxu0 %v200
    %975 = vmatmul.mubr.f32.gmra.mrb[0].mxu0 %v199
    %v976 = vpop.f32.mrb[0].mxu0
    %v977 = vadd.f32 0.0, %v976
    %v978 = vpop.f32.mrb[0].mxu0
    %v979 = vadd.f32 0.0, %v978
    %980 = vmatprep.mubr.f32.mxu0 %v204
    %981 = vmatmul.mubr.f32.gmra.mrb[0].mxu0 %v203
    %v982 = vpop.f32.mrb[0].mxu0
    %v983 = vadd.f32 0.0, %v982
    %v984 = vpop.f32.mrb[0].mxu0
    %v985 = vadd.f32 0.0, %v984
    %986 = vmatprep.mubr.f32.mxu0 %v208
    %987 = vmatmul.mubr.f32.gmra.mrb[0].mxu0 %v207
    %v988 = vpop.f32.mrb[0].mxu0
    %v989 = vadd.f32 0.0, %v988
    %v990 = vpop.f32.mrb[0].mxu0
    %v991 = vadd.f32 0.0, %v990
    %992 = vmatprep.mubr.f32.mxu0 %v212
    %993 = vmatmul.mubr.f32.gmra.mrb[0].mxu0 %v211
    %v994 = vpop.f32.mrb[0].mxu0
    %v995 = vadd.f32 0.0, %v994
    %v996 = vpop.f32.mrb[0].mxu0
    %v997 = vadd.f32 0.0, %v996
    %998 = vdwg.mxu0
    %999 = vmatprep.subr.mxu0 %v346
    %1000 = vmatpush1.msra.mxu0 %v345
    %1001 = vmatprep.subr.mxu0 %v350
    %1002 = vmatpush1.msra.mxu0 %v349
    %1003 = vmatprep.subr.mxu0 %v354
    %1004 = vmatpush1.msra.mxu0 %v353
    %1005 = vmatprep.subr.mxu0 %v358
    %1006 = vmatpush1.msra.mxu0 %v357
    %1007 = vmatprep.subr.mxu0 %v362
    %1008 = vmatpush1.msra.mxu0 %v361
    %1009 = vmatprep.subr.mxu0 %v366
    %1010 = vmatpush1.msra.mxu0 %v365
    %1011 = vmatprep.subr.mxu0 %v370
    %1012 = vmatpush1.msra.mxu0 %v369
    %1013 = vmatprep.subr.mxu0 %v374
    %1014 = vmatpush1.msra.mxu0 %v373
    %1015 = vmatprep.subr.mxu0 %v378
    %1016 = vmatpush1.msra.mxu0 %v377
    %1017 = vmatprep.subr.mxu0 %v382
    %1018 = vmatpush1.msra.mxu0 %v381
    %1019 = vmatprep.subr.mxu0 %v386
    %1020 = vmatpush1.msra.mxu0 %v385
    %1021 = vmatprep.subr.mxu0 %v390
    %1022 = vmatpush1.msra.mxu0 %v389
    %1023 = vmatprep.subr.mxu0 %v394
    %1024 = vmatpush1.msra.mxu0 %v393
    %1025 = vmatprep.subr.mxu0 %v398
    %1026 = vmatpush1.msra.mxu0 %v397
    %1027 = vmatprep.subr.mxu0 %v402
    %1028 = vmatpush1.msra.mxu0 %v401
    %1029 = vmatprep.subr.mxu0 %v406
    %1030 = vmatpush1.msra.mxu0 %v405
    %1031 = vmatprep.subr.mxu0 %v410
    %1032 = vmatpush1.msra.mxu0 %v409
    %1033 = vmatprep.subr.mxu0 %v414
    %1034 = vmatpush1.msra.mxu0 %v413
    %1035 = vmatprep.subr.mxu0 %v418
    %1036 = vmatpush1.msra.mxu0 %v417
    %1037 = vmatprep.subr.mxu0 %v422
    %1038 = vmatpush1.msra.mxu0 %v421
    %1039 = vmatprep.subr.mxu0 %v426
    %1040 = vmatpush1.msra.mxu0 %v425
    %1041 = vmatprep.subr.mxu0 %v430
    %1042 = vmatpush1.msra.mxu0 %v429
    %1043 = vmatprep.subr.mxu0 %v434
    %1044 = vmatpush1.msra.mxu0 %v433
    %1045 = vmatprep.subr.mxu0 %v438
    %1046 = vmatpush1.msra.mxu0 %v437
    %1047 = vmatprep.subr.mxu0 %v442
    %1048 = vmatpush1.msra.mxu0 %v441
    %1049 = vmatprep.subr.mxu0 %v446
    %1050 = vmatpush1.msra.mxu0 %v445
    %1051 = vmatprep.subr.mxu0 %v450
    %1052 = vmatpush1.msra.mxu0 %v449
    %1053 = vmatprep.subr.mxu0 %v454
    %1054 = vmatpush1.msra.mxu0 %v453
    %1055 = vmatprep.subr.mxu0 %v458
    %1056 = vmatpush1.msra.mxu0 %v457
    %1057 = vmatprep.subr.mxu0 %v462
    %1058 = vmatpush1.msra.mxu0 %v461
    %1059 = vmatprep.subr.mxu0 %v466
    %1060 = vmatpush1.msra.mxu0 %v465
    %1061 = vmatprep.subr.mxu0 0.0
    %1062 = vmatpush1.msra.mxu0 0.0
    %1063 = vmatprep.mubr.f32.mxu0 %v469
    %1064 = vmatmul.mubr.f32.gmra.mrb[0].mxu0 %v153
    %v1065 = vpop.f32.mrb[0].mxu0
    %v1066 = vadd.f32 %v905, %v1065
    %v1067 = vpop.f32.mrb[0].mxu0
    %v1068 = vadd.f32 %v907, %v1067
    %1069 = vmatprep.mubr.f32.mxu0 %v472
    %1070 = vmatmul.mubr.f32.gmra.mrb[0].mxu0 %v157
    %v1071 = vpop.f32.mrb[0].mxu0
    %v1072 = vadd.f32 %v911, %v1071
    %v1073 = vpop.f32.mrb[0].mxu0
    %v1074 = vadd.f32 %v913, %v1073
    %1075 = vmatprep.mubr.f32.mxu0 %v475
    %1076 = vmatmul.mubr.f32.gmra.mrb[0].mxu0 %v161
    %v1077 = vpop.f32.mrb[0].mxu0
    %v1078 = vadd.f32 %v917, %v1077
    %v1079 = vpop.f32.mrb[0].mxu0
    %v1080 = vadd.f32 %v919, %v1079
    %1081 = vmatprep.mubr.f32.mxu0 %v478
    %1082 = vmatmul.mubr.f32.gmra.mrb[0].mxu0 %v165
    %v1083 = vpop.f32.mrb[0].mxu0
    %v1084 = vadd.f32 %v923, %v1083
    %v1085 = vpop.f32.mrb[0].mxu0
    %v1086 = vadd.f32 %v925, %v1085
    %1087 = vmatprep.mubr.f32.mxu0 %v481
    %1088 = vmatmul.mubr.f32.gmra.mrb[0].mxu0 %v169
    %v1089 = vpop.f32.mrb[0].mxu0
    %v1090 = vadd.f32 %v929, %v1089
    %v1091 = vpop.f32.mrb[0].mxu0
    %v1092 = vadd.f32 %v931, %v1091
    %1093 = vmatprep.mubr.f32.mxu0 %v484
    %1094 = vmatmul.mubr.f32.gmra.mrb[0].mxu0 %v173
    %v1095 = vpop.f32.mrb[0].mxu0
    %v1096 = vadd.f32 %v935, %v1095
    %v1097 = vpop.f32.mrb[0].mxu0
    %v1098 = vadd.f32 %v937, %v1097
    %1099 = vmatprep.mubr.f32.mxu0 %v487
    %1100 = vmatmul.mubr.f32.gmra.mrb[0].mxu0 %v177
    %v1101 = vpop.f32.mrb[0].mxu0
    %v1102 = vadd.f32 %v941, %v1101
    %v1103 = vpop.f32.mrb[0].mxu0
    %v1104 = vadd.f32 %v943, %v1103
    %1105 = vmatprep.mubr.f32.mxu0 %v490
    %1106 = vmatmul.mubr.f32.gmra.mrb[0].mxu0 %v181
    %v1107 = vpop.f32.mrb[0].mxu0
    %v1108 = vadd.f32 %v947, %v1107
    %v1109 = vpop.f32.mrb[0].mxu0
    %v1110 = vadd.f32 %v949, %v1109
    %1111 = vmatprep.mubr.f32.mxu0 %v493
    %1112 = vmatmul.mubr.f32.gmra.mrb[0].mxu0 %v185
    %v1113 = vpop.f32.mrb[0].mxu0
    %v1114 = vadd.f32 %v953, %v1113
    %v1115 = vpop.f32.mrb[0].mxu0
    %v1116 = vadd.f32 %v955, %v1115
    %1117 = vmatprep.mubr.f32.mxu0 %v496
    %1118 = vmatmul.mubr.f32.gmra.mrb[0].mxu0 %v189
    %v1119 = vpop.f32.mrb[0].mxu0
    %v1120 = vadd.f32 %v959, %v1119
    %v1121 = vpop.f32.mrb[0].mxu0
    %v1122 = vadd.f32 %v961, %v1121
    %1123 = vmatprep.mubr.f32.mxu0 %v499
    %1124 = vmatmul.mubr.f32.gmra.mrb[0].mxu0 %v193
    %v1125 = vpop.f32.mrb[0].mxu0
    %v1126 = vadd.f32 %v965, %v1125
    %v1127 = vpop.f32.mrb[0].mxu0
    %v1128 = vadd.f32 %v967, %v1127
    %1129 = vmatprep.mubr.f32.mxu0 %v502
    %1130 = vmatmul.mubr.f32.gmra.mrb[0].mxu0 %v197
    %v1131 = vpop.f32.mrb[0].mxu0
    %v1132 = vadd.f32 %v971, %v1131
    %v1133 = vpop.f32.mrb[0].mxu0
    %v1134 = vadd.f32 %v973, %v1133
    %1135 = vmatprep.mubr.f32.mxu0 %v505
    %1136 = vmatmul.mubr.f32.gmra.mrb[0].mxu0 %v201
    %v1137 = vpop.f32.mrb[0].mxu0
    %v1138 = vadd.f32 %v977, %v1137
    %v1139 = vpop.f32.mrb[0].mxu0
    %v1140 = vadd.f32 %v979, %v1139
    %1141 = vmatprep.mubr.f32.mxu0 %v508
    %1142 = vmatmul.mubr.f32.gmra.mrb[0].mxu0 %v205
    %v1143 = vpop.f32.mrb[0].mxu0
    %v1144 = vadd.f32 %v983, %v1143
    %v1145 = vpop.f32.mrb[0].mxu0
    %v1146 = vadd.f32 %v985, %v1145
    %1147 = vmatprep.mubr.f32.mxu0 %v511
    %1148 = vmatmul.mubr.f32.gmra.mrb[0].mxu0 %v209
    %v1149 = vpop.f32.mrb[0].mxu0
    %v1150 = vadd.f32 %v989, %v1149
    %v1151 = vpop.f32.mrb[0].mxu0
    %v1152 = vadd.f32 %v991, %v1151
    %1153 = vmatprep.mubr.f32.mxu0 %v514
    %1154 = vmatmul.mubr.f32.gmra.mrb[0].mxu0 %v213
    %v1155 = vpop.f32.mrb[0].mxu0
    %v1156 = vadd.f32 %v995, %v1155
    %v1157 = vpop.f32.mrb[0].mxu0
    %v1158 = vadd.f32 %v997, %v1157
    %1159 = vdwg.mxu0
    %v1160 = vmax.f32 %v744, %v746
    %v1161 = vmax.f32 %v750, %v752
    %v1162 = vmax.f32 %v756, %v758
    %v1163 = vmax.f32 %v762, %v764
    %v1164 = vmax.f32 %v768, %v770
    %v1165 = vmax.f32 %v774, %v776
    %v1166 = vmax.f32 %v780, %v782
    %v1167 = vmax.f32 %v786, %v788
    %v1168 = vmax.f32 %v792, %v794
    %v1169 = vmax.f32 %v798, %v800
    %v1170 = vmax.f32 %v804, %v806
    %v1171 = vmax.f32 %v810, %v812
    %v1172 = vmax.f32 %v816, %v818
    %v1173 = vmax.f32 %v822, %v824
    %v1174 = vmax.f32 %v828, %v830
    %v1175 = vmax.f32 %v834, %v836
    %v1176 = vmax.f32 %v1066, %v1068
    %v1177 = vmax.f32 %v1072, %v1074
    %v1178 = vmax.f32 %v1078, %v1080
    %v1179 = vmax.f32 %v1084, %v1086
    %v1180 = vmax.f32 %v1090, %v1092
    %v1181 = vmax.f32 %v1096, %v1098
    %v1182 = vmax.f32 %v1102, %v1104
    %v1183 = vmax.f32 %v1108, %v1110
    %v1184 = vmax.f32 %v1114, %v1116
    %v1185 = vmax.f32 %v1120, %v1122
    %v1186 = vmax.f32 %v1126, %v1128
    %v1187 = vmax.f32 %v1132, %v1134
    %v1188 = vmax.f32 %v1138, %v1140
    %v1189 = vmax.f32 %v1144, %v1146
    %v1190 = vmax.f32 %v1150, %v1152
    %v1191 = vmax.f32 %v1156, %v1158
    %v1192 = vmax.f32 %v1160, %v1176
    %v1193 = vmax.f32 %v1161, %v1177
    %v1194 = vmax.f32 %v1162, %v1178
    %v1195 = vmax.f32 %v1163, %v1179
    %v1196 = vmax.f32 %v1164, %v1180
    %v1197 = vmax.f32 %v1165, %v1181
    %v1198 = vmax.f32 %v1166, %v1182
    %v1199 = vmax.f32 %v1167, %v1183
    %v1200 = vmax.f32 %v1168, %v1184
    %v1201 = vmax.f32 %v1169, %v1185
    %v1202 = vmax.f32 %v1170, %v1186
    %v1203 = vmax.f32 %v1171, %v1187
    %v1204 = vmax.f32 %v1172, %v1188
    %v1205 = vmax.f32 %v1173, %v1189
    %v1206 = vmax.f32 %v1174, %v1190
    %v1207 = vmax.f32 %v1175, %v1191
    %v1208 = vld [vmem:[#allocation8] sm:$0x1]
    %v1210 = vlaneseq
    %v1211 = vshrl.u32 %v1210, 7
    %v1212 = vsub.s32 0, %v1211
    %v1213 = vrot.slane %v1208, %v1212
    %v1215 = vadd.f32 %v1192, %v1213
    %v1216 = vadd.f32 %v1193, %v1213
    %v1217 = vadd.f32 %v1194, %v1213
    %v1218 = vadd.f32 %v1195, %v1213
    %v1219 = vadd.f32 %v1196, %v1213
    %v1220 = vadd.f32 %v1197, %v1213
    %v1221 = vadd.f32 %v1198, %v1213
    %v1222 = vadd.f32 %v1199, %v1213
    %v1223 = vadd.f32 %v1200, %v1213
    %v1224 = vadd.f32 %v1201, %v1213
    %v1225 = vadd.f32 %v1202, %v1213
    %v1226 = vadd.f32 %v1203, %v1213
    %v1227 = vadd.f32 %v1204, %v1213
    %v1228 = vadd.f32 %v1205, %v1213
    %v1229 = vadd.f32 %v1206, %v1213
    %v1230 = vadd.f32 %v1207, %v1213
    %v1231 = vmax.f32 %v1215, 0.0
    %v1232 = vmax.f32 %v1216, 0.0
    %v1233 = vmax.f32 %v1217, 0.0
    %v1234 = vmax.f32 %v1218, 0.0
    %v1235 = vmax.f32 %v1219, 0.0
    %v1236 = vmax.f32 %v1220, 0.0
    %v1237 = vmax.f32 %v1221, 0.0
    %v1238 = vmax.f32 %v1222, 0.0
    %v1239 = vmax.f32 %v1223, 0.0
    %v1240 = vmax.f32 %v1224, 0.0
    %v1241 = vmax.f32 %v1225, 0.0
    %v1242 = vmax.f32 %v1226, 0.0
    %v1243 = vmax.f32 %v1227, 0.0
    %v1244 = vmax.f32 %v1228, 0.0
    %v1245 = vmax.f32 %v1229, 0.0
    %v1246 = vmax.f32 %v1230, 0.0
    %1247 = vst [vmem:[#allocation2] sm:$0xff] %v1231
    %1248 = vst [vmem:[#allocation2 + $0x8] sm:$0xff] %v1232
    %1249 = vst [vmem:[#allocation2 + $0x18] sm:$0xff] %v1233
    %1250 = vst [vmem:[#allocation2 + $0x20] sm:$0xff] %v1234
    %1251 = vst [vmem:[#allocation2 + $0x30] sm:$0xff] %v1235
    %1252 = vst [vmem:[#allocation2 + $0x38] sm:$0xff] %v1236
    %1253 = vst [vmem:[#allocation2 + $0x48] sm:$0xff] %v1237
    %1254 = vst [vmem:[#allocation2 + $0x50] sm:$0xff] %v1238
    %1255 = vst [vmem:[#allocation2 + $0x60] sm:$0xff] %v1239
    %1256 = vst [vmem:[#allocation2 + $0x68] sm:$0xff] %v1240
    %1257 = vst [vmem:[#allocation2 + $0x78] sm:$0xff] %v1241
    %1258 = vst [vmem:[#allocation2 + $0x80] sm:$0xff] %v1242
    %1259 = vst [vmem:[#allocation2 + $0x90] sm:$0xff] %v1243
    %1260 = vst [vmem:[#allocation2 + $0x98] sm:$0xff] %v1244
    %1261 = vst [vmem:[#allocation2 + $0xa8] sm:$0xff] %v1245
    %1262 = vst [vmem:[#allocation2 + $0xb0] sm:$0xff] %v1246
    %1263 = vst [vmem:[#allocation2 + $0x10] sm:$0xff] 0.0
    %1264 = vst [vmem:[#allocation2 + $0x28] sm:$0xff] 0.0
    %1265 = vst [vmem:[#allocation2 + $0x40] sm:$0xff] 0.0
    %1266 = vst [vmem:[#allocation2 + $0x58] sm:$0xff] 0.0
    %1267 = vst [vmem:[#allocation2 + $0x70] sm:$0xff] 0.0
    %1268 = vst [vmem:[#allocation2 + $0x88] sm:$0xff] 0.0
    %1269 = vst [vmem:[#allocation2 + $0xa0] sm:$0xff] 0.0
    %1270 = vst [vmem:[#allocation2 + $0xb8] sm:$0xff] 0.0
    %v1271 = vld [vmem:[#allocation2] ss:$2 sm:$0xff]
    %s1272 = scalar_lea.vmem [#allocation2], 24
    %v1273 = vld [vmem:[%s1272] ss:$2 sm:$0xff]
    %s1274 = scalar_lea.vmem [#allocation2], 48
    %v1275 = vld [vmem:[%s1274] ss:$2 sm:$0xff]
    %s1276 = scalar_lea.vmem [#allocation2], 72
    %v1277 = vld [vmem:[%s1276] ss:$2 sm:$0xff]
    %s1278 = scalar_lea.vmem [#allocation2], 96
    %v1279 = vld [vmem:[%s1278] ss:$2 sm:$0xff]
    %s1280 = scalar_lea.vmem [#allocation2], 120
    %v1281 = vld [vmem:[%s1280] ss:$2 sm:$0xff]
    %s1282 = scalar_lea.vmem [#allocation2], 144
    %v1283 = vld [vmem:[%s1282] ss:$2 sm:$0xff]
    %s1284 = scalar_lea.vmem [#allocation2], 168
    %v1285 = vld [vmem:[%s1284] ss:$2 sm:$0xff]
    %s1286 = scalar_lea.vmem [#allocation2], 1
    %v1287 = vld [vmem:[%s1286] ss:$2 sm:$0xff]
    %s1288 = scalar_lea.vmem [#allocation2], 25
    %v1289 = vld [vmem:[%s1288] ss:$2 sm:$0xff]
    %s1290 = scalar_lea.vmem [#allocation2], 49
    %v1291 = vld [vmem:[%s1290] ss:$2 sm:$0xff]
    %s1292 = scalar_lea.vmem [#allocation2], 73
    %v1293 = vld [vmem:[%s1292] ss:$2 sm:$0xff]
    %s1294 = scalar_lea.vmem [#allocation2], 97
    %v1295 = vld [vmem:[%s1294] ss:$2 sm:$0xff]
    %s1296 = scalar_lea.vmem [#allocation2], 121
    %v1297 = vld [vmem:[%s1296] ss:$2 sm:$0xff]
    %s1298 = scalar_lea.vmem [#allocation2], 145
    %v1299 = vld [vmem:[%s1298] ss:$2 sm:$0xff]
    %s1300 = scalar_lea.vmem [#allocation2], 169
    %v1301 = vld [vmem:[%s1300] ss:$2 sm:$0xff]
    %s1302 = scalar_lea.vmem [#allocation2], 2
    %v1303 = vld [vmem:[%s1302] ss:$2 sm:$0xff]
    %s1304 = scalar_lea.vmem [#allocation2], 26
    %v1305 = vld [vmem:[%s1304] ss:$2 sm:$0xff]
    %s1306 = scalar_lea.vmem [#allocation2], 50
    %v1307 = vld [vmem:[%s1306] ss:$2 sm:$0xff]
    %s1308 = scalar_lea.vmem [#allocation2], 74
    %v1309 = vld [vmem:[%s1308] ss:$2 sm:$0xff]
    %s1310 = scalar_lea.vmem [#allocation2], 98
    %v1311 = vld [vmem:[%s1310] ss:$2 sm:$0xff]
    %s1312 = scalar_lea.vmem [#allocation2], 122
    %v1313 = vld [vmem:[%s1312] ss:$2 sm:$0xff]
    %s1314 = scalar_lea.vmem [#allocation2], 146
    %v1315 = vld [vmem:[%s1314] ss:$2 sm:$0xff]
    %s1316 = scalar_lea.vmem [#allocation2], 170
    %v1317 = vld [vmem:[%s1316] ss:$2 sm:$0xff]
    %s1318 = scalar_lea.vmem [#allocation2], 3
    %v1319 = vld [vmem:[%s1318] ss:$2 sm:$0xff]
    %s1320 = scalar_lea.vmem [#allocation2], 27
    %v1321 = vld [vmem:[%s1320] ss:$2 sm:$0xff]
    %s1322 = scalar_lea.vmem [#allocation2], 51
    %v1323 = vld [vmem:[%s1322] ss:$2 sm:$0xff]
    %s1324 = scalar_lea.vmem [#allocation2], 75
    %v1325 = vld [vmem:[%s1324] ss:$2 sm:$0xff]
    %s1326 = scalar_lea.vmem [#allocation2], 99
    %v1327 = vld [vmem:[%s1326] ss:$2 sm:$0xff]
    %s1328 = scalar_lea.vmem [#allocation2], 123
    %v1329 = vld [vmem:[%s1328] ss:$2 sm:$0xff]
    %s1330 = scalar_lea.vmem [#allocation2], 147
    %v1331 = vld [vmem:[%s1330] ss:$2 sm:$0xff]
    %s1332 = scalar_lea.vmem [#allocation2], 171
    %v1333 = vld [vmem:[%s1332] ss:$2 sm:$0xff]
    %s1334 = scalar_lea.vmem [#allocation2], 4
    %v1335 = vld [vmem:[%s1334] ss:$2 sm:$0xff]
    %s1336 = scalar_lea.vmem [#allocation2], 28
    %v1337 = vld [vmem:[%s1336] ss:$2 sm:$0xff]
    %s1338 = scalar_lea.vmem [#allocation2], 52
    %v1339 = vld [vmem:[%s1338] ss:$2 sm:$0xff]
    %s1340 = scalar_lea.vmem [#allocation2], 76
    %v1341 = vld [vmem:[%s1340] ss:$2 sm:$0xff]
    %s1342 = scalar_lea.vmem [#allocation2], 100
    %v1343 = vld [vmem:[%s1342] ss:$2 sm:$0xff]
    %s1344 = scalar_lea.vmem [#allocation2], 124
    %v1345 = vld [vmem:[%s1344] ss:$2 sm:$0xff]
    %s1346 = scalar_lea.vmem [#allocation2], 148
    %v1347 = vld [vmem:[%s1346] ss:$2 sm:$0xff]
    %s1348 = scalar_lea.vmem [#allocation2], 172
    %v1349 = vld [vmem:[%s1348] ss:$2 sm:$0xff]
    %s1350 = scalar_lea.vmem [#allocation2], 5
    %v1351 = vld [vmem:[%s1350] ss:$2 sm:$0xff]
    %s1352 = scalar_lea.vmem [#allocation2], 29
    %v1353 = vld [vmem:[%s1352] ss:$2 sm:$0xff]
    %s1354 = scalar_lea.vmem [#allocation2], 53
    %v1355 = vld [vmem:[%s1354] ss:$2 sm:$0xff]
    %s1356 = scalar_lea.vmem [#allocation2], 77
    %v1357 = vld [vmem:[%s1356] ss:$2 sm:$0xff]
    %s1358 = scalar_lea.vmem [#allocation2], 101
    %v1359 = vld [vmem:[%s1358] ss:$2 sm:$0xff]
    %s1360 = scalar_lea.vmem [#allocation2], 125
    %v1361 = vld [vmem:[%s1360] ss:$2 sm:$0xff]
    %s1362 = scalar_lea.vmem [#allocation2], 149
    %v1363 = vld [vmem:[%s1362] ss:$2 sm:$0xff]
    %s1364 = scalar_lea.vmem [#allocation2], 173
    %v1365 = vld [vmem:[%s1364] ss:$2 sm:$0xff]
    %v1366 = vld [vmem:[#allocation9] sm:$0xff]
    %v1367 = vld [vmem:[#allocation9 + $0x8] sm:$0xff]
    %v1368 = vld [vmem:[#allocation9 + $0x10] sm:$0xff]
    %v1369 = vld [vmem:[#allocation9 + $0x18] sm:$0xff]
    %v1370 = vld [vmem:[#allocation9 + $0x20] sm:$0xff]
    %v1371 = vld [vmem:[#allocation9 + $0x28] sm:$0xff]
    %v1372 = vld [vmem:[#allocation9 + $0x30] sm:$0xff]
    %v1373 = vld [vmem:[#allocation9 + $0x38] sm:$0xff]
    %v1374 = vld [vmem:[#allocation9 + $0x40] sm:$0xff]
    %v1375 = vld [vmem:[#allocation9 + $0x48] sm:$0xff]
    %v1376 = vld [vmem:[#allocation9 + $0x50] sm:$0xff]
    %v1377 = vld [vmem:[#allocation9 + $0x58] sm:$0xff]
    %v1378 = vld [vmem:[#allocation9 + $0x60] sm:$0xff]
    %v1379 = vld [vmem:[#allocation9 + $0x68] sm:$0xff]
    %v1380 = vld [vmem:[#allocation9 + $0x70] sm:$0xff]
    %v1381 = vld [vmem:[#allocation9 + $0x78] sm:$0xff]
    %v1382 = vld [vmem:[#allocation9 + $0x80] sm:$0xff]
    %v1383 = vld [vmem:[#allocation9 + $0x88] sm:$0xff]
    %v1384 = vld [vmem:[#allocation9 + $0x90] sm:$0xff]
    %v1385 = vld [vmem:[#allocation9 + $0x98] sm:$0xff]
    %v1386 = vld [vmem:[#allocation9 + $0xa0] sm:$0xff]
    %v1387 = vld [vmem:[#allocation9 + $0xa8] sm:$0xff]
    %v1388 = vld [vmem:[#allocation9 + $0xb0] sm:$0xff]
    %v1389 = vld [vmem:[#allocation9 + $0xb8] sm:$0xff]
    %v1390 = vld [vmem:[#allocation9 + $0xc0] sm:$0xff]
    %v1391 = vld [vmem:[#allocation9 + $0xc8] sm:$0xff]
    %v1392 = vld [vmem:[#allocation9 + $0xd0] sm:$0xff]
    %v1393 = vld [vmem:[#allocation9 + $0xd8] sm:$0xff]
    %v1394 = vld [vmem:[#allocation9 + $0xe0] sm:$0xff]
    %v1395 = vld [vmem:[#allocation9 + $0xe8] sm:$0xff]
    %v1396 = vld [vmem:[#allocation9 + $0xf0] sm:$0xff]
    %v1397 = vld [vmem:[#allocation9 + $0xf8] sm:$0xff]
    %v1398 = vld [vmem:[#allocation9 + $0x100] sm:$0xff]
    %v1399 = vld [vmem:[#allocation9 + $0x108] sm:$0xff]
    %v1400 = vld [vmem:[#allocation9 + $0x110] sm:$0xff]
    %v1401 = vld [vmem:[#allocation9 + $0x118] sm:$0xff]
    %v1402 = vld [vmem:[#allocation9 + $0x120] sm:$0xff]
    %v1403 = vld [vmem:[#allocation9 + $0x128] sm:$0xff]
    %v1404 = vld [vmem:[#allocation9 + $0x130] sm:$0xff]
    %v1405 = vld [vmem:[#allocation9 + $0x138] sm:$0xff]
    %v1406 = vld [vmem:[#allocation9 + $0x140] sm:$0xff]
    %v1407 = vld [vmem:[#allocation9 + $0x148] sm:$0xff]
    %v1408 = vld [vmem:[#allocation9 + $0x150] sm:$0xff]
    %v1409 = vld [vmem:[#allocation9 + $0x158] sm:$0xff]
    %v1410 = vld [vmem:[#allocation9 + $0x160] sm:$0xff]
    %v1411 = vld [vmem:[#allocation9 + $0x168] sm:$0xff]
    %v1412 = vld [vmem:[#allocation9 + $0x170] sm:$0xff]
    %v1413 = vld [vmem:[#allocation9 + $0x178] sm:$0xff]
    %v1414 = vld [vmem:[#allocation9 + $0x180] sm:$0xff]
    %v1415 = vld [vmem:[#allocation9 + $0x188] sm:$0xff]
    %v1416 = vld [vmem:[#allocation9 + $0x190] sm:$0xff]
    %v1417 = vld [vmem:[#allocation9 + $0x198] sm:$0xff]
    %v1418 = vld [vmem:[#allocation9 + $0x1a0] sm:$0xff]
    %v1419 = vld [vmem:[#allocation9 + $0x1a8] sm:$0xff]
    %v1420 = vld [vmem:[#allocation9 + $0x1b0] sm:$0xff]
    %v1421 = vld [vmem:[#allocation9 + $0x1b8] sm:$0xff]
    %v1422 = vld [vmem:[#allocation9 + $0x1c0] sm:$0xff]
    %v1423 = vld [vmem:[#allocation9 + $0x1c8] sm:$0xff]
    %v1424 = vld [vmem:[#allocation9 + $0x1d0] sm:$0xff]
    %v1425 = vld [vmem:[#allocation9 + $0x1d8] sm:$0xff]
    %v1426 = vld [vmem:[#allocation9 + $0x1e0] sm:$0xff]
    %v1427 = vld [vmem:[#allocation9 + $0x1e8] sm:$0xff]
    %v1428 = vld [vmem:[#allocation9 + $0x1f0] sm:$0xff]
    %v1429 = vld [vmem:[#allocation9 + $0x1f8] sm:$0xff]
    %v1430 = vld [vmem:[#allocation9 + $0x200] sm:$0xff]
    %v1431 = vld [vmem:[#allocation9 + $0x208] sm:$0xff]
    %v1432 = vld [vmem:[#allocation9 + $0x210] sm:$0xff]
    %v1433 = vld [vmem:[#allocation9 + $0x218] sm:$0xff]
    %v1434 = vld [vmem:[#allocation9 + $0x220] sm:$0xff]
    %v1435 = vld [vmem:[#allocation9 + $0x228] sm:$0xff]
    %v1436 = vld [vmem:[#allocation9 + $0x230] sm:$0xff]
    %v1437 = vld [vmem:[#allocation9 + $0x238] sm:$0xff]
    %v1438 = vld [vmem:[#allocation9 + $0x240] sm:$0xff]
    %v1439 = vld [vmem:[#allocation9 + $0x248] sm:$0xff]
    %v1440 = vld [vmem:[#allocation9 + $0x250] sm:$0xff]
    %v1441 = vld [vmem:[#allocation9 + $0x258] sm:$0xff]
    %v1442 = vld [vmem:[#allocation9 + $0x260] sm:$0xff]
    %v1443 = vld [vmem:[#allocation9 + $0x268] sm:$0xff]
    %v1444 = vld [vmem:[#allocation9 + $0x270] sm:$0xff]
    %v1445 = vld [vmem:[#allocation9 + $0x278] sm:$0xff]
    %v1446 = vld [vmem:[#allocation9 + $0x280] sm:$0xff]
    %v1447 = vld [vmem:[#allocation9 + $0x288] sm:$0xff]
    %v1448 = vld [vmem:[#allocation9 + $0x290] sm:$0xff]
    %v1449 = vld [vmem:[#allocation9 + $0x298] sm:$0xff]
    %v1450 = vld [vmem:[#allocation9 + $0x2a0] sm:$0xff]
    %v1451 = vld [vmem:[#allocation9 + $0x2a8] sm:$0xff]
    %v1452 = vld [vmem:[#allocation9 + $0x2b0] sm:$0xff]
    %v1453 = vld [vmem:[#allocation9 + $0x2b8] sm:$0xff]
    %v1454 = vld [vmem:[#allocation9 + $0x2c0] sm:$0xff]
    %v1455 = vld [vmem:[#allocation9 + $0x2c8] sm:$0xff]
    %v1456 = vld [vmem:[#allocation9 + $0x2d0] sm:$0xff]
    %v1457 = vld [vmem:[#allocation9 + $0x2d8] sm:$0xff]
    %v1458 = vld [vmem:[#allocation9 + $0x2e0] sm:$0xff]
    %v1459 = vld [vmem:[#allocation9 + $0x2e8] sm:$0xff]
    %v1460 = vld [vmem:[#allocation9 + $0x2f0] sm:$0xff]
    %v1461 = vld [vmem:[#allocation9 + $0x2f8] sm:$0xff]
    %v1462 = vld [vmem:[#allocation9 + $0x300] sm:$0xff]
    %v1463 = vld [vmem:[#allocation9 + $0x308] sm:$0xff]
    %v1464 = vld [vmem:[#allocation9 + $0x310] sm:$0xff]
    %v1465 = vld [vmem:[#allocation9 + $0x318] sm:$0xff]
    %v1466 = vld [vmem:[#allocation9 + $0x320] sm:$0xff]
    %v1467 = vld [vmem:[#allocation9 + $0x328] sm:$0xff]
    %v1468 = vld [vmem:[#allocation9 + $0x330] sm:$0xff]
    %v1469 = vld [vmem:[#allocation9 + $0x338] sm:$0xff]
    %v1470 = vld [vmem:[#allocation9 + $0x340] sm:$0xff]
    %v1471 = vld [vmem:[#allocation9 + $0x348] sm:$0xff]
    %v1472 = vld [vmem:[#allocation9 + $0x350] sm:$0xff]
    %v1473 = vld [vmem:[#allocation9 + $0x358] sm:$0xff]
    %v1474 = vld [vmem:[#allocation9 + $0x360] sm:$0xff]
    %v1475 = vld [vmem:[#allocation9 + $0x368] sm:$0xff]
    %v1476 = vld [vmem:[#allocation9 + $0x370] sm:$0xff]
    %v1477 = vld [vmem:[#allocation9 + $0x378] sm:$0xff]
    %v1478 = vld [vmem:[#allocation9 + $0x380] sm:$0xff]
    %v1479 = vld [vmem:[#allocation9 + $0x388] sm:$0xff]
    %v1480 = vld [vmem:[#allocation9 + $0x390] sm:$0xff]
    %v1481 = vld [vmem:[#allocation9 + $0x398] sm:$0xff]
    %v1482 = vld [vmem:[#allocation9 + $0x3a0] sm:$0xff]
    %v1483 = vld [vmem:[#allocation9 + $0x3a8] sm:$0xff]
    %v1484 = vld [vmem:[#allocation9 + $0x3b0] sm:$0xff]
    %v1485 = vld [vmem:[#allocation9 + $0x3b8] sm:$0xff]
    %v1486 = vld [vmem:[#allocation9 + $0x3c0] sm:$0xff]
    %v1487 = vld [vmem:[#allocation9 + $0x3c8] sm:$0xff]
    %v1488 = vld [vmem:[#allocation9 + $0x3d0] sm:$0xff]
    %v1489 = vld [vmem:[#allocation9 + $0x3d8] sm:$0xff]
    %v1490 = vld [vmem:[#allocation9 + $0x3e0] sm:$0xff]
    %v1491 = vld [vmem:[#allocation9 + $0x3e8] sm:$0xff]
    %v1492 = vld [vmem:[#allocation9 + $0x3f0] sm:$0xff]
    %v1493 = vld [vmem:[#allocation9 + $0x3f8] sm:$0xff]
    %v1494 = vld [vmem:[#allocation9 + $0x400] sm:$0xff]
    %v1495 = vld [vmem:[#allocation9 + $0x408] sm:$0xff]
    %v1496 = vld [vmem:[#allocation9 + $0x410] sm:$0xff]
    %v1497 = vld [vmem:[#allocation9 + $0x418] sm:$0xff]
    %v1498 = vld [vmem:[#allocation9 + $0x420] sm:$0xff]
    %v1499 = vld [vmem:[#allocation9 + $0x428] sm:$0xff]
    %v1500 = vld [vmem:[#allocation9 + $0x430] sm:$0xff]
    %v1501 = vld [vmem:[#allocation9 + $0x438] sm:$0xff]
    %v1502 = vld [vmem:[#allocation9 + $0x440] sm:$0xff]
    %v1503 = vld [vmem:[#allocation9 + $0x448] sm:$0xff]
    %v1504 = vld [vmem:[#allocation9 + $0x450] sm:$0xff]
    %v1505 = vld [vmem:[#allocation9 + $0x458] sm:$0xff]
    %v1506 = vld [vmem:[#allocation9 + $0x460] sm:$0xff]
    %v1507 = vld [vmem:[#allocation9 + $0x468] sm:$0xff]
    %v1508 = vld [vmem:[#allocation9 + $0x470] sm:$0xff]
    %v1509 = vld [vmem:[#allocation9 + $0x478] sm:$0xff]
    %v1510 = vld [vmem:[#allocation9 + $0x480] sm:$0xff]
    %v1511 = vld [vmem:[#allocation9 + $0x488] sm:$0xff]
    %v1512 = vld [vmem:[#allocation9 + $0x490] sm:$0xff]
    %v1513 = vld [vmem:[#allocation9 + $0x498] sm:$0xff]
    %v1514 = vld [vmem:[#allocation9 + $0x4a0] sm:$0xff]
    %v1515 = vld [vmem:[#allocation9 + $0x4a8] sm:$0xff]
    %v1516 = vld [vmem:[#allocation9 + $0x4b0] sm:$0xff]
    %v1517 = vld [vmem:[#allocation9 + $0x4b8] sm:$0xff]
    %v1518 = vld [vmem:[#allocation9 + $0x4c0] sm:$0xff]
    %v1519 = vld [vmem:[#allocation9 + $0x4c8] sm:$0xff]
    %v1520 = vld [vmem:[#allocation9 + $0x4d0] sm:$0xff]
    %v1521 = vld [vmem:[#allocation9 + $0x4d8] sm:$0xff]
    %v1522 = vld [vmem:[#allocation9 + $0x4e0] sm:$0xff]
    %v1523 = vld [vmem:[#allocation9 + $0x4e8] sm:$0xff]
    %v1524 = vld [vmem:[#allocation9 + $0x4f0] sm:$0xff]
    %v1525 = vld [vmem:[#allocation9 + $0x4f8] sm:$0xff]
    %v1526 = vld [vmem:[#allocation9 + $0x500] sm:$0xff]
    %v1527 = vld [vmem:[#allocation9 + $0x508] sm:$0xff]
    %v1528 = vld [vmem:[#allocation9 + $0x510] sm:$0xff]
    %v1529 = vld [vmem:[#allocation9 + $0x518] sm:$0xff]
    %v1530 = vld [vmem:[#allocation9 + $0x520] sm:$0xff]
    %v1531 = vld [vmem:[#allocation9 + $0x528] sm:$0xff]
    %v1532 = vld [vmem:[#allocation9 + $0x530] sm:$0xff]
    %v1533 = vld [vmem:[#allocation9 + $0x538] sm:$0xff]
    %v1534 = vld [vmem:[#allocation9 + $0x540] sm:$0xff]
    %v1535 = vld [vmem:[#allocation9 + $0x548] sm:$0xff]
    %v1536 = vld [vmem:[#allocation9 + $0x550] sm:$0xff]
    %v1537 = vld [vmem:[#allocation9 + $0x558] sm:$0xff]
    %v1538 = vld [vmem:[#allocation9 + $0x560] sm:$0xff]
    %v1539 = vld [vmem:[#allocation9 + $0x568] sm:$0xff]
    %v1540 = vld [vmem:[#allocation9 + $0x570] sm:$0xff]
    %v1541 = vld [vmem:[#allocation9 + $0x578] sm:$0xff]
    %v1542 = vld [vmem:[#allocation9 + $0x580] sm:$0xff]
    %v1543 = vld [vmem:[#allocation9 + $0x588] sm:$0xff]
    %v1544 = vld [vmem:[#allocation9 + $0x590] sm:$0xff]
    %v1545 = vld [vmem:[#allocation9 + $0x598] sm:$0xff]
    %v1546 = vld [vmem:[#allocation9 + $0x5a0] sm:$0xff]
    %v1547 = vld [vmem:[#allocation9 + $0x5a8] sm:$0xff]
    %v1548 = vld [vmem:[#allocation9 + $0x5b0] sm:$0xff]
    %v1549 = vld [vmem:[#allocation9 + $0x5b8] sm:$0xff]
    %v1550 = vld [vmem:[#allocation9 + $0x5c0] sm:$0xff]
    %v1551 = vld [vmem:[#allocation9 + $0x5c8] sm:$0xff]
    %v1552 = vld [vmem:[#allocation9 + $0x5d0] sm:$0xff]
    %v1553 = vld [vmem:[#allocation9 + $0x5d8] sm:$0xff]
    %v1554 = vld [vmem:[#allocation9 + $0x5e0] sm:$0xff]
    %v1555 = vld [vmem:[#allocation9 + $0x5e8] sm:$0xff]
    %v1556 = vld [vmem:[#allocation9 + $0x5f0] sm:$0xff]
    %v1557 = vld [vmem:[#allocation9 + $0x5f8] sm:$0xff]
    %v1558 = vld [vmem:[#allocation9 + $0x600] sm:$0xff]
    %v1559 = vld [vmem:[#allocation9 + $0x608] sm:$0xff]
    %v1560 = vld [vmem:[#allocation9 + $0x610] sm:$0xff]
    %v1561 = vld [vmem:[#allocation9 + $0x618] sm:$0xff]
    %v1562 = vld [vmem:[#allocation9 + $0x620] sm:$0xff]
    %v1563 = vld [vmem:[#allocation9 + $0x628] sm:$0xff]
    %v1564 = vld [vmem:[#allocation9 + $0x630] sm:$0xff]
    %v1565 = vld [vmem:[#allocation9 + $0x638] sm:$0xff]
    %v1566 = vld [vmem:[#allocation9 + $0x640] sm:$0xff]
    %v1567 = vld [vmem:[#allocation9 + $0x648] sm:$0xff]
    %v1568 = vld [vmem:[#allocation9 + $0x650] sm:$0xff]
    %v1569 = vld [vmem:[#allocation9 + $0x658] sm:$0xff]
    %v1570 = vld [vmem:[#allocation9 + $0x660] sm:$0xff]
    %v1571 = vld [vmem:[#allocation9 + $0x668] sm:$0xff]
    %v1572 = vld [vmem:[#allocation9 + $0x670] sm:$0xff]
    %v1573 = vld [vmem:[#allocation9 + $0x678] sm:$0xff]
    %v1574 = vld [vmem:[#allocation9 + $0x680] sm:$0xff]
    %v1575 = vld [vmem:[#allocation9 + $0x688] sm:$0xff]
    %v1576 = vld [vmem:[#allocation9 + $0x690] sm:$0xff]
    %v1577 = vld [vmem:[#allocation9 + $0x698] sm:$0xff]
    %v1578 = vld [vmem:[#allocation9 + $0x6a0] sm:$0xff]
    %v1579 = vld [vmem:[#allocation9 + $0x6a8] sm:$0xff]
    %v1580 = vld [vmem:[#allocation9 + $0x6b0] sm:$0xff]
    %v1581 = vld [vmem:[#allocation9 + $0x6b8] sm:$0xff]
    %v1582 = vld [vmem:[#allocation9 + $0x6c0] sm:$0xff]
    %v1583 = vld [vmem:[#allocation9 + $0x6c8] sm:$0xff]
    %v1584 = vld [vmem:[#allocation9 + $0x6d0] sm:$0xff]
    %v1585 = vld [vmem:[#allocation9 + $0x6d8] sm:$0xff]
    %v1586 = vld [vmem:[#allocation9 + $0x6e0] sm:$0xff]
    %v1587 = vld [vmem:[#allocation9 + $0x6e8] sm:$0xff]
    %v1588 = vld [vmem:[#allocation9 + $0x6f0] sm:$0xff]
    %v1589 = vld [vmem:[#allocation9 + $0x6f8] sm:$0xff]
    %v1590 = vld [vmem:[#allocation9 + $0x700] sm:$0xff]
    %v1591 = vld [vmem:[#allocation9 + $0x708] sm:$0xff]
    %v1592 = vld [vmem:[#allocation9 + $0x710] sm:$0xff]
    %v1593 = vld [vmem:[#allocation9 + $0x718] sm:$0xff]
    %v1594 = vld [vmem:[#allocation9 + $0x720] sm:$0xff]
    %v1595 = vld [vmem:[#allocation9 + $0x728] sm:$0xff]
    %v1596 = vld [vmem:[#allocation9 + $0x730] sm:$0xff]
    %v1597 = vld [vmem:[#allocation9 + $0x738] sm:$0xff]
    %v1598 = vld [vmem:[#allocation9 + $0x740] sm:$0xff]
    %v1599 = vld [vmem:[#allocation9 + $0x748] sm:$0xff]
    %v1600 = vld [vmem:[#allocation9 + $0x750] sm:$0xff]
    %v1601 = vld [vmem:[#allocation9 + $0x758] sm:$0xff]
    %v1602 = vld [vmem:[#allocation9 + $0x760] sm:$0xff]
    %v1603 = vld [vmem:[#allocation9 + $0x768] sm:$0xff]
    %v1604 = vld [vmem:[#allocation9 + $0x770] sm:$0xff]
    %v1605 = vld [vmem:[#allocation9 + $0x778] sm:$0xff]
    %v1606 = vld [vmem:[#allocation9 + $0x780] sm:$0xff]
    %v1607 = vld [vmem:[#allocation9 + $0x788] sm:$0xff]
    %v1608 = vld [vmem:[#allocation9 + $0x790] sm:$0xff]
    %v1609 = vld [vmem:[#allocation9 + $0x798] sm:$0xff]
    %v1610 = vld [vmem:[#allocation9 + $0x7a0] sm:$0xff]
    %v1611 = vld [vmem:[#allocation9 + $0x7a8] sm:$0xff]
    %v1612 = vld [vmem:[#allocation9 + $0x7b0] sm:$0xff]
    %v1613 = vld [vmem:[#allocation9 + $0x7b8] sm:$0xff]
    %v1614 = vld [vmem:[#allocation9 + $0x7c0] sm:$0xff]
    %v1615 = vld [vmem:[#allocation9 + $0x7c8] sm:$0xff]
    %v1616 = vld [vmem:[#allocation9 + $0x7d0] sm:$0xff]
    %v1617 = vld [vmem:[#allocation9 + $0x7d8] sm:$0xff]
    %v1618 = vld [vmem:[#allocation9 + $0x7e0] sm:$0xff]
    %v1619 = vld [vmem:[#allocation9 + $0x7e8] sm:$0xff]
    %v1620 = vld [vmem:[#allocation9 + $0x7f0] sm:$0xff]
    %v1621 = vld [vmem:[#allocation9 + $0x7f8] sm:$0xff]
    %v1622 = vld [vmem:[#allocation9 + $0x800] sm:$0xff]
    %v1623 = vld [vmem:[#allocation9 + $0x808] sm:$0xff]
    %v1624 = vld [vmem:[#allocation9 + $0x810] sm:$0xff]
    %v1625 = vld [vmem:[#allocation9 + $0x818] sm:$0xff]
    %v1626 = vld [vmem:[#allocation9 + $0x820] sm:$0xff]
    %v1627 = vld [vmem:[#allocation9 + $0x828] sm:$0xff]
    %v1628 = vld [vmem:[#allocation9 + $0x830] sm:$0xff]
    %v1629 = vld [vmem:[#allocation9 + $0x838] sm:$0xff]
    %v1630 = vld [vmem:[#allocation9 + $0x840] sm:$0xff]
    %v1631 = vld [vmem:[#allocation9 + $0x848] sm:$0xff]
    %v1632 = vld [vmem:[#allocation9 + $0x850] sm:$0xff]
    %v1633 = vld [vmem:[#allocation9 + $0x858] sm:$0xff]
    %v1634 = vld [vmem:[#allocation9 + $0x860] sm:$0xff]
    %v1635 = vld [vmem:[#allocation9 + $0x868] sm:$0xff]
    %v1636 = vld [vmem:[#allocation9 + $0x870] sm:$0xff]
    %v1637 = vld [vmem:[#allocation9 + $0x878] sm:$0xff]
    %v1638 = vld [vmem:[#allocation9 + $0x880] sm:$0xff]
    %v1639 = vld [vmem:[#allocation9 + $0x888] sm:$0xff]
    %v1640 = vld [vmem:[#allocation9 + $0x890] sm:$0xff]
    %v1641 = vld [vmem:[#allocation9 + $0x898] sm:$0xff]
    %v1642 = vld [vmem:[#allocation9 + $0x8a0] sm:$0xff]
    %v1643 = vld [vmem:[#allocation9 + $0x8a8] sm:$0xff]
    %v1644 = vld [vmem:[#allocation9 + $0x8b0] sm:$0xff]
    %v1645 = vld [vmem:[#allocation9 + $0x8b8] sm:$0xff]
    %v1646 = vld [vmem:[#allocation9 + $0x8c0] sm:$0xff]
    %v1647 = vld [vmem:[#allocation9 + $0x8c8] sm:$0xff]
    %v1648 = vld [vmem:[#allocation9 + $0x8d0] sm:$0xff]
    %v1649 = vld [vmem:[#allocation9 + $0x8d8] sm:$0xff]
    %v1650 = vld [vmem:[#allocation9 + $0x8e0] sm:$0xff]
    %v1651 = vld [vmem:[#allocation9 + $0x8e8] sm:$0xff]
    %v1652 = vld [vmem:[#allocation9 + $0x8f0] sm:$0xff]
    %v1653 = vld [vmem:[#allocation9 + $0x8f8] sm:$0xff]
    %v1654 = vld [vmem:[#allocation9 + $0x900] sm:$0xff]
    %v1655 = vld [vmem:[#allocation9 + $0x908] sm:$0xff]
    %v1656 = vld [vmem:[#allocation9 + $0x910] sm:$0xff]
    %v1657 = vld [vmem:[#allocation9 + $0x918] sm:$0xff]
    %v1658 = vld [vmem:[#allocation9 + $0x920] sm:$0xff]
    %v1659 = vld [vmem:[#allocation9 + $0x928] sm:$0xff]
    %v1660 = vld [vmem:[#allocation9 + $0x930] sm:$0xff]
    %v1661 = vld [vmem:[#allocation9 + $0x938] sm:$0xff]
    %v1662 = vld [vmem:[#allocation9 + $0x940] sm:$0xff]
    %v1663 = vld [vmem:[#allocation9 + $0x948] sm:$0xff]
    %v1664 = vld [vmem:[#allocation9 + $0x950] sm:$0xff]
    %v1665 = vld [vmem:[#allocation9 + $0x958] sm:$0xff]
    %v1666 = vld [vmem:[#allocation9 + $0x960] sm:$0xff]
    %v1667 = vld [vmem:[#allocation9 + $0x968] sm:$0xff]
    %v1668 = vld [vmem:[#allocation9 + $0x970] sm:$0xff]
    %v1669 = vld [vmem:[#allocation9 + $0x978] sm:$0xff]
    %v1670 = vld [vmem:[#allocation9 + $0x980] sm:$0xff]
    %v1671 = vld [vmem:[#allocation9 + $0x988] sm:$0xff]
    %v1672 = vld [vmem:[#allocation9 + $0x990] sm:$0xff]
    %v1673 = vld [vmem:[#allocation9 + $0x998] sm:$0xff]
    %v1674 = vld [vmem:[#allocation9 + $0x9a0] sm:$0xff]
    %v1675 = vld [vmem:[#allocation9 + $0x9a8] sm:$0xff]
    %v1676 = vld [vmem:[#allocation9 + $0x9b0] sm:$0xff]
    %v1677 = vld [vmem:[#allocation9 + $0x9b8] sm:$0xff]
    %v1678 = vld [vmem:[#allocation9 + $0x9c0] sm:$0xff]
    %v1679 = vld [vmem:[#allocation9 + $0x9c8] sm:$0xff]
    %v1680 = vld [vmem:[#allocation9 + $0x9d0] sm:$0xff]
    %v1681 = vld [vmem:[#allocation9 + $0x9d8] sm:$0xff]
    %v1682 = vld [vmem:[#allocation9 + $0x9e0] sm:$0xff]
    %v1683 = vld [vmem:[#allocation9 + $0x9e8] sm:$0xff]
    %v1684 = vld [vmem:[#allocation9 + $0x9f0] sm:$0xff]
    %v1685 = vld [vmem:[#allocation9 + $0x9f8] sm:$0xff]
    %v1686 = vld [vmem:[#allocation9 + $0xa00] sm:$0xff]
    %v1687 = vld [vmem:[#allocation9 + $0xa08] sm:$0xff]
    %v1688 = vld [vmem:[#allocation9 + $0xa10] sm:$0xff]
    %v1689 = vld [vmem:[#allocation9 + $0xa18] sm:$0xff]
    %v1690 = vld [vmem:[#allocation9 + $0xa20] sm:$0xff]
    %v1691 = vld [vmem:[#allocation9 + $0xa28] sm:$0xff]
    %v1692 = vld [vmem:[#allocation9 + $0xa30] sm:$0xff]
    %v1693 = vld [vmem:[#allocation9 + $0xa38] sm:$0xff]
    %v1694 = vld [vmem:[#allocation9 + $0xa40] sm:$0xff]
    %v1695 = vld [vmem:[#allocation9 + $0xa48] sm:$0xff]
    %v1696 = vld [vmem:[#allocation9 + $0xa50] sm:$0xff]
    %v1697 = vld [vmem:[#allocation9 + $0xa58] sm:$0xff]
    %v1698 = vld [vmem:[#allocation9 + $0xa60] sm:$0xff]
    %v1699 = vld [vmem:[#allocation9 + $0xa68] sm:$0xff]
    %v1700 = vld [vmem:[#allocation9 + $0xa70] sm:$0xff]
    %v1701 = vld [vmem:[#allocation9 + $0xa78] sm:$0xff]
    %v1702 = vld [vmem:[#allocation9 + $0xa80] sm:$0xff]
    %v1703 = vld [vmem:[#allocation9 + $0xa88] sm:$0xff]
    %v1704 = vld [vmem:[#allocation9 + $0xa90] sm:$0xff]
    %v1705 = vld [vmem:[#allocation9 + $0xa98] sm:$0xff]
    %v1706 = vld [vmem:[#allocation9 + $0xaa0] sm:$0xff]
    %v1707 = vld [vmem:[#allocation9 + $0xaa8] sm:$0xff]
    %v1708 = vld [vmem:[#allocation9 + $0xab0] sm:$0xff]
    %v1709 = vld [vmem:[#allocation9 + $0xab8] sm:$0xff]
    %v1710 = vld [vmem:[#allocation9 + $0xac0] sm:$0xff]
    %v1711 = vld [vmem:[#allocation9 + $0xac8] sm:$0xff]
    %v1712 = vld [vmem:[#allocation9 + $0xad0] sm:$0xff]
    %v1713 = vld [vmem:[#allocation9 + $0xad8] sm:$0xff]
    %v1714 = vld [vmem:[#allocation9 + $0xae0] sm:$0xff]
    %v1715 = vld [vmem:[#allocation9 + $0xae8] sm:$0xff]
    %v1716 = vld [vmem:[#allocation9 + $0xaf0] sm:$0xff]
    %v1717 = vld [vmem:[#allocation9 + $0xaf8] sm:$0xff]
    %v1718 = vld [vmem:[#allocation9 + $0xb00] sm:$0xff]
    %v1719 = vld [vmem:[#allocation9 + $0xb08] sm:$0xff]
    %v1720 = vld [vmem:[#allocation9 + $0xb10] sm:$0xff]
    %v1721 = vld [vmem:[#allocation9 + $0xb18] sm:$0xff]
    %v1722 = vld [vmem:[#allocation9 + $0xb20] sm:$0xff]
    %v1723 = vld [vmem:[#allocation9 + $0xb28] sm:$0xff]
    %v1724 = vld [vmem:[#allocation9 + $0xb30] sm:$0xff]
    %v1725 = vld [vmem:[#allocation9 + $0xb38] sm:$0xff]
    %v1726 = vld [vmem:[#allocation9 + $0xb40] sm:$0xff]
    %v1727 = vld [vmem:[#allocation9 + $0xb48] sm:$0xff]
    %v1728 = vld [vmem:[#allocation9 + $0xb50] sm:$0xff]
    %v1729 = vld [vmem:[#allocation9 + $0xb58] sm:$0xff]
    %v1730 = vld [vmem:[#allocation9 + $0xb60] sm:$0xff]
    %v1731 = vld [vmem:[#allocation9 + $0xb68] sm:$0xff]
    %v1732 = vld [vmem:[#allocation9 + $0xb70] sm:$0xff]
    %v1733 = vld [vmem:[#allocation9 + $0xb78] sm:$0xff]
    %v1734 = vld [vmem:[#allocation9 + $0xb80] sm:$0xff]
    %v1735 = vld [vmem:[#allocation9 + $0xb88] sm:$0xff]
    %v1736 = vld [vmem:[#allocation9 + $0xb90] sm:$0xff]
    %v1737 = vld [vmem:[#allocation9 + $0xb98] sm:$0xff]
    %v1738 = vld [vmem:[#allocation9 + $0xba0] sm:$0xff]
    %v1739 = vld [vmem:[#allocation9 + $0xba8] sm:$0xff]
    %v1740 = vld [vmem:[#allocation9 + $0xbb0] sm:$0xff]
    %v1741 = vld [vmem:[#allocation9 + $0xbb8] sm:$0xff]
    %v1742 = vld [vmem:[#allocation9 + $0xbc0] sm:$0xff]
    %v1743 = vld [vmem:[#allocation9 + $0xbc8] sm:$0xff]
    %v1744 = vld [vmem:[#allocation9 + $0xbd0] sm:$0xff]
    %v1745 = vld [vmem:[#allocation9 + $0xbd8] sm:$0xff]
    %v1746 = vld [vmem:[#allocation9 + $0xbe0] sm:$0xff]
    %v1747 = vld [vmem:[#allocation9 + $0xbe8] sm:$0xff]
    %v1748 = vld [vmem:[#allocation9 + $0xbf0] sm:$0xff]
    %v1749 = vld [vmem:[#allocation9 + $0xbf8] sm:$0xff]
    %1750 = vmatprep.subr.mxu0 %v1367
    %1751 = vmatpush1.msra.mxu0 %v1366
    %1752 = vmatprep.subr.mxu0 %v1371
    %1753 = vmatpush1.msra.mxu0 %v1370
    %1754 = vmatprep.subr.mxu0 %v1375
    %1755 = vmatpush1.msra.mxu0 %v1374
    %1756 = vmatprep.subr.mxu0 %v1379
    %1757 = vmatpush1.msra.mxu0 %v1378
    %1758 = vmatprep.subr.mxu0 %v1383
    %1759 = vmatpush1.msra.mxu0 %v1382
    %1760 = vmatprep.subr.mxu0 %v1387
    %1761 = vmatpush1.msra.mxu0 %v1386
    %1762 = vmatprep.subr.mxu0 %v1391
    %1763 = vmatpush1.msra.mxu0 %v1390
    %1764 = vmatprep.subr.mxu0 %v1395
    %1765 = vmatpush1.msra.mxu0 %v1394
    %1766 = vmatprep.subr.mxu0 %v1399
    %1767 = vmatpush1.msra.mxu0 %v1398
    %1768 = vmatprep.subr.mxu0 %v1403
    %1769 = vmatpush1.msra.mxu0 %v1402
    %1770 = vmatprep.subr.mxu0 %v1407
    %1771 = vmatpush1.msra.mxu0 %v1406
    %1772 = vmatprep.subr.mxu0 %v1411
    %1773 = vmatpush1.msra.mxu0 %v1410
    %1774 = vmatprep.subr.mxu0 %v1415
    %1775 = vmatpush1.msra.mxu0 %v1414
    %1776 = vmatprep.subr.mxu0 %v1419
    %1777 = vmatpush1.msra.mxu0 %v1418
    %1778 = vmatprep.subr.mxu0 %v1423
    %1779 = vmatpush1.msra.mxu0 %v1422
    %1780 = vmatprep.subr.mxu0 %v1427
    %1781 = vmatpush1.msra.mxu0 %v1426
    %1782 = vmatprep.subr.mxu0 %v1431
    %1783 = vmatpush1.msra.mxu0 %v1430
    %1784 = vmatprep.subr.mxu0 %v1435
    %1785 = vmatpush1.msra.mxu0 %v1434
    %1786 = vmatprep.subr.mxu0 %v1439
    %1787 = vmatpush1.msra.mxu0 %v1438
    %1788 = vmatprep.subr.mxu0 %v1443
    %1789 = vmatpush1.msra.mxu0 %v1442
    %1790 = vmatprep.subr.mxu0 %v1447
    %1791 = vmatpush1.msra.mxu0 %v1446
    %1792 = vmatprep.subr.mxu0 %v1451
    %1793 = vmatpush1.msra.mxu0 %v1450
    %1794 = vmatprep.subr.mxu0 %v1455
    %1795 = vmatpush1.msra.mxu0 %v1454
    %1796 = vmatprep.subr.mxu0 %v1459
    %1797 = vmatpush1.msra.mxu0 %v1458
    %1798 = vmatprep.subr.mxu0 %v1463
    %1799 = vmatpush1.msra.mxu0 %v1462
    %1800 = vmatprep.subr.mxu0 %v1467
    %1801 = vmatpush1.msra.mxu0 %v1466
    %1802 = vmatprep.subr.mxu0 %v1471
    %1803 = vmatpush1.msra.mxu0 %v1470
    %1804 = vmatprep.subr.mxu0 %v1475
    %1805 = vmatpush1.msra.mxu0 %v1474
    %1806 = vmatprep.subr.mxu0 %v1479
    %1807 = vmatpush1.msra.mxu0 %v1478
    %1808 = vmatprep.subr.mxu0 %v1483
    %1809 = vmatpush1.msra.mxu0 %v1482
    %1810 = vmatprep.subr.mxu0 %v1487
    %1811 = vmatpush1.msra.mxu0 %v1486
    %1812 = vmatprep.subr.mxu0 %v1491
    %1813 = vmatpush1.msra.mxu0 %v1490
    %1814 = vmatprep.mubr.f32.mxu0 %v1287
    %1815 = vmatmul.mubr.f32.gmra.mrb[0].mxu0 %v1271
    %v1816 = vpop.f32.mrb[0].mxu0
    %v1817 = vadd.f32 0.0, %v1816
    %v1818 = vpop.f32.mrb[0].mxu0
    %v1819 = vadd.f32 0.0, %v1818
    %1820 = vmatprep.mubr.f32.mxu0 %v1289
    %1821 = vmatmul.mubr.f32.gmra.mrb[0].mxu0 %v1273
    %v1822 = vpop.f32.mrb[0].mxu0
    %v1823 = vadd.f32 0.0, %v1822
    %v1824 = vpop.f32.mrb[0].mxu0
    %v1825 = vadd.f32 0.0, %v1824
    %1826 = vmatprep.mubr.f32.mxu0 %v1291
    %1827 = vmatmul.mubr.f32.gmra.mrb[0].mxu0 %v1275
    %v1828 = vpop.f32.mrb[0].mxu0
    %v1829 = vadd.f32 0.0, %v1828
    %v1830 = vpop.f32.mrb[0].mxu0
    %v1831 = vadd.f32 0.0, %v1830
    %1832 = vmatprep.mubr.f32.mxu0 %v1293
    %1833 = vmatmul.mubr.f32.gmra.mrb[0].mxu0 %v1277
    %v1834 = vpop.f32.mrb[0].mxu0
    %v1835 = vadd.f32 0.0, %v1834
    %v1836 = vpop.f32.mrb[0].mxu0
    %v1837 = vadd.f32 0.0, %v1836
    %1838 = vmatprep.mubr.f32.mxu0 %v1295
    %1839 = vmatmul.mubr.f32.gmra.mrb[0].mxu0 %v1279
    %v1840 = vpop.f32.mrb[0].mxu0
    %v1841 = vadd.f32 0.0, %v1840
    %v1842 = vpop.f32.mrb[0].mxu0
    %v1843 = vadd.f32 0.0, %v1842
    %1844 = vmatprep.mubr.f32.mxu0 %v1297
    %1845 = vmatmul.mubr.f32.gmra.mrb[0].mxu0 %v1281
    %v1846 = vpop.f32.mrb[0].mxu0
    %v1847 = vadd.f32 0.0, %v1846
    %v1848 = vpop.f32.mrb[0].mxu0
    %v1849 = vadd.f32 0.0, %v1848
    %1850 = vmatprep.mubr.f32.mxu0 %v1299
    %1851 = vmatmul.mubr.f32.gmra.mrb[0].mxu0 %v1283
    %v1852 = vpop.f32.mrb[0].mxu0
    %v1853 = vadd.f32 0.0, %v1852
    %v1854 = vpop.f32.mrb[0].mxu0
    %v1855 = vadd.f32 0.0, %v1854
    %1856 = vmatprep.mubr.f32.mxu0 %v1301
    %1857 = vmatmul.mubr.f32.gmra.mrb[0].mxu0 %v1285
    %v1858 = vpop.f32.mrb[0].mxu0
    %v1859 = vadd.f32 0.0, %v1858
    %v1860 = vpop.f32.mrb[0].mxu0
    %v1861 = vadd.f32 0.0, %v1860
    %1862 = vdwg.mxu0
    %1863 = vmatprep.subr.mxu0 %v1495
    %1864 = vmatpush1.msra.mxu0 %v1494
    %1865 = vmatprep.subr.mxu0 %v1499
    %1866 = vmatpush1.msra.mxu0 %v1498
    %1867 = vmatprep.subr.mxu0 %v1503
    %1868 = vmatpush1.msra.mxu0 %v1502
    %1869 = vmatprep.subr.mxu0 %v1507
    %1870 = vmatpush1.msra.mxu0 %v1506
    %1871 = vmatprep.subr.mxu0 %v1511
    %1872 = vmatpush1.msra.mxu0 %v1510
    %1873 = vmatprep.subr.mxu0 %v1515
    %1874 = vmatpush1.msra.mxu0 %v1514
    %1875 = vmatprep.subr.mxu0 %v1519
    %1876 = vmatpush1.msra.mxu0 %v1518
    %1877 = vmatprep.subr.mxu0 %v1523
    %1878 = vmatpush1.msra.mxu0 %v1522
    %1879 = vmatprep.subr.mxu0 %v1527
    %1880 = vmatpush1.msra.mxu0 %v1526
    %1881 = vmatprep.subr.mxu0 %v1531
    %1882 = vmatpush1.msra.mxu0 %v1530
    %1883 = vmatprep.subr.mxu0 %v1535
    %1884 = vmatpush1.msra.mxu0 %v1534
    %1885 = vmatprep.subr.mxu0 %v1539
    %1886 = vmatpush1.msra.mxu0 %v1538
    %1887 = vmatprep.subr.mxu0 %v1543
    %1888 = vmatpush1.msra.mxu0 %v1542
    %1889 = vmatprep.subr.mxu0 %v1547
    %1890 = vmatpush1.msra.mxu0 %v1546
    %1891 = vmatprep.subr.mxu0 %v1551
    %1892 = vmatpush1.msra.mxu0 %v1550
    %1893 = vmatprep.subr.mxu0 %v1555
    %1894 = vmatpush1.msra.mxu0 %v1554
    %1895 = vmatprep.subr.mxu0 %v1559
    %1896 = vmatpush1.msra.mxu0 %v1558
    %1897 = vmatprep.subr.mxu0 %v1563
    %1898 = vmatpush1.msra.mxu0 %v1562
    %1899 = vmatprep.subr.mxu0 %v1567
    %1900 = vmatpush1.msra.mxu0 %v1566
    %1901 = vmatprep.subr.mxu0 %v1571
    %1902 = vmatpush1.msra.mxu0 %v1570
    %1903 = vmatprep.subr.mxu0 %v1575
    %1904 = vmatpush1.msra.mxu0 %v1574
    %1905 = vmatprep.subr.mxu0 %v1579
    %1906 = vmatpush1.msra.mxu0 %v1578
    %1907 = vmatprep.subr.mxu0 %v1583
    %1908 = vmatpush1.msra.mxu0 %v1582
    %1909 = vmatprep.subr.mxu0 %v1587
    %1910 = vmatpush1.msra.mxu0 %v1586
    %1911 = vmatprep.subr.mxu0 %v1591
    %1912 = vmatpush1.msra.mxu0 %v1590
    %1913 = vmatprep.subr.mxu0 %v1595
    %1914 = vmatpush1.msra.mxu0 %v1594
    %1915 = vmatprep.subr.mxu0 %v1599
    %1916 = vmatpush1.msra.mxu0 %v1598
    %1917 = vmatprep.subr.mxu0 %v1603
    %1918 = vmatpush1.msra.mxu0 %v1602
    %1919 = vmatprep.subr.mxu0 %v1607
    %1920 = vmatpush1.msra.mxu0 %v1606
    %1921 = vmatprep.subr.mxu0 %v1611
    %1922 = vmatpush1.msra.mxu0 %v1610
    %1923 = vmatprep.subr.mxu0 %v1615
    %1924 = vmatpush1.msra.mxu0 %v1614
    %1925 = vmatprep.subr.mxu0 %v1619
    %1926 = vmatpush1.msra.mxu0 %v1618
    %1927 = vmatprep.mubr.f32.mxu0 %v1319
    %1928 = vmatmul.mubr.f32.gmra.mrb[0].mxu0 %v1303
    %v1929 = vpop.f32.mrb[0].mxu0
    %v1930 = vadd.f32 %v1817, %v1929
    %v1931 = vpop.f32.mrb[0].mxu0
    %v1932 = vadd.f32 %v1819, %v1931
    %1933 = vmatprep.mubr.f32.mxu0 %v1321
    %1934 = vmatmul.mubr.f32.gmra.mrb[0].mxu0 %v1305
    %v1935 = vpop.f32.mrb[0].mxu0
    %v1936 = vadd.f32 %v1823, %v1935
    %v1937 = vpop.f32.mrb[0].mxu0
    %v1938 = vadd.f32 %v1825, %v1937
    %1939 = vmatprep.mubr.f32.mxu0 %v1323
    %1940 = vmatmul.mubr.f32.gmra.mrb[0].mxu0 %v1307
    %v1941 = vpop.f32.mrb[0].mxu0
    %v1942 = vadd.f32 %v1829, %v1941
    %v1943 = vpop.f32.mrb[0].mxu0
    %v1944 = vadd.f32 %v1831, %v1943
    %1945 = vmatprep.mubr.f32.mxu0 %v1325
    %1946 = vmatmul.mubr.f32.gmra.mrb[0].mxu0 %v1309
    %v1947 = vpop.f32.mrb[0].mxu0
    %v1948 = vadd.f32 %v1835, %v1947
    %v1949 = vpop.f32.mrb[0].mxu0
    %v1950 = vadd.f32 %v1837, %v1949
    %1951 = vmatprep.mubr.f32.mxu0 %v1327
    %1952 = vmatmul.mubr.f32.gmra.mrb[0].mxu0 %v1311
    %v1953 = vpop.f32.mrb[0].mxu0
    %v1954 = vadd.f32 %v1841, %v1953
    %v1955 = vpop.f32.mrb[0].mxu0
    %v1956 = vadd.f32 %v1843, %v1955
    %1957 = vmatprep.mubr.f32.mxu0 %v1329
    %1958 = vmatmul.mubr.f32.gmra.mrb[0].mxu0 %v1313
    %v1959 = vpop.f32.mrb[0].mxu0
    %v1960 = vadd.f32 %v1847, %v1959
    %v1961 = vpop.f32.mrb[0].mxu0
    %v1962 = vadd.f32 %v1849, %v1961
    %1963 = vmatprep.mubr.f32.mxu0 %v1331
    %1964 = vmatmul.mubr.f32.gmra.mrb[0].mxu0 %v1315
    %v1965 = vpop.f32.mrb[0].mxu0
    %v1966 = vadd.f32 %v1853, %v1965
    %v1967 = vpop.f32.mrb[0].mxu0
    %v1968 = vadd.f32 %v1855, %v1967
    %1969 = vmatprep.mubr.f32.mxu0 %v1333
    %1970 = vmatmul.mubr.f32.gmra.mrb[0].mxu0 %v1317
    %v1971 = vpop.f32.mrb[0].mxu0
    %v1972 = vadd.f32 %v1859, %v1971
    %v1973 = vpop.f32.mrb[0].mxu0
    %v1974 = vadd.f32 %v1861, %v1973
    %1975 = vdwg.mxu0
    %1976 = vmatprep.subr.mxu0 %v1623
    %1977 = vmatpush1.msra.mxu0 %v1622
    %1978 = vmatprep.subr.mxu0 %v1627
    %1979 = vmatpush1.msra.mxu0 %v1626
    %1980 = vmatprep.subr.mxu0 %v1631
    %1981 = vmatpush1.msra.mxu0 %v1630
    %1982 = vmatprep.subr.mxu0 %v1635
    %1983 = vmatpush1.msra.mxu0 %v1634
    %1984 = vmatprep.subr.mxu0 %v1639
    %1985 = vmatpush1.msra.mxu0 %v1638
    %1986 = vmatprep.subr.mxu0 %v1643
    %1987 = vmatpush1.msra.mxu0 %v1642
    %1988 = vmatprep.subr.mxu0 %v1647
    %1989 = vmatpush1.msra.mxu0 %v1646
    %1990 = vmatprep.subr.mxu0 %v1651
    %1991 = vmatpush1.msra.mxu0 %v1650
    %1992 = vmatprep.subr.mxu0 %v1655
    %1993 = vmatpush1.msra.mxu0 %v1654
    %1994 = vmatprep.subr.mxu0 %v1659
    %1995 = vmatpush1.msra.mxu0 %v1658
    %1996 = vmatprep.subr.mxu0 %v1663
    %1997 = vmatpush1.msra.mxu0 %v1662
    %1998 = vmatprep.subr.mxu0 %v1667
    %1999 = vmatpush1.msra.mxu0 %v1666
    %2000 = vmatprep.subr.mxu0 %v1671
    %2001 = vmatpush1.msra.mxu0 %v1670
    %2002 = vmatprep.subr.mxu0 %v1675
    %2003 = vmatpush1.msra.mxu0 %v1674
    %2004 = vmatprep.subr.mxu0 %v1679
    %2005 = vmatpush1.msra.mxu0 %v1678
    %2006 = vmatprep.subr.mxu0 %v1683
    %2007 = vmatpush1.msra.mxu0 %v1682
    %2008 = vmatprep.subr.mxu0 %v1687
    %2009 = vmatpush1.msra.mxu0 %v1686
    %2010 = vmatprep.subr.mxu0 %v1691
    %2011 = vmatpush1.msra.mxu0 %v1690
    %2012 = vmatprep.subr.mxu0 %v1695
    %2013 = vmatpush1.msra.mxu0 %v1694
    %2014 = vmatprep.subr.mxu0 %v1699
    %2015 = vmatpush1.msra.mxu0 %v1698
    %2016 = vmatprep.subr.mxu0 %v1703
    %2017 = vmatpush1.msra.mxu0 %v1702
    %2018 = vmatprep.subr.mxu0 %v1707
    %2019 = vmatpush1.msra.mxu0 %v1706
    %2020 = vmatprep.subr.mxu0 %v1711
    %2021 = vmatpush1.msra.mxu0 %v1710
    %2022 = vmatprep.subr.mxu0 %v1715
    %2023 = vmatpush1.msra.mxu0 %v1714
    %2024 = vmatprep.subr.mxu0 %v1719
    %2025 = vmatpush1.msra.mxu0 %v1718
    %2026 = vmatprep.subr.mxu0 %v1723
    %2027 = vmatpush1.msra.mxu0 %v1722
    %2028 = vmatprep.subr.mxu0 %v1727
    %2029 = vmatpush1.msra.mxu0 %v1726
    %2030 = vmatprep.subr.mxu0 %v1731
    %2031 = vmatpush1.msra.mxu0 %v1730
    %2032 = vmatprep.subr.mxu0 %v1735
    %2033 = vmatpush1.msra.mxu0 %v1734
    %2034 = vmatprep.subr.mxu0 %v1739
    %2035 = vmatpush1.msra.mxu0 %v1738
    %2036 = vmatprep.subr.mxu0 %v1743
    %2037 = vmatpush1.msra.mxu0 %v1742
    %2038 = vmatprep.subr.mxu0 %v1747
    %2039 = vmatpush1.msra.mxu0 %v1746
    %2040 = vmatprep.mubr.f32.mxu0 %v1351
    %2041 = vmatmul.mubr.f32.gmra.mrb[0].mxu0 %v1335
    %v2042 = vpop.f32.mrb[0].mxu0
    %v2043 = vadd.f32 %v1930, %v2042
    %v2044 = vpop.f32.mrb[0].mxu0
    %v2045 = vadd.f32 %v1932, %v2044
    %2046 = vmatprep.mubr.f32.mxu0 %v1353
    %2047 = vmatmul.mubr.f32.gmra.mrb[0].mxu0 %v1337
    %v2048 = vpop.f32.mrb[0].mxu0
    %v2049 = vadd.f32 %v1936, %v2048
    %v2050 = vpop.f32.mrb[0].mxu0
    %v2051 = vadd.f32 %v1938, %v2050
    %2052 = vmatprep.mubr.f32.mxu0 %v1355
    %2053 = vmatmul.mubr.f32.gmra.mrb[0].mxu0 %v1339
    %v2054 = vpop.f32.mrb[0].mxu0
    %v2055 = vadd.f32 %v1942, %v2054
    %v2056 = vpop.f32.mrb[0].mxu0
    %v2057 = vadd.f32 %v1944, %v2056
    %2058 = vmatprep.mubr.f32.mxu0 %v1357
    %2059 = vmatmul.mubr.f32.gmra.mrb[0].mxu0 %v1341
    %v2060 = vpop.f32.mrb[0].mxu0
    %v2061 = vadd.f32 %v1948, %v2060
    %v2062 = vpop.f32.mrb[0].mxu0
    %v2063 = vadd.f32 %v1950, %v2062
    %2064 = vmatprep.mubr.f32.mxu0 %v1359
    %2065 = vmatmul.mubr.f32.gmra.mrb[0].mxu0 %v1343
    %v2066 = vpop.f32.mrb[0].mxu0
    %v2067 = vadd.f32 %v1954, %v2066
    %v2068 = vpop.f32.mrb[0].mxu0
    %v2069 = vadd.f32 %v1956, %v2068
    %2070 = vmatprep.mubr.f32.mxu0 %v1361
    %2071 = vmatmul.mubr.f32.gmra.mrb[0].mxu0 %v1345
    %v2072 = vpop.f32.mrb[0].mxu0
    %v2073 = vadd.f32 %v1960, %v2072
    %v2074 = vpop.f32.mrb[0].mxu0
    %v2075 = vadd.f32 %v1962, %v2074
    %2076 = vmatprep.mubr.f32.mxu0 %v1363
    %2077 = vmatmul.mubr.f32.gmra.mrb[0].mxu0 %v1347
    %v2078 = vpop.f32.mrb[0].mxu0
    %v2079 = vadd.f32 %v1966, %v2078
    %v2080 = vpop.f32.mrb[0].mxu0
    %v2081 = vadd.f32 %v1968, %v2080
    %2082 = vmatprep.mubr.f32.mxu0 %v1365
    %2083 = vmatmul.mubr.f32.gmra.mrb[0].mxu0 %v1349
    %v2084 = vpop.f32.mrb[0].mxu0
    %v2085 = vadd.f32 %v1972, %v2084
    %v2086 = vpop.f32.mrb[0].mxu0
    %v2087 = vadd.f32 %v1974, %v2086
    %2088 = vdwg.mxu0
    %2089 = vmatprep.subr.mxu0 %v1369
    %2090 = vmatpush1.msra.mxu0 %v1368
    %2091 = vmatprep.subr.mxu0 %v1373
    %2092 = vmatpush1.msra.mxu0 %v1372
    %2093 = vmatprep.subr.mxu0 %v1377
    %2094 = vmatpush1.msra.mxu0 %v1376
    %2095 = vmatprep.subr.mxu0 %v1381
    %2096 = vmatpush1.msra.mxu0 %v1380
    %2097 = vmatprep.subr.mxu0 %v1385
    %2098 = vmatpush1.msra.mxu0 %v1384
    %2099 = vmatprep.subr.mxu0 %v1389
    %2100 = vmatpush1.msra.mxu0 %v1388
    %2101 = vmatprep.subr.mxu0 %v1393
    %2102 = vmatpush1.msra.mxu0 %v1392
    %2103 = vmatprep.subr.mxu0 %v1397
    %2104 = vmatpush1.msra.mxu0 %v1396
    %2105 = vmatprep.subr.mxu0 %v1401
    %2106 = vmatpush1.msra.mxu0 %v1400
    %2107 = vmatprep.subr.mxu0 %v1405
    %2108 = vmatpush1.msra.mxu0 %v1404
    %2109 = vmatprep.subr.mxu0 %v1409
    %2110 = vmatpush1.msra.mxu0 %v1408
    %2111 = vmatprep.subr.mxu0 %v1413
    %2112 = vmatpush1.msra.mxu0 %v1412
    %2113 = vmatprep.subr.mxu0 %v1417
    %2114 = vmatpush1.msra.mxu0 %v1416
    %2115 = vmatprep.subr.mxu0 %v1421
    %2116 = vmatpush1.msra.mxu0 %v1420
    %2117 = vmatprep.subr.mxu0 %v1425
    %2118 = vmatpush1.msra.mxu0 %v1424
    %2119 = vmatprep.subr.mxu0 %v1429
    %2120 = vmatpush1.msra.mxu0 %v1428
    %2121 = vmatprep.subr.mxu0 %v1433
    %2122 = vmatpush1.msra.mxu0 %v1432
    %2123 = vmatprep.subr.mxu0 %v1437
    %2124 = vmatpush1.msra.mxu0 %v1436
    %2125 = vmatprep.subr.mxu0 %v1441
    %2126 = vmatpush1.msra.mxu0 %v1440
    %2127 = vmatprep.subr.mxu0 %v1445
    %2128 = vmatpush1.msra.mxu0 %v1444
    %2129 = vmatprep.subr.mxu0 %v1449
    %2130 = vmatpush1.msra.mxu0 %v1448
    %2131 = vmatprep.subr.mxu0 %v1453
    %2132 = vmatpush1.msra.mxu0 %v1452
    %2133 = vmatprep.subr.mxu0 %v1457
    %2134 = vmatpush1.msra.mxu0 %v1456
    %2135 = vmatprep.subr.mxu0 %v1461
    %2136 = vmatpush1.msra.mxu0 %v1460
    %2137 = vmatprep.subr.mxu0 %v1465
    %2138 = vmatpush1.msra.mxu0 %v1464
    %2139 = vmatprep.subr.mxu0 %v1469
    %2140 = vmatpush1.msra.mxu0 %v1468
    %2141 = vmatprep.subr.mxu0 %v1473
    %2142 = vmatpush1.msra.mxu0 %v1472
    %2143 = vmatprep.subr.mxu0 %v1477
    %2144 = vmatpush1.msra.mxu0 %v1476
    %2145 = vmatprep.subr.mxu0 %v1481
    %2146 = vmatpush1.msra.mxu0 %v1480
    %2147 = vmatprep.subr.mxu0 %v1485
    %2148 = vmatpush1.msra.mxu0 %v1484
    %2149 = vmatprep.subr.mxu0 %v1489
    %2150 = vmatpush1.msra.mxu0 %v1488
    %2151 = vmatprep.subr.mxu0 %v1493
    %2152 = vmatpush1.msra.mxu0 %v1492
    %2153 = vmatprep.mubr.f32.mxu0 %v1287
    %2154 = vmatmul.mubr.f32.gmra.mrb[0].mxu0 %v1271
    %v2155 = vpop.f32.mrb[0].mxu0
    %v2156 = vadd.f32 0.0, %v2155
    %v2157 = vpop.f32.mrb[0].mxu0
    %v2158 = vadd.f32 0.0, %v2157
    %2159 = vmatprep.mubr.f32.mxu0 %v1289
    %2160 = vmatmul.mubr.f32.gmra.mrb[0].mxu0 %v1273
    %v2161 = vpop.f32.mrb[0].mxu0
    %v2162 = vadd.f32 0.0, %v2161
    %v2163 = vpop.f32.mrb[0].mxu0
    %v2164 = vadd.f32 0.0, %v2163
    %2165 = vmatprep.mubr.f32.mxu0 %v1291
    %2166 = vmatmul.mubr.f32.gmra.mrb[0].mxu0 %v1275
    %v2167 = vpop.f32.mrb[0].mxu0
    %v2168 = vadd.f32 0.0, %v2167
    %v2169 = vpop.f32.mrb[0].mxu0
    %v2170 = vadd.f32 0.0, %v2169
    %2171 = vmatprep.mubr.f32.mxu0 %v1293
    %2172 = vmatmul.mubr.f32.gmra.mrb[0].mxu0 %v1277
    %v2173 = vpop.f32.mrb[0].mxu0
    %v2174 = vadd.f32 0.0, %v2173
    %v2175 = vpop.f32.mrb[0].mxu0
    %v2176 = vadd.f32 0.0, %v2175
    %2177 = vmatprep.mubr.f32.mxu0 %v1295
    %2178 = vmatmul.mubr.f32.gmra.mrb[0].mxu0 %v1279
    %v2179 = vpop.f32.mrb[0].mxu0
    %v2180 = vadd.f32 0.0, %v2179
    %v2181 = vpop.f32.mrb[0].mxu0
    %v2182 = vadd.f32 0.0, %v2181
    %2183 = vmatprep.mubr.f32.mxu0 %v1297
    %2184 = vmatmul.mubr.f32.gmra.mrb[0].mxu0 %v1281
    %v2185 = vpop.f32.mrb[0].mxu0
    %v2186 = vadd.f32 0.0, %v2185
    %v2187 = vpop.f32.mrb[0].mxu0
    %v2188 = vadd.f32 0.0, %v2187
    %2189 = vmatprep.mubr.f32.mxu0 %v1299
    %2190 = vmatmul.mubr.f32.gmra.mrb[0].mxu0 %v1283
    %v2191 = vpop.f32.mrb[0].mxu0
    %v2192 = vadd.f32 0.0, %v2191
    %v2193 = vpop.f32.mrb[0].mxu0
    %v2194 = vadd.f32 0.0, %v2193
    %2195 = vmatprep.mubr.f32.mxu0 %v1301
    %2196 = vmatmul.mubr.f32.gmra.mrb[0].mxu0 %v1285
    %v2197 = vpop.f32.mrb[0].mxu0
    %v2198 = vadd.f32 0.0, %v2197
    %v2199 = vpop.f32.mrb[0].mxu0
    %v2200 = vadd.f32 0.0, %v2199
    %2201 = vdwg.mxu0
    %2202 = vmatprep.subr.mxu0 %v1497
    %2203 = vmatpush1.msra.mxu0 %v1496
    %2204 = vmatprep.subr.mxu0 %v1501
    %2205 = vmatpush1.msra.mxu0 %v1500
    %2206 = vmatprep.subr.mxu0 %v1505
    %2207 = vmatpush1.msra.mxu0 %v1504
    %2208 = vmatprep.subr.mxu0 %v1509
    %2209 = vmatpush1.msra.mxu0 %v1508
    %2210 = vmatprep.subr.mxu0 %v1513
    %2211 = vmatpush1.msra.mxu0 %v1512
    %2212 = vmatprep.subr.mxu0 %v1517
    %2213 = vmatpush1.msra.mxu0 %v1516
    %2214 = vmatprep.subr.mxu0 %v1521
    %2215 = vmatpush1.msra.mxu0 %v1520
    %2216 = vmatprep.subr.mxu0 %v1525
    %2217 = vmatpush1.msra.mxu0 %v1524
    %2218 = vmatprep.subr.mxu0 %v1529
    %2219 = vmatpush1.msra.mxu0 %v1528
    %2220 = vmatprep.subr.mxu0 %v1533
    %2221 = vmatpush1.msra.mxu0 %v1532
    %2222 = vmatprep.subr.mxu0 %v1537
    %2223 = vmatpush1.msra.mxu0 %v1536
    %2224 = vmatprep.subr.mxu0 %v1541
    %2225 = vmatpush1.msra.mxu0 %v1540
    %2226 = vmatprep.subr.mxu0 %v1545
    %2227 = vmatpush1.msra.mxu0 %v1544
    %2228 = vmatprep.subr.mxu0 %v1549
    %2229 = vmatpush1.msra.mxu0 %v1548
    %2230 = vmatprep.subr.mxu0 %v1553
    %2231 = vmatpush1.msra.mxu0 %v1552
    %2232 = vmatprep.subr.mxu0 %v1557
    %2233 = vmatpush1.msra.mxu0 %v1556
    %2234 = vmatprep.subr.mxu0 %v1561
    %2235 = vmatpush1.msra.mxu0 %v1560
    %2236 = vmatprep.subr.mxu0 %v1565
    %2237 = vmatpush1.msra.mxu0 %v1564
    %2238 = vmatprep.subr.mxu0 %v1569
    %2239 = vmatpush1.msra.mxu0 %v1568
    %2240 = vmatprep.subr.mxu0 %v1573
    %2241 = vmatpush1.msra.mxu0 %v1572
    %2242 = vmatprep.subr.mxu0 %v1577
    %2243 = vmatpush1.msra.mxu0 %v1576
    %2244 = vmatprep.subr.mxu0 %v1581
    %2245 = vmatpush1.msra.mxu0 %v1580
    %2246 = vmatprep.subr.mxu0 %v1585
    %2247 = vmatpush1.msra.mxu0 %v1584
    %2248 = vmatprep.subr.mxu0 %v1589
    %2249 = vmatpush1.msra.mxu0 %v1588
    %2250 = vmatprep.subr.mxu0 %v1593
    %2251 = vmatpush1.msra.mxu0 %v1592
    %2252 = vmatprep.subr.mxu0 %v1597
    %2253 = vmatpush1.msra.mxu0 %v1596
    %2254 = vmatprep.subr.mxu0 %v1601
    %2255 = vmatpush1.msra.mxu0 %v1600
    %2256 = vmatprep.subr.mxu0 %v1605
    %2257 = vmatpush1.msra.mxu0 %v1604
    %2258 = vmatprep.subr.mxu0 %v1609
    %2259 = vmatpush1.msra.mxu0 %v1608
    %2260 = vmatprep.subr.mxu0 %v1613
    %2261 = vmatpush1.msra.mxu0 %v1612
    %2262 = vmatprep.subr.mxu0 %v1617
    %2263 = vmatpush1.msra.mxu0 %v1616
    %2264 = vmatprep.subr.mxu0 %v1621
    %2265 = vmatpush1.msra.mxu0 %v1620
    %2266 = vmatprep.mubr.f32.mxu0 %v1319
    %2267 = vmatmul.mubr.f32.gmra.mrb[0].mxu0 %v1303
    %v2268 = vpop.f32.mrb[0].mxu0
    %v2269 = vadd.f32 %v2156, %v2268
    %v2270 = vpop.f32.mrb[0].mxu0
    %v2271 = vadd.f32 %v2158, %v2270
    %2272 = vmatprep.mubr.f32.mxu0 %v1321
    %2273 = vmatmul.mubr.f32.gmra.mrb[0].mxu0 %v1305
    %v2274 = vpop.f32.mrb[0].mxu0
    %v2275 = vadd.f32 %v2162, %v2274
    %v2276 = vpop.f32.mrb[0].mxu0
    %v2277 = vadd.f32 %v2164, %v2276
    %2278 = vmatprep.mubr.f32.mxu0 %v1323
    %2279 = vmatmul.mubr.f32.gmra.mrb[0].mxu0 %v1307
    %v2280 = vpop.f32.mrb[0].mxu0
    %v2281 = vadd.f32 %v2168, %v2280
    %v2282 = vpop.f32.mrb[0].mxu0
    %v2283 = vadd.f32 %v2170, %v2282
    %2284 = vmatprep.mubr.f32.mxu0 %v1325
    %2285 = vmatmul.mubr.f32.gmra.mrb[0].mxu0 %v1309
    %v2286 = vpop.f32.mrb[0].mxu0
    %v2287 = vadd.f32 %v2174, %v2286
    %v2288 = vpop.f32.mrb[0].mxu0
    %v2289 = vadd.f32 %v2176, %v2288
    %2290 = vmatprep.mubr.f32.mxu0 %v1327
    %2291 = vmatmul.mubr.f32.gmra.mrb[0].mxu0 %v1311
    %v2292 = vpop.f32.mrb[0].mxu0
    %v2293 = vadd.f32 %v2180, %v2292
    %v2294 = vpop.f32.mrb[0].mxu0
    %v2295 = vadd.f32 %v2182, %v2294
    %2296 = vmatprep.mubr.f32.mxu0 %v1329
    %2297 = vmatmul.mubr.f32.gmra.mrb[0].mxu0 %v1313
    %v2298 = vpop.f32.mrb[0].mxu0
    %v2299 = vadd.f32 %v2186, %v2298
    %v2300 = vpop.f32.mrb[0].mxu0
    %v2301 = vadd.f32 %v2188, %v2300
    %2302 = vmatprep.mubr.f32.mxu0 %v1331
    %2303 = vmatmul.mubr.f32.gmra.mrb[0].mxu0 %v1315
    %v2304 = vpop.f32.mrb[0].mxu0
    %v2305 = vadd.f32 %v2192, %v2304
    %v2306 = vpop.f32.mrb[0].mxu0
    %v2307 = vadd.f32 %v2194, %v2306
    %2308 = vmatprep.mubr.f32.mxu0 %v1333
    %2309 = vmatmul.mubr.f32.gmra.mrb[0].mxu0 %v1317
    %v2310 = vpop.f32.mrb[0].mxu0
    %v2311 = vadd.f32 %v2198, %v2310
    %v2312 = vpop.f32.mrb[0].mxu0
    %v2313 = vadd.f32 %v2200, %v2312
    %2314 = vdwg.mxu0
    %2315 = vmatprep.subr.mxu0 %v1625
    %2316 = vmatpush1.msra.mxu0 %v1624
    %2317 = vmatprep.subr.mxu0 %v1629
    %2318 = vmatpush1.msra.mxu0 %v1628
    %2319 = vmatprep.subr.mxu0 %v1633
    %2320 = vmatpush1.msra.mxu0 %v1632
    %2321 = vmatprep.subr.mxu0 %v1637
    %2322 = vmatpush1.msra.mxu0 %v1636
    %2323 = vmatprep.subr.mxu0 %v1641
    %2324 = vmatpush1.msra.mxu0 %v1640
    %2325 = vmatprep.subr.mxu0 %v1645
    %2326 = vmatpush1.msra.mxu0 %v1644
    %2327 = vmatprep.subr.mxu0 %v1649
    %2328 = vmatpush1.msra.mxu0 %v1648
    %2329 = vmatprep.subr.mxu0 %v1653
    %2330 = vmatpush1.msra.mxu0 %v1652
    %2331 = vmatprep.subr.mxu0 %v1657
    %2332 = vmatpush1.msra.mxu0 %v1656
    %2333 = vmatprep.subr.mxu0 %v1661
    %2334 = vmatpush1.msra.mxu0 %v1660
    %2335 = vmatprep.subr.mxu0 %v1665
    %2336 = vmatpush1.msra.mxu0 %v1664
    %2337 = vmatprep.subr.mxu0 %v1669
    %2338 = vmatpush1.msra.mxu0 %v1668
    %2339 = vmatprep.subr.mxu0 %v1673
    %2340 = vmatpush1.msra.mxu0 %v1672
    %2341 = vmatprep.subr.mxu0 %v1677
    %2342 = vmatpush1.msra.mxu0 %v1676
    %2343 = vmatprep.subr.mxu0 %v1681
    %2344 = vmatpush1.msra.mxu0 %v1680
    %2345 = vmatprep.subr.mxu0 %v1685
    %2346 = vmatpush1.msra.mxu0 %v1684
    %2347 = vmatprep.subr.mxu0 %v1689
    %2348 = vmatpush1.msra.mxu0 %v1688
    %2349 = vmatprep.subr.mxu0 %v1693
    %2350 = vmatpush1.msra.mxu0 %v1692
    %2351 = vmatprep.subr.mxu0 %v1697
    %2352 = vmatpush1.msra.mxu0 %v1696
    %2353 = vmatprep.subr.mxu0 %v1701
    %2354 = vmatpush1.msra.mxu0 %v1700
    %2355 = vmatprep.subr.mxu0 %v1705
    %2356 = vmatpush1.msra.mxu0 %v1704
    %2357 = vmatprep.subr.mxu0 %v1709
    %2358 = vmatpush1.msra.mxu0 %v1708
    %2359 = vmatprep.subr.mxu0 %v1713
    %2360 = vmatpush1.msra.mxu0 %v1712
    %2361 = vmatprep.subr.mxu0 %v1717
    %2362 = vmatpush1.msra.mxu0 %v1716
    %2363 = vmatprep.subr.mxu0 %v1721
    %2364 = vmatpush1.msra.mxu0 %v1720
    %2365 = vmatprep.subr.mxu0 %v1725
    %2366 = vmatpush1.msra.mxu0 %v1724
    %2367 = vmatprep.subr.mxu0 %v1729
    %2368 = vmatpush1.msra.mxu0 %v1728
    %2369 = vmatprep.subr.mxu0 %v1733
    %2370 = vmatpush1.msra.mxu0 %v1732
    %2371 = vmatprep.subr.mxu0 %v1737
    %2372 = vmatpush1.msra.mxu0 %v1736
    %2373 = vmatprep.subr.mxu0 %v1741
    %2374 = vmatpush1.msra.mxu0 %v1740
    %2375 = vmatprep.subr.mxu0 %v1745
    %2376 = vmatpush1.msra.mxu0 %v1744
    %2377 = vmatprep.subr.mxu0 %v1749
    %2378 = vmatpush1.msra.mxu0 %v1748
    %2379 = vmatprep.mubr.f32.mxu0 %v1351
    %2380 = vmatmul.mubr.f32.gmra.mrb[0].mxu0 %v1335
    %v2381 = vpop.f32.mrb[0].mxu0
    %v2382 = vadd.f32 %v2269, %v2381
    %v2383 = vpop.f32.mrb[0].mxu0
    %v2384 = vadd.f32 %v2271, %v2383
    %2385 = vmatprep.mubr.f32.mxu0 %v1353
    %2386 = vmatmul.mubr.f32.gmra.mrb[0].mxu0 %v1337
    %v2387 = vpop.f32.mrb[0].mxu0
    %v2388 = vadd.f32 %v2275, %v2387
    %v2389 = vpop.f32.mrb[0].mxu0
    %v2390 = vadd.f32 %v2277, %v2389
    %2391 = vmatprep.mubr.f32.mxu0 %v1355
    %2392 = vmatmul.mubr.f32.gmra.mrb[0].mxu0 %v1339
    %v2393 = vpop.f32.mrb[0].mxu0
    %v2394 = vadd.f32 %v2281, %v2393
    %v2395 = vpop.f32.mrb[0].mxu0
    %v2396 = vadd.f32 %v2283, %v2395
    %2397 = vmatprep.mubr.f32.mxu0 %v1357
    %2398 = vmatmul.mubr.f32.gmra.mrb[0].mxu0 %v1341
    %v2399 = vpop.f32.mrb[0].mxu0
    %v2400 = vadd.f32 %v2287, %v2399
    %v2401 = vpop.f32.mrb[0].mxu0
    %v2402 = vadd.f32 %v2289, %v2401
    %2403 = vmatprep.mubr.f32.mxu0 %v1359
    %2404 = vmatmul.mubr.f32.gmra.mrb[0].mxu0 %v1343
    %v2405 = vpop.f32.mrb[0].mxu0
    %v2406 = vadd.f32 %v2293, %v2405
    %v2407 = vpop.f32.mrb[0].mxu0
    %v2408 = vadd.f32 %v2295, %v2407
    %2409 = vmatprep.mubr.f32.mxu0 %v1361
    %2410 = vmatmul.mubr.f32.gmra.mrb[0].mxu0 %v1345
    %v2411 = vpop.f32.mrb[0].mxu0
    %v2412 = vadd.f32 %v2299, %v2411
    %v2413 = vpop.f32.mrb[0].mxu0
    %v2414 = vadd.f32 %v2301, %v2413
    %2415 = vmatprep.mubr.f32.mxu0 %v1363
    %2416 = vmatmul.mubr.f32.gmra.mrb[0].mxu0 %v1347
    %v2417 = vpop.f32.mrb[0].mxu0
    %v2418 = vadd.f32 %v2305, %v2417
    %v2419 = vpop.f32.mrb[0].mxu0
    %v2420 = vadd.f32 %v2307, %v2419
    %2421 = vmatprep.mubr.f32.mxu0 %v1365
    %2422 = vmatmul.mubr.f32.gmra.mrb[0].mxu0 %v1349
    %v2423 = vpop.f32.mrb[0].mxu0
    %v2424 = vadd.f32 %v2311, %v2423
    %v2425 = vpop.f32.mrb[0].mxu0
    %v2426 = vadd.f32 %v2313, %v2425
    %2427 = vdwg.mxu0
    %v2428 = vmax.f32 %v2043, %v2045
    %v2429 = vmax.f32 %v2049, %v2051
    %v2430 = vmax.f32 %v2055, %v2057
    %v2431 = vmax.f32 %v2061, %v2063
    %v2432 = vmax.f32 %v2067, %v2069
    %v2433 = vmax.f32 %v2073, %v2075
    %v2434 = vmax.f32 %v2079, %v2081
    %v2435 = vmax.f32 %v2085, %v2087
    %v2436 = vmax.f32 %v2382, %v2384
    %v2437 = vmax.f32 %v2388, %v2390
    %v2438 = vmax.f32 %v2394, %v2396
    %v2439 = vmax.f32 %v2400, %v2402
    %v2440 = vmax.f32 %v2406, %v2408
    %v2441 = vmax.f32 %v2412, %v2414
    %v2442 = vmax.f32 %v2418, %v2420
    %v2443 = vmax.f32 %v2424, %v2426
    %v2444 = vmax.f32 %v2428, %v2436
    %v2445 = vmax.f32 %v2429, %v2437
    %v2446 = vmax.f32 %v2430, %v2438
    %v2447 = vmax.f32 %v2431, %v2439
    %v2448 = vmax.f32 %v2432, %v2440
    %v2449 = vmax.f32 %v2433, %v2441
    %v2450 = vmax.f32 %v2434, %v2442
    %v2451 = vmax.f32 %v2435, %v2443
    %v2452 = vld [vmem:[#allocation11] sm:$0x1]
    %v2454 = vlaneseq
    %v2455 = vshrl.u32 %v2454, 7
    %v2456 = vsub.s32 0, %v2455
    %v2457 = vrot.slane %v2452, %v2456
    %v2459 = vadd.f32 %v2444, %v2457
    %v2460 = vadd.f32 %v2445, %v2457
    %v2461 = vadd.f32 %v2446, %v2457
    %v2462 = vadd.f32 %v2447, %v2457
    %v2463 = vadd.f32 %v2448, %v2457
    %v2464 = vadd.f32 %v2449, %v2457
    %v2465 = vadd.f32 %v2450, %v2457
    %v2466 = vadd.f32 %v2451, %v2457
    %v2467 = vmax.f32 %v2459, 0.0
    %v2468 = vmax.f32 %v2460, 0.0
    %v2469 = vmax.f32 %v2461, 0.0
    %v2470 = vmax.f32 %v2462, 0.0
    %v2471 = vmax.f32 %v2463, 0.0
    %v2472 = vmax.f32 %v2464, 0.0
    %v2473 = vmax.f32 %v2465, 0.0
    %v2474 = vmax.f32 %v2466, 0.0
    %v2483 = vrot.slane %v2468, 7
    %vm2484 = vcmask 1041409
    %v2485 = vsel %vm2484, %v2483, %v2467
    %v2486 = vrot.slane %v2469, 6
    %vm2487 = vcmask 1042434
    %v2488 = vsel %vm2487, %v2486, %v2485
    %v2489 = vrot.slane %v2470, 5
    %vm2490 = vcmask 1043459
    %v2491 = vsel %vm2490, %v2489, %v2488
    %v2492 = vrot.slane %v2471, 4
    %vm2493 = vcmask 1044484
    %v2494 = vsel %vm2493, %v2492, %v2491
    %v2495 = vrot.slane %v2472, 3
    %vm2496 = vcmask 1045509
    %v2497 = vsel %vm2496, %v2495, %v2494
    %v2498 = vrot.slane %v2473, 2
    %vm2499 = vcmask 1046534
    %v2500 = vsel %vm2499, %v2498, %v2497
    %v2501 = vrot.slane %v2474, 1
    %vm2502 = vcmask 1047559
    %v2503 = vsel %vm2502, %v2501, %v2500
    %v2505 = vrot.slane %v2467, 1
    %v2506 = vsel %vm2484, %v2468, %v2505
    %v2507 = vrot.slane %v2469, 7
    %v2508 = vsel %vm2487, %v2507, %v2506
    %v2509 = vrot.slane %v2470, 6
    %v2510 = vsel %vm2490, %v2509, %v2508
    %v2511 = vrot.slane %v2471, 5
    %v2512 = vsel %vm2493, %v2511, %v2510
    %v2513 = vrot.slane %v2472, 4
    %v2514 = vsel %vm2496, %v2513, %v2512
    %v2515 = vrot.slane %v2473, 3
    %v2516 = vsel %vm2499, %v2515, %v2514
    %v2517 = vrot.slane %v2474, 2
    %v2518 = vsel %vm2502, %v2517, %v2516
    %v2520 = vrot.slane %v2467, 2
    %v2521 = vrot.slane %v2468, 1
    %v2522 = vsel %vm2484, %v2521, %v2520
    %v2523 = vsel %vm2487, %v2469, %v2522
    %v2524 = vrot.slane %v2470, 7
    %v2525 = vsel %vm2490, %v2524, %v2523
    %v2526 = vrot.slane %v2471, 6
    %v2527 = vsel %vm2493, %v2526, %v2525
    %v2528 = vrot.slane %v2472, 5
    %v2529 = vsel %vm2496, %v2528, %v2527
    %v2530 = vrot.slane %v2473, 4
    %v2531 = vsel %vm2499, %v2530, %v2529
    %v2532 = vrot.slane %v2474, 3
    %v2533 = vsel %vm2502, %v2532, %v2531
    %v2535 = vrot.slane %v2467, 3
    %v2536 = vrot.slane %v2468, 2
    %v2537 = vsel %vm2484, %v2536, %v2535
    %v2538 = vrot.slane %v2469, 1
    %v2539 = vsel %vm2487, %v2538, %v2537
    %v2540 = vsel %vm2490, %v2470, %v2539
    %v2541 = vrot.slane %v2471, 7
    %v2542 = vsel %vm2493, %v2541, %v2540
    %v2543 = vrot.slane %v2472, 6
    %v2544 = vsel %vm2496, %v2543, %v2542
    %v2545 = vrot.slane %v2473, 5
    %v2546 = vsel %vm2499, %v2545, %v2544
    %v2547 = vrot.slane %v2474, 4
    %v2548 = vsel %vm2502, %v2547, %v2546
    %v2550 = vld [vmem:[%s5] sm:$0xff]
    %v2551 = vld [vmem:[%s5 + $0x8] sm:$0xff]
    %v2552 = vld [vmem:[%s5 + $0x10] sm:$0xff]
    %v2553 = vld [vmem:[%s5 + $0x18] sm:$0xff]
    %v2554 = vld [vmem:[%s5 + $0x20] sm:$0xff]
    %v2555 = vld [vmem:[%s5 + $0x28] sm:$0xff]
    %v2556 = vld [vmem:[%s5 + $0x30] sm:$0xff]
    %v2557 = vld [vmem:[%s5 + $0x38] sm:$0xff]
    %v2558 = vld [vmem:[%s5 + $0x40] sm:$0xff]
    %v2559 = vld [vmem:[%s5 + $0x48] sm:$0xff]
    %v2560 = vld [vmem:[%s5 + $0x50] sm:$0xff]
    %v2561 = vld [vmem:[%s5 + $0x58] sm:$0xff]
    %v2562 = vld [vmem:[%s5 + $0x60] sm:$0xff]
    %v2563 = vld [vmem:[%s5 + $0x68] sm:$0xff]
    %v2564 = vld [vmem:[%s5 + $0x70] sm:$0xff]
    %v2565 = vld [vmem:[%s5 + $0x78] sm:$0xff]
    %v2566 = vld [vmem:[%s5 + $0x80] sm:$0xff]
    %v2567 = vld [vmem:[%s5 + $0x88] sm:$0xff]
    %v2568 = vld [vmem:[%s5 + $0x90] sm:$0xff]
    %v2569 = vld [vmem:[%s5 + $0x98] sm:$0xff]
    %v2570 = vld [vmem:[%s5 + $0xa0] sm:$0xff]
    %v2571 = vld [vmem:[%s5 + $0xa8] sm:$0xff]
    %v2572 = vld [vmem:[%s5 + $0xb0] sm:$0xff]
    %v2573 = vld [vmem:[%s5 + $0xb8] sm:$0xff]
    %v2574 = vld [vmem:[%s5 + $0xc0] sm:$0xff]
    %v2575 = vld [vmem:[%s5 + $0xc8] sm:$0xff]
    %v2576 = vld [vmem:[%s5 + $0xd0] sm:$0xff]
    %v2577 = vld [vmem:[%s5 + $0xd8] sm:$0xff]
    %v2578 = vld [vmem:[%s5 + $0xe0] sm:$0xff]
    %v2579 = vld [vmem:[%s5 + $0xe8] sm:$0xff]
    %v2580 = vld [vmem:[%s5 + $0xf0] sm:$0xff]
    %v2581 = vld [vmem:[%s5 + $0xf8] sm:$0xff]
    %v2582 = vld [vmem:[%s5 + $0x100] sm:$0xff]
    %v2583 = vld [vmem:[%s5 + $0x108] sm:$0xff]
    %v2584 = vld [vmem:[%s5 + $0x110] sm:$0xff]
    %v2585 = vld [vmem:[%s5 + $0x118] sm:$0xff]
    %v2586 = vld [vmem:[%s5 + $0x120] sm:$0xff]
    %v2587 = vld [vmem:[%s5 + $0x128] sm:$0xff]
    %v2588 = vld [vmem:[%s5 + $0x130] sm:$0xff]
    %v2589 = vld [vmem:[%s5 + $0x138] sm:$0xff]
    %v2590 = vld [vmem:[%s5 + $0x140] sm:$0xff]
    %v2591 = vld [vmem:[%s5 + $0x148] sm:$0xff]
    %v2592 = vld [vmem:[%s5 + $0x150] sm:$0xff]
    %v2593 = vld [vmem:[%s5 + $0x158] sm:$0xff]
    %v2594 = vld [vmem:[%s5 + $0x160] sm:$0xff]
    %v2595 = vld [vmem:[%s5 + $0x168] sm:$0xff]
    %v2596 = vld [vmem:[%s5 + $0x170] sm:$0xff]
    %v2597 = vld [vmem:[%s5 + $0x178] sm:$0xff]
    %v2598 = vld [vmem:[%s5 + $0x180] sm:$0xff]
    %v2599 = vld [vmem:[%s5 + $0x188] sm:$0xff]
    %v2600 = vld [vmem:[%s5 + $0x190] sm:$0xff]
    %v2601 = vld [vmem:[%s5 + $0x198] sm:$0xff]
    %v2602 = vld [vmem:[%s5 + $0x1a0] sm:$0xff]
    %v2603 = vld [vmem:[%s5 + $0x1a8] sm:$0xff]
    %v2604 = vld [vmem:[%s5 + $0x1b0] sm:$0xff]
    %v2605 = vld [vmem:[%s5 + $0x1b8] sm:$0xff]
    %v2606 = vld [vmem:[%s5 + $0x1c0] sm:$0xff]
    %v2607 = vld [vmem:[%s5 + $0x1c8] sm:$0xff]
    %v2608 = vld [vmem:[%s5 + $0x1d0] sm:$0xff]
    %v2609 = vld [vmem:[%s5 + $0x1d8] sm:$0xff]
    %v2610 = vld [vmem:[%s5 + $0x1e0] sm:$0xff]
    %v2611 = vld [vmem:[%s5 + $0x1e8] sm:$0xff]
    %v2612 = vld [vmem:[%s5 + $0x1f0] sm:$0xff]
    %v2613 = vld [vmem:[%s5 + $0x1f8] sm:$0xff]
    %v2614 = vld [vmem:[#allocation12] sm:$0x1]
    %v2616 = vlaneseq
    %v2617 = vshrl.u32 %v2616, 7
    %v2618 = vsub.s32 0, %v2617
    %v2619 = vrot.slane %v2614, %v2618
    %2621 = vmatprep.subr.mxu0 0.0
    %2622 = vmatpush1.msra.mxu0 %v2550
    %2623 = vmatprep.subr.mxu0 0.0
    %2624 = vmatpush1.msra.mxu0 %v2551
    %2625 = vmatprep.subr.mxu0 0.0
    %2626 = vmatpush1.msra.mxu0 %v2552
    %2627 = vmatprep.subr.mxu0 0.0
    %2628 = vmatpush1.msra.mxu0 %v2553
    %2629 = vmatprep.subr.mxu0 0.0
    %2630 = vmatpush1.msra.mxu0 %v2554
    %2631 = vmatprep.subr.mxu0 0.0
    %2632 = vmatpush1.msra.mxu0 %v2555
    %2633 = vmatprep.subr.mxu0 0.0
    %2634 = vmatpush1.msra.mxu0 %v2556
    %2635 = vmatprep.subr.mxu0 0.0
    %2636 = vmatpush1.msra.mxu0 %v2557
    %2637 = vmatprep.subr.mxu0 0.0
    %2638 = vmatpush1.msra.mxu0 %v2558
    %2639 = vmatprep.subr.mxu0 0.0
    %2640 = vmatpush1.msra.mxu0 %v2559
    %2641 = vmatprep.subr.mxu0 0.0
    %2642 = vmatpush1.msra.mxu0 %v2560
    %2643 = vmatprep.subr.mxu0 0.0
    %2644 = vmatpush1.msra.mxu0 %v2561
    %2645 = vmatprep.subr.mxu0 0.0
    %2646 = vmatpush1.msra.mxu0 %v2562
    %2647 = vmatprep.subr.mxu0 0.0
    %2648 = vmatpush1.msra.mxu0 %v2563
    %2649 = vmatprep.subr.mxu0 0.0
    %2650 = vmatpush1.msra.mxu0 %v2564
    %2651 = vmatprep.subr.mxu0 0.0
    %2652 = vmatpush1.msra.mxu0 %v2565
    %2653 = vmatprep.subr.mxu0 0.0
    %2654 = vmatpush1.msra.mxu0 %v2566
    %2655 = vmatprep.subr.mxu0 0.0
    %2656 = vmatpush1.msra.mxu0 %v2567
    %2657 = vmatprep.subr.mxu0 0.0
    %2658 = vmatpush1.msra.mxu0 %v2568
    %2659 = vmatprep.subr.mxu0 0.0
    %2660 = vmatpush1.msra.mxu0 %v2569
    %2661 = vmatprep.subr.mxu0 0.0
    %2662 = vmatpush1.msra.mxu0 %v2570
    %2663 = vmatprep.subr.mxu0 0.0
    %2664 = vmatpush1.msra.mxu0 %v2571
    %2665 = vmatprep.subr.mxu0 0.0
    %2666 = vmatpush1.msra.mxu0 %v2572
    %2667 = vmatprep.subr.mxu0 0.0
    %2668 = vmatpush1.msra.mxu0 %v2573
    %2669 = vmatprep.subr.mxu0 0.0
    %2670 = vmatpush1.msra.mxu0 %v2574
    %2671 = vmatprep.subr.mxu0 0.0
    %2672 = vmatpush1.msra.mxu0 %v2575
    %2673 = vmatprep.subr.mxu0 0.0
    %2674 = vmatpush1.msra.mxu0 %v2576
    %2675 = vmatprep.subr.mxu0 0.0
    %2676 = vmatpush1.msra.mxu0 %v2577
    %2677 = vmatprep.subr.mxu0 0.0
    %2678 = vmatpush1.msra.mxu0 %v2578
    %2679 = vmatprep.subr.mxu0 0.0
    %2680 = vmatpush1.msra.mxu0 %v2579
    %2681 = vmatprep.subr.mxu0 0.0
    %2682 = vmatpush1.msra.mxu0 %v2580
    %2683 = vmatprep.subr.mxu0 0.0
    %2684 = vmatpush1.msra.mxu0 %v2581
    %2685 = vmatprep.mubr.f32.mxu0 %v2518
    %2686 = vmatmul.mubr.f32.gmra.mrb[0].mxu0 %v2503
    %v2687 = vpop.f32.mrb[0].mxu0
    %v2688 = vadd.f32 %v2619, %v2687
    %v2689 = vpop.f32.mrb[0].mxu0
    %2690 = vdwg.mxu0
    %2691 = vmatprep.subr.mxu0 0.0
    %2692 = vmatpush1.msra.mxu0 %v2582
    %2693 = vmatprep.subr.mxu0 0.0
    %2694 = vmatpush1.msra.mxu0 %v2583
    %2695 = vmatprep.subr.mxu0 0.0
    %2696 = vmatpush1.msra.mxu0 %v2584
    %2697 = vmatprep.subr.mxu0 0.0
    %2698 = vmatpush1.msra.mxu0 %v2585
    %2699 = vmatprep.subr.mxu0 0.0
    %2700 = vmatpush1.msra.mxu0 %v2586
    %2701 = vmatprep.subr.mxu0 0.0
    %2702 = vmatpush1.msra.mxu0 %v2587
    %2703 = vmatprep.subr.mxu0 0.0
    %2704 = vmatpush1.msra.mxu0 %v2588
    %2705 = vmatprep.subr.mxu0 0.0
    %2706 = vmatpush1.msra.mxu0 %v2589
    %2707 = vmatprep.subr.mxu0 0.0
    %2708 = vmatpush1.msra.mxu0 %v2590
    %2709 = vmatprep.subr.mxu0 0.0
    %2710 = vmatpush1.msra.mxu0 %v2591
    %2711 = vmatprep.subr.mxu0 0.0
    %2712 = vmatpush1.msra.mxu0 %v2592
    %2713 = vmatprep.subr.mxu0 0.0
    %2714 = vmatpush1.msra.mxu0 %v2593
    %2715 = vmatprep.subr.mxu0 0.0
    %2716 = vmatpush1.msra.mxu0 %v2594
    %2717 = vmatprep.subr.mxu0 0.0
    %2718 = vmatpush1.msra.mxu0 %v2595
    %2719 = vmatprep.subr.mxu0 0.0
    %2720 = vmatpush1.msra.mxu0 %v2596
    %2721 = vmatprep.subr.mxu0 0.0
    %2722 = vmatpush1.msra.mxu0 %v2597
    %2723 = vmatprep.subr.mxu0 0.0
    %2724 = vmatpush1.msra.mxu0 %v2598
    %2725 = vmatprep.subr.mxu0 0.0
    %2726 = vmatpush1.msra.mxu0 %v2599
    %2727 = vmatprep.subr.mxu0 0.0
    %2728 = vmatpush1.msra.mxu0 %v2600
    %2729 = vmatprep.subr.mxu0 0.0
    %2730 = vmatpush1.msra.mxu0 %v2601
    %2731 = vmatprep.subr.mxu0 0.0
    %2732 = vmatpush1.msra.mxu0 %v2602
    %2733 = vmatprep.subr.mxu0 0.0
    %2734 = vmatpush1.msra.mxu0 %v2603
    %2735 = vmatprep.subr.mxu0 0.0
    %2736 = vmatpush1.msra.mxu0 %v2604
    %2737 = vmatprep.subr.mxu0 0.0
    %2738 = vmatpush1.msra.mxu0 %v2605
    %2739 = vmatprep.subr.mxu0 0.0
    %2740 = vmatpush1.msra.mxu0 %v2606
    %2741 = vmatprep.subr.mxu0 0.0
    %2742 = vmatpush1.msra.mxu0 %v2607
    %2743 = vmatprep.subr.mxu0 0.0
    %2744 = vmatpush1.msra.mxu0 %v2608
    %2745 = vmatprep.subr.mxu0 0.0
    %2746 = vmatpush1.msra.mxu0 %v2609
    %2747 = vmatprep.subr.mxu0 0.0
    %2748 = vmatpush1.msra.mxu0 %v2610
    %2749 = vmatprep.subr.mxu0 0.0
    %2750 = vmatpush1.msra.mxu0 %v2611
    %2751 = vmatprep.subr.mxu0 0.0
    %2752 = vmatpush1.msra.mxu0 %v2612
    %2753 = vmatprep.subr.mxu0 0.0
    %2754 = vmatpush1.msra.mxu0 %v2613
    %2755 = vmatprep.mubr.f32.mxu0 %v2548
    %2756 = vmatmul.mubr.f32.gmra.mrb[0].mxu0 %v2533
    %v2757 = vpop.f32.mrb[0].mxu0
    %v2758 = vadd.f32 %v2688, %v2757
    %v2759 = vpop.f32.mrb[0].mxu0
    %2760 = vdwg.mxu0
    %v2761 = vmax.f32 %v2758, 0.0
    %v2762 = vld [vmem:[%s7] sm:$0xff]
    %v2763 = vld [vmem:[%s7 + $0x8] sm:$0xff]
    %v2764 = vld [vmem:[%s7 + $0x10] sm:$0xff]
    %v2765 = vld [vmem:[%s7 + $0x18] sm:$0xff]
    %v2766 = vld [vmem:[%s7 + $0x20] sm:$0xff]
    %v2767 = vld [vmem:[%s7 + $0x28] sm:$0xff]
    %v2768 = vld [vmem:[%s7 + $0x30] sm:$0xff]
    %v2769 = vld [vmem:[%s7 + $0x38] sm:$0xff]
    %v2770 = vld [vmem:[#allocation14] sm:$0x1]
    %v2772 = vlaneseq
    %v2773 = vshrl.u32 %v2772, 7
    %v2774 = vsub.s32 0, %v2773
    %v2775 = vrot.slane %v2770, %v2774
    %vm2777 = vcmask 523264
    %v2779 = vsel %vm2777, %v2761, 0
    %2781 = vmatprep.subr.mxu0 0.0
    %2782 = vmatpush1.msra.mxu0 %v2762
    %2783 = vmatprep.subr.mxu0 0.0
    %2784 = vmatpush1.msra.mxu0 %v2763
    %2785 = vmatprep.subr.mxu0 0.0
    %2786 = vmatpush1.msra.mxu0 %v2764
    %2787 = vmatprep.subr.mxu0 0.0
    %2788 = vmatpush1.msra.mxu0 %v2765
    %2789 = vmatprep.subr.mxu0 0.0
    %2790 = vmatpush1.msra.mxu0 %v2766
    %2791 = vmatprep.subr.mxu0 0.0
    %2792 = vmatpush1.msra.mxu0 %v2767
    %2793 = vmatprep.subr.mxu0 0.0
    %2794 = vmatpush1.msra.mxu0 %v2768
    %2795 = vmatprep.subr.mxu0 0.0
    %2796 = vmatpush1.msra.mxu0 %v2769
    %2797 = vmatprep.subr.mxu0 0.0
    %2798 = vmatpush1.msra.mxu0 0.0
    %2799 = vmatprep.subr.mxu0 0.0
    %2800 = vmatpush1.msra.mxu0 0.0
    %2801 = vmatprep.subr.mxu0 0.0
    %2802 = vmatpush1.msra.mxu0 0.0
    %2803 = vmatprep.subr.mxu0 0.0
    %2804 = vmatpush1.msra.mxu0 0.0
    %2805 = vmatprep.subr.mxu0 0.0
    %2806 = vmatpush1.msra.mxu0 0.0
    %2807 = vmatprep.subr.mxu0 0.0
    %2808 = vmatpush1.msra.mxu0 0.0
    %2809 = vmatprep.subr.mxu0 0.0
    %2810 = vmatpush1.msra.mxu0 0.0
    %2811 = vmatprep.subr.mxu0 0.0
    %2812 = vmatpush1.msra.mxu0 0.0
    %2813 = vmatprep.subr.mxu0 0.0
    %2814 = vmatpush1.msra.mxu0 0.0
    %2815 = vmatprep.subr.mxu0 0.0
    %2816 = vmatpush1.msra.mxu0 0.0
    %2817 = vmatprep.subr.mxu0 0.0
    %2818 = vmatpush1.msra.mxu0 0.0
    %2819 = vmatprep.subr.mxu0 0.0
    %2820 = vmatpush1.msra.mxu0 0.0
    %2821 = vmatprep.subr.mxu0 0.0
    %2822 = vmatpush1.msra.mxu0 0.0
    %2823 = vmatprep.subr.mxu0 0.0
    %2824 = vmatpush1.msra.mxu0 0.0
    %2825 = vmatprep.subr.mxu0 0.0
    %2826 = vmatpush1.msra.mxu0 0.0
    %2827 = vmatprep.subr.mxu0 0.0
    %2828 = vmatpush1.msra.mxu0 0.0
    %2829 = vmatprep.subr.mxu0 0.0
    %2830 = vmatpush1.msra.mxu0 0.0
    %2831 = vmatprep.subr.mxu0 0.0
    %2832 = vmatpush1.msra.mxu0 0.0
    %2833 = vmatprep.subr.mxu0 0.0
    %2834 = vmatpush1.msra.mxu0 0.0
    %2835 = vmatprep.subr.mxu0 0.0
    %2836 = vmatpush1.msra.mxu0 0.0
    %2837 = vmatprep.subr.mxu0 0.0
    %2838 = vmatpush1.msra.mxu0 0.0
    %2839 = vmatprep.subr.mxu0 0.0
    %2840 = vmatpush1.msra.mxu0 0.0
    %2841 = vmatprep.subr.mxu0 0.0
    %2842 = vmatpush1.msra.mxu0 0.0
    %2843 = vmatprep.subr.mxu0 0.0
    %2844 = vmatpush1.msra.mxu0 0.0
    %2845 = vmatprep.mubr.f32.mxu0 0.0
    %2846 = vmatmul.mubr.f32.gmra.mrb[0].mxu0 %v2779
    %v2847 = vpop.f32.mrb[0].mxu0
    %v2848 = vadd.f32 %v2775, %v2847
    %v2849 = vpop.f32.mrb[0].mxu0
    %2850 = vdwg.mxu0
    %v2851 = vmax.f32 %v2848, 0.0
    %v2852 = vld [vmem:[#allocation15] sm:$0xff]
    %v2853 = vld [vmem:[#allocation15 + $0x8] sm:$0xff]
    %v2854 = vld [vmem:[#allocation15 + $0x10] sm:$0xff]
    %v2855 = vld [vmem:[#allocation15 + $0x18] sm:$0xff]
    %v2856 = vld [vmem:[#allocation17] sm:$0x1]
    %v2858 = vlaneseq
    %v2859 = vshrl.u32 %v2858, 7
    %v2860 = vsub.s32 0, %v2859
    %v2861 = vrot.slane %v2856, %v2860
    %vm2863 = vcmask 261120
    %v2865 = vsel %vm2863, %v2851, 0
    %2867 = vmatprep.subr.mxu0 0.0
    %2868 = vmatpush1.msra.mxu0 %v2852
    %2869 = vmatprep.subr.mxu0 0.0
    %2870 = vmatpush1.msra.mxu0 %v2853
    %2871 = vmatprep.subr.mxu0 0.0
    %2872 = vmatpush1.msra.mxu0 %v2854
    %2873 = vmatprep.subr.mxu0 0.0
    %2874 = vmatpush1.msra.mxu0 %v2855
    %2875 = vmatprep.subr.mxu0 0.0
    %2876 = vmatpush1.msra.mxu0 0.0
    %2877 = vmatprep.subr.mxu0 0.0
    %2878 = vmatpush1.msra.mxu0 0.0
    %2879 = vmatprep.subr.mxu0 0.0
    %2880 = vmatpush1.msra.mxu0 0.0
    %2881 = vmatprep.subr.mxu0 0.0
    %2882 = vmatpush1.msra.mxu0 0.0
    %2883 = vmatprep.subr.mxu0 0.0
    %2884 = vmatpush1.msra.mxu0 0.0
    %2885 = vmatprep.subr.mxu0 0.0
    %2886 = vmatpush1.msra.mxu0 0.0
    %2887 = vmatprep.subr.mxu0 0.0
    %2888 = vmatpush1.msra.mxu0 0.0
    %2889 = vmatprep.subr.mxu0 0.0
    %2890 = vmatpush1.msra.mxu0 0.0
    %2891 = vmatprep.subr.mxu0 0.0
    %2892 = vmatpush1.msra.mxu0 0.0
    %2893 = vmatprep.subr.mxu0 0.0
    %2894 = vmatpush1.msra.mxu0 0.0
    %2895 = vmatprep.subr.mxu0 0.0
    %2896 = vmatpush1.msra.mxu0 0.0
    %2897 = vmatprep.subr.mxu0 0.0
    %2898 = vmatpush1.msra.mxu0 0.0
    %2899 = vmatprep.subr.mxu0 0.0
    %2900 = vmatpush1.msra.mxu0 0.0
    %2901 = vmatprep.subr.mxu0 0.0
    %2902 = vmatpush1.msra.mxu0 0.0
    %2903 = vmatprep.subr.mxu0 0.0
    %2904 = vmatpush1.msra.mxu0 0.0
    %2905 = vmatprep.subr.mxu0 0.0
    %2906 = vmatpush1.msra.mxu0 0.0
    %2907 = vmatprep.subr.mxu0 0.0
    %2908 = vmatpush1.msra.mxu0 0.0
    %2909 = vmatprep.subr.mxu0 0.0
    %2910 = vmatpush1.msra.mxu0 0.0
    %2911 = vmatprep.subr.mxu0 0.0
    %2912 = vmatpush1.msra.mxu0 0.0
    %2913 = vmatprep.subr.mxu0 0.0
    %2914 = vmatpush1.msra.mxu0 0.0
    %2915 = vmatprep.subr.mxu0 0.0
    %2916 = vmatpush1.msra.mxu0 0.0
    %2917 = vmatprep.subr.mxu0 0.0
    %2918 = vmatpush1.msra.mxu0 0.0
    %2919 = vmatprep.subr.mxu0 0.0
    %2920 = vmatpush1.msra.mxu0 0.0
    %2921 = vmatprep.subr.mxu0 0.0
    %2922 = vmatpush1.msra.mxu0 0.0
    %2923 = vmatprep.subr.mxu0 0.0
    %2924 = vmatpush1.msra.mxu0 0.0
    %2925 = vmatprep.subr.mxu0 0.0
    %2926 = vmatpush1.msra.mxu0 0.0
    %2927 = vmatprep.subr.mxu0 0.0
    %2928 = vmatpush1.msra.mxu0 0.0
    %2929 = vmatprep.subr.mxu0 0.0
    %2930 = vmatpush1.msra.mxu0 0.0
    %2931 = vmatprep.mubr.f32.mxu0 0.0
    %2932 = vmatmul.mubr.f32.gmra.mrb[0].mxu0 %v2865
    %v2933 = vpop.f32.mrb[0].mxu0
    %v2934 = vadd.f32 %v2861, %v2933
    %v2935 = vpop.f32.mrb[0].mxu0
    %2936 = vdwg.mxu0
    %v2937 = vtanh.pop %v2934
    %vm2938 = vcmask 408576
    %2939 = vst.msk [vmem:[#allocation18] sm:$0xff] %vm2938, %v2937
    // Predicated region
    $region82: #{tpu_custom_call.1} parent=1 // pred_check
      _
    $region83: #{tpu_custom_call.1} parent=1 // pred_check_branch
      %2941 = sbr.rel (0) target = $region85
    $region84: #{tpu_custom_call.1} parent=1 // pred_region
      %s2943 = ssub.s32 128, 128
      %2944 = vsyncadd [#allocation5], %s2943
      %s2946 = sshll.u32 [#allocation18], 4
      %s2947 = int_to_ptr.vmem [resolvable:$true] %s2946
      %2949 = dma.vmem_to_hbm [thread:$0]  %s2947, 128, %s11, [#allocation5]
    $region85: #{tpu_custom_call.1} parent=1 // pred_fallthru
      _
    // Predicated region
    $region86: #{tpu_custom_call.1} parent=1 // pred_check
      _
    $region87: #{tpu_custom_call.1} parent=1 // pred_check_branch
      %2951 = sbr.rel (0) target = $region89
    $region88: #{tpu_custom_call.1} parent=1 // pred_region
      %2952 = dma.done [#allocation5], 128
    $region89: #{tpu_custom_call.1} parent=1 // pred_fallthru
      _
    %2953 = vsyncpa [#allocation4], 1
    %2954 = vsyncpa [#allocation7], 1
    %2955 = vsyncpa [#allocation10], 1
    %2956 = vsyncpa [#allocation13], 1
    %2957 = vsyncpa [#allocation16], 1
    %2958 = vsyncpa [#allocation5], 1

</llo_original>
